<compile_context>
chip_gen: v5e
topology: v5e:2x2
jax: 0.10.0
libtpu: 0.0.40
codegen_flags: <defaults>
</compile_context>

<pallas_src>
import jax
import jax.numpy as jnp
from jax.experimental import pallas as pl
from jax.experimental.pallas import tpu as pltpu

IN_FEATURES = 12 * 8 * 8   # 768
HIDDEN = 512
OUT_FEATURES = 64 * 64     # 4096


def _round_up(x, m):
    return ((x + m - 1) // m) * m


def _mlp_mask_kernel(x_ref, w1_ref, b1_ref, w2_ref, b2_ref, mask_ref, o_ref):
    # fc1 + bias + ReLU (recomputed per N chunk; cheap and keeps the grid
    # carry-free so both axes can be megacore-parallel).
    h = jnp.dot(x_ref[...], w1_ref[...], preferred_element_type=jnp.float32)
    h = jnp.maximum(h + b1_ref[...], 0.0).astype(jnp.bfloat16)
    # fc2 on this W2 column chunk + bias + legal-move mask.
    y = jnp.dot(h, w2_ref[...], preferred_element_type=jnp.float32)
    y = (y + b2_ref[...]) * mask_ref[...].astype(jnp.float32)
    o_ref[...] = y.astype(o_ref.dtype)


def chess_move_predictor_forward(x, w1_t, b1, w2_t, b2, legal_mask,
                                 *, block_b=256, block_n=2048,
                                 out_dtype=jnp.float32):
    """x: (B, 12, 8, 8) f32; legal_mask: (B, 4096) {0,1}.

    w1_t: (768, 512), w2_t: (512, 4096)  (pre-transposed nn.Linear weights).
    Returns (B, 4096) masked logits in `out_dtype` (f32 by default; bf16
    halves output HBM traffic if downstream accepts it).

    block_b: batch tile (256 default is v7x-safe; 512 is fine on v5e/v6e).
    block_n: output-feature tile (2048 -> two N chunks, both marked
             "parallel" so v7x megacore has work even for a single batch tile).
    """
    B = x.shape[0]
    x_flat = x.reshape(B, IN_FEATURES).astype(jnp.bfloat16)   # x.view(-1, 768)
    w1_bf = w1_t.astype(jnp.bfloat16)
    w2_bf = w2_t.astype(jnp.bfloat16)
    b1_2d = b1.reshape(1, HIDDEN).astype(jnp.float32)
    b2_2d = b2.reshape(1, OUT_FEATURES).astype(jnp.float32)
    mask = legal_mask.astype(jnp.bfloat16)                    # {0,1} exact in bf16

    # Batch tile: multiple of 16 sublanes (bf16 vregs pack [16,128]), capped
    # at block_b.
    tb = min(block_b, _round_up(B, 16))
    b_pad = _round_up(B, tb)
    if b_pad != B:
        x_flat = jnp.pad(x_flat, ((0, b_pad - B), (0, 0)))
        mask = jnp.pad(mask, ((0, b_pad - B), (0, 0)))
    nb = b_pad // tb

    tn = block_n
    assert OUT_FEATURES % tn == 0 and tn % 128 == 0
    nn_ = OUT_FEATURES // tn

    # fc1 is recomputed once per N chunk.
    flops = 2 * b_pad * (nn_ * IN_FEATURES * HIDDEN + HIDDEN * OUT_FEATURES)
    bytes_accessed = (
        nn_ * x_flat.size * 2            # x re-fetched once per N chunk (bf16)
        + w1_bf.size * 2 + w2_bf.size * 2  # weights streamed once (bf16)
        + b1_2d.size * 4 + b2_2d.size * 4
        + mask.size * 2                    # bf16 mask
        + b_pad * OUT_FEATURES * jnp.dtype(out_dtype).itemsize
    )

    # Grid: N outer, batch inner -> W2 chunks change only when N changes, so
    # W2 is read from HBM exactly once (per core); W1/b1 are fully resident.
    out = pl.pallas_call(
        _mlp_mask_kernel,
        out_shape=jax.ShapeDtypeStruct((b_pad, OUT_FEATURES), out_dtype),
        grid=(nn_, nb),
        in_specs=[
            pl.BlockSpec((tb, IN_FEATURES), lambda n, b: (b, 0)),      # x tile
            pl.BlockSpec((IN_FEATURES, HIDDEN), lambda n, b: (0, 0)),  # W1 resident
            pl.BlockSpec((1, HIDDEN), lambda n, b: (0, 0)),            # b1 resident
            pl.BlockSpec((HIDDEN, tn), lambda n, b: (0, n)),           # W2 N-chunk
            pl.BlockSpec((1, tn), lambda n, b: (0, n)),                # b2 N-chunk
            pl.BlockSpec((tb, tn), lambda n, b: (b, n)),               # mask tile (bf16)
        ],
        out_specs=pl.BlockSpec((tb, tn), lambda n, b: (b, n)),
        compiler_params=pltpu.CompilerParams(
            dimension_semantics=("parallel", "parallel"),
            vmem_limit_bytes=48 << 20,
        ),
        cost_estimate=pl.CostEstimate(
            flops=flops, transcendentals=0, bytes_accessed=bytes_accessed),
    )(x_flat, w1_bf, b1_2d, w2_bf, b2_2d, mask)

    return out[:B] if b_pad != B else out


def init_params(key):
    """Deterministic init mirroring nn.Linear shapes (uniform +-1/sqrt(fan_in))."""
    k1, k2, k3, k4 = jax.random.split(key, 4)
    lim1 = 1.0 / jnp.sqrt(jnp.float32(IN_FEATURES))
    lim2 = 1.0 / jnp.sqrt(jnp.float32(HIDDEN))
    # Stored pre-transposed: (in, out)
    w1_t = jax.random.uniform(k1, (IN_FEATURES, HIDDEN), jnp.float32, -lim1, lim1)
    b1 = jax.random.uniform(k2, (HIDDEN,), jnp.float32, -lim1, lim1)
    w2_t = jax.random.uniform(k3, (HIDDEN, OUT_FEATURES), jnp.float32, -lim2, lim2)
    b2 = jax.random.uniform(k4, (OUT_FEATURES,), jnp.float32, -lim2, lim2)
    return w1_t, b1, w2_t, b2


if __name__ == "__main__":
    key = jax.random.PRNGKey(0)
    kx, kmask, kparams = jax.random.split(key, 3)

    B = 2
    # Board tensor: (B, 12, 8, 8) piece planes (synthetic).
    x = jax.random.uniform(kx, (B, 12, 8, 8), jnp.float32)
    # Synthetic legal-move mask: ~10% of the 4096 from*64+to moves are legal.
    legal_mask = (jax.random.uniform(kmask, (B, OUT_FEATURES)) < 0.1).astype(jnp.float32)

    w1_t, b1, w2_t, b2 = init_params(kparams)

    out = chess_move_predictor_forward(x, w1_t, b1, w2_t, b2, legal_mask)
    out = jax.block_until_ready(out)

    # Reference with the same bf16-cast operands (f32 accumulation), matching
    # the kernel's mixed-precision path.
    xb = x.reshape(B, IN_FEATURES).astype(jnp.bfloat16).astype(jnp.float32)
    w1b = w1_t.astype(jnp.bfloat16).astype(jnp.float32)
    w2b = w2_t.astype(jnp.bfloat16).astype(jnp.float32)
    h_ref = jnp.maximum(xb @ w1b + b1, 0.0).astype(jnp.bfloat16).astype(jnp.float32)
    ref = (h_ref @ w2b + b2) * legal_mask

    assert out.shape == (B, OUT_FEATURES)
    assert out.dtype == jnp.float32
    assert jnp.allclose(out, ref, atol=1e-2, rtol=1e-2)

    print("KERNEL_OK")
</pallas_src>

<mosaic_0001>
module attributes {stable_mosaic.version = 11 : i64} {
  func.func @_mlp_mask_kernel(%arg0: i32, %arg1: i32, %arg2: memref<16x768xbf16, #tpu.memory_space<vmem>>, %arg3: memref<768x512xbf16, #tpu.memory_space<vmem>>, %arg4: memref<1x512xf32, #tpu.memory_space<vmem>>, %arg5: memref<512x2048xbf16, #tpu.memory_space<vmem>>, %arg6: memref<1x2048xf32, #tpu.memory_space<vmem>>, %arg7: memref<16x2048xbf16, #tpu.memory_space<vmem>>, %arg8: memref<16x2048xf32, #tpu.memory_space<vmem>>) attributes {dimension_semantics = [#tpu.dimension_semantics<parallel>, #tpu.dimension_semantics<parallel>], iteration_bounds = array<i64: 2, 1>, scalar_prefetch = 0 : i64, scratch_operands = 0 : i64, tpu.core_type = #tpu.core_type<tc>, window_params = [{transform_indices = @transform_0, window_bounds = array<i64: 16, 768>}, {pipeline_mode = #tpu.pipeline_mode<synchronous>, transform_indices = @transform_1, window_bounds = array<i64: 768, 512>}, {pipeline_mode = #tpu.pipeline_mode<synchronous>, transform_indices = @transform_2, window_bounds = array<i64: 1, 512>}, {transform_indices = @transform_3, window_bounds = array<i64: 512, 2048>}, {transform_indices = @transform_4, window_bounds = array<i64: 1, 2048>}, {transform_indices = @transform_5, window_bounds = array<i64: 16, 2048>}, {transform_indices = @transform_6, window_bounds = array<i64: 16, 2048>}]} {
    %c0 = arith.constant 0 : index
    %c0_0 = arith.constant 0 : index
    %0 = vector.load %arg2[%c0, %c0_0] : memref<16x768xbf16, #tpu.memory_space<vmem>>, vector<16x768xbf16>
    %c0_1 = arith.constant 0 : index
    %c0_2 = arith.constant 0 : index
    %1 = vector.load %arg3[%c0_1, %c0_2] : memref<768x512xbf16, #tpu.memory_space<vmem>>, vector<768x512xbf16>
    %cst = arith.constant dense<0.000000e+00> : vector<16x512xf32>
    %2 = tpu.matmul %0, %1, %cst {dimension_numbers = #tpu.dot_dimension_numbers<[1], [0], [0], [1], [0, 0, 1, 1], [], []>} : vector<16x768xbf16>, vector<768x512xbf16>, vector<16x512xf32> -> vector<16x512xf32>
    %c0_3 = arith.constant 0 : index
    %c0_4 = arith.constant 0 : index
    %3 = vector.load %arg4[%c0_3, %c0_4] : memref<1x512xf32, #tpu.memory_space<vmem>>, vector<1x512xf32>
    %4 = vector.broadcast %3 : vector<1x512xf32> to vector<16x512xf32>
    %5 = arith.addf %2, %4 : vector<16x512xf32>
    %cst_5 = arith.constant 0.000000e+00 : f32
    %6 = vector.broadcast %cst_5 : f32 to vector<16x512xf32>
    %7 = arith.maximumf %5, %6 : vector<16x512xf32>
    %8 = arith.truncf %7 : vector<16x512xf32> to vector<16x512xbf16>
    %c0_6 = arith.constant 0 : index
    %c0_7 = arith.constant 0 : index
    %9 = vector.load %arg5[%c0_6, %c0_7] : memref<512x2048xbf16, #tpu.memory_space<vmem>>, vector<512x2048xbf16>
    %cst_8 = arith.constant dense<0.000000e+00> : vector<16x2048xf32>
    %10 = tpu.matmul %8, %9, %cst_8 {dimension_numbers = #tpu.dot_dimension_numbers<[1], [0], [0], [1], [0, 0, 1, 1], [], []>} : vector<16x512xbf16>, vector<512x2048xbf16>, vector<16x2048xf32> -> vector<16x2048xf32>
    %c0_9 = arith.constant 0 : index
    %c0_10 = arith.constant 0 : index
    %11 = vector.load %arg6[%c0_9, %c0_10] : memref<1x2048xf32, #tpu.memory_space<vmem>>, vector<1x2048xf32>
    %12 = vector.broadcast %11 : vector<1x2048xf32> to vector<16x2048xf32>
    %13 = arith.addf %10, %12 : vector<16x2048xf32>
    %c0_11 = arith.constant 0 : index
    %c0_12 = arith.constant 0 : index
    %14 = vector.load %arg7[%c0_11, %c0_12] : memref<16x2048xbf16, #tpu.memory_space<vmem>>, vector<16x2048xbf16>
    %15 = arith.extf %14 : vector<16x2048xbf16> to vector<16x2048xf32>
    %16 = arith.mulf %13, %15 : vector<16x2048xf32>
    %c0_13 = arith.constant 0 : index
    %c0_14 = arith.constant 0 : index
    %17 = vector.load %arg8[%c0_13, %c0_14] : memref<16x2048xf32, #tpu.memory_space<vmem>>, vector<16x2048xf32>
    tpu.vector_store %arg8[%c0_13, %c0_14], %16 {strides = array<i32>} : memref<16x2048xf32, #tpu.memory_space<vmem>>, vector<16x2048xf32>,
    return
  }
  func.func @transform_0(%arg0: i32, %arg1: i32) -> (i32, i32) {
    %c0_i32 = arith.constant 0 : i32
    %c0_i32_0 = arith.constant 0 : i32
    return %arg1, %c0_i32 : i32, i32
  }
  func.func @transform_1(%arg0: i32, %arg1: i32) -> (i32, i32) {
    %c0_i32 = arith.constant 0 : i32
    %c0_i32_0 = arith.constant 0 : i32
    %c0_i32_1 = arith.constant 0 : i32
    return %c0_i32, %c0_i32_0 : i32, i32
  }
  func.func @transform_2(%arg0: i32, %arg1: i32) -> (i32, i32) {
    %c0_i32 = arith.constant 0 : i32
    %c0_i32_0 = arith.constant 0 : i32
    %c0_i32_1 = arith.constant 0 : i32
    return %c0_i32, %c0_i32_0 : i32, i32
  }
  func.func @transform_3(%arg0: i32, %arg1: i32) -> (i32, i32) {
    %c0_i32 = arith.constant 0 : i32
    %c0_i32_0 = arith.constant 0 : i32
    return %c0_i32, %arg0 : i32, i32
  }
  func.func @transform_4(%arg0: i32, %arg1: i32) -> (i32, i32) {
    %c0_i32 = arith.constant 0 : i32
    %c0_i32_0 = arith.constant 0 : i32
    return %c0_i32, %arg0 : i32, i32
  }
  func.func @transform_5(%arg0: i32, %arg1: i32) -> (i32, i32) {
    %c0_i32 = arith.constant 0 : i32
    return %arg1, %arg0 : i32, i32
  }
  func.func @transform_6(%arg0: i32, %arg1: i32) -> (i32, i32) {
    %c0_i32 = arith.constant 0 : i32
    return %arg1, %arg0 : i32, i32
  }
}

</mosaic_0001>

<llo_original>
// kernel: tpu_custom_call.1
$region0: #{tpu_custom_call.1}
  #allocation0 [shape = 'u32[]', space=smem, size = 0x4, offset = 0x4, fixed_abs, tag = 'smem constant byte address 0x4 - core index']
  #allocation1 [shape = 'u32[72,128]{1,0:T(1,128)}', space=vmem, size = 0x9000, scoped, tag = 'internal scratch']
  %s0 = inlined_call_operand.hbm [shape: bf16[16,768], index: 0, kind: input, shape index: {}]
  %s1 = inlined_call_operand.hbm [shape: bf16[768,512], index: 1, kind: input, shape index: {}]
  %s2 = inlined_call_operand.hbm [shape: f32[1,512], index: 2, kind: input, shape index: {}]
  %s3 = inlined_call_operand.hbm [shape: bf16[512,4096], index: 3, kind: input, shape index: {}]
  %s4 = inlined_call_operand.hbm [shape: f32[1,4096], index: 4, kind: input, shape index: {}]
  %s5 = inlined_call_operand.hbm [shape: bf16[16,4096], index: 5, kind: input, shape index: {}]
  %s6 = inlined_call_operand.hbm [shape: f32[16,4096], index: 6, kind: output, shape index: {}]
  %s7 = sld [smem:[#allocation0]]
  $region81: #{tpu_custom_call.1} parent=0
    _
  %s9 = ssub.s32 1, %s7
  %s10 = scalar_select 0, %s9, %s7
  $region1: #{tpu_custom_call.1} parent=0
    #allocation2 [shape = 'u8[24576]{0}', space=vmem, size = 0x6000, scoped, tag = 'input window, operand 0, single buffered']
    #allocation3 [shape = 's32[2]{0}', space=sflag, size = 0x8, scoped, tag = 'scoped memory for tpu_custom_call.1']
    #allocation4 [shape = 's32[2]{0}', space=sflag, size = 0x8, scoped, tag = 'scoped memory for tpu_custom_call.1']
    #allocation5 [shape = 'u8[786432]{0}', space=vmem, size = 0xc0000, scoped, tag = 'input window, operand 1, single buffered']
    #allocation6 [shape = 's32[1]{0}', space=sflag, size = 0x4, scoped, tag = 'scoped memory for tpu_custom_call.1']
    #allocation7 [shape = 'u8[2048]{0}', space=vmem, size = 0x800, scoped, tag = 'input window, operand 2, single buffered']
    #allocation8 [shape = 'u8[4194304]{0}', space=vmem, size = 0x400000, scoped, tag = 'input window, operand 3']
    #allocation9 [shape = 's32[2]{0}', space=sflag, size = 0x8, scoped, tag = 'scoped memory for tpu_custom_call.1']
    #allocation10 [shape = 'u8[16384]{0}', space=vmem, size = 0x4000, scoped, tag = 'input window, operand 4']
    #allocation11 [shape = 'u8[131072]{0}', space=vmem, size = 0x20000, scoped, tag = 'input window, operand 5']
    #allocation12 [shape = 's32[2]{0}', space=sflag, size = 0x8, scoped, tag = 'scoped memory for tpu_custom_call.1']
    #allocation13 [shape = 'u8[262144]{0}', space=vmem, size = 0x40000, scoped, tag = 'output window, operand 0']
    %11 = vsyncpa [#allocation3], 0
    %12 = vsyncpa [#allocation6], 0
    %13 = vsyncpa [#allocation9], 0
    %s14 = scalar_lea.sflag [#allocation9], 1
    %15 = vsyncpa %s14, 0
    %16 = vsyncpa [#allocation12], 0
    %s17 = scalar_lea.sflag [#allocation12], 1
    %18 = vsyncpa %s17, 0
    %19 = vsyncpa [#allocation4], 0
    %s20 = scalar_lea.sflag [#allocation4], 1
    %21 = vsyncpa %s20, 0
    loop: start=0, step=1, limit=4
    $region2: #{tpu_custom_call.1} parent=1 // loop_pre_header
      _
    $region3: #{tpu_custom_call.1} parent=1 // loop_header
      %s23 = sphi 0, %s27
      %p24 = scmp.ge.s32.totalorder %s23, 4
      %s30 = sphi 0, %s42
      %s31 = sphi 0, %s38
      %s32 = sphi 0, %s30
      %s33 = sphi 0, %s31
      %s34 = sphi 0, %s32
      %s35 = sphi 0, %s33
      %s45 = sphi 0, %s47
      %s48 = sphi 0, %s45
      %s49 = sphi 0, %s48
      %s65 = sphi 0, %s49
      %s69 = sphi 0, %s69
      %s71 = sphi 0, %s69
      %s72 = sphi 0, %s71
      %s86 = sphi 0, %s72
      %s90 = sphi 0, %s90
      %s92 = sphi 0, %s90
      %s93 = sphi 0, %s92
      %s107 = sphi 0, %s93
      %s113 = sphi 0, %s115
      %s116 = sphi 0, %s113
      %s117 = sphi 0, %s116
      %s133 = sphi 0, %s117
      %s139 = sphi 0, %s141
      %s142 = sphi 0, %s139
      %s143 = sphi 0, %s142
      %s159 = sphi 0, %s143
      %s167 = sphi 0, %s169
      %s170 = sphi 0, %s167
      %s171 = sphi 0, %s170
      %s187 = sphi 0, %s171
      %s195 = sphi 0, %s197
      %s198 = sphi 0, %s195
      %s199 = sphi 0, %s198
      %s215 = sphi 0, %s199
    $region4: #{tpu_custom_call.1} parent=1 // loop_header_branch
      %26 = sbr.rel (%p24) target = $region8
    $region5: #{tpu_custom_call.1} parent=1 // loop_body
      %s28 = ssub.s32 %s23, 1
      %s29 = ssub.s32 %s23, 2
      %s36 = sadd.s32 1, %s31
      %p37 = scmp.ge.s32.totalorder %s36, 1
      %s38 = scalar_select %p37, 0, %s36
      %s39 = sadd.s32 1, %s30
      %s40 = scalar_select %p37, %s39, %s30
      %p41 = scmp.ge.s32.totalorder %s40, 2
      %s42 = scalar_select %p41, 0, %s40
      %s43 = ssub.s32 %s31, %s38
      %p44 = scmp.eq.s32.totalorder %s43, 0
      %s46 = sadd.s32 %s45, 1
      %s47 = scalar_select %p44, %s45, %s46
      %p50 = pneg %p44
      %p51 = scmp.eq.s32.totalorder %s23, 1
      %p52 = por %p50, %p51
      %p53 = scmp.ne.s32.totalorder %s45, %s48
      %p54 = scmp.eq.s32.totalorder %s23, 0
      %p55 = por %p53, %p54
      %p56 = scmp.ne.s32.totalorder %s45, %s48
      %p57 = scmp.eq.s32.totalorder %s28, 1
      %p58 = por %p56, %p57
      %p59 = scmp.ne.s32.totalorder %s48, %s49
      %p60 = scmp.eq.s32.totalorder %s28, 0
      %p61 = por %p59, %p60
      %p62 = scmp.ne.s32.totalorder %s48, %s49
      %p63 = scmp.eq.s32.totalorder %s29, 1
      %p64 = por %p62, %p63
      %p66 = scmp.ne.s32.totalorder %s49, %s65
      %p67 = scmp.eq.s32.totalorder %s29, 0
      %p68 = por %p66, %p67
      %s70 = sadd.s32 %s69, 1
      %p73 = scmp.eq.s32.totalorder %s23, 1
      %p74 = scmp.ne.s32.totalorder %s69, %s71
      %p75 = scmp.eq.s32.totalorder %s23, 0
      %p76 = por %p74, %p75
      %p77 = scmp.ne.s32.totalorder %s69, %s71
      %p78 = scmp.eq.s32.totalorder %s28, 1
      %p79 = por %p77, %p78
      %p80 = scmp.ne.s32.totalorder %s71, %s72
      %p81 = scmp.eq.s32.totalorder %s28, 0
      %p82 = por %p80, %p81
      %p83 = scmp.ne.s32.totalorder %s71, %s72
      %p84 = scmp.eq.s32.totalorder %s29, 1
      %p85 = por %p83, %p84
      %p87 = scmp.ne.s32.totalorder %s72, %s86
      %p88 = scmp.eq.s32.totalorder %s29, 0
      %p89 = por %p87, %p88
      %s91 = sadd.s32 %s90, 1
      %p94 = scmp.eq.s32.totalorder %s23, 1
      %p95 = scmp.ne.s32.totalorder %s90, %s92
      %p96 = scmp.eq.s32.totalorder %s23, 0
      %p97 = por %p95, %p96
      %p98 = scmp.ne.s32.totalorder %s90, %s92
      %p99 = scmp.eq.s32.totalorder %s28, 1
      %p100 = por %p98, %p99
      %p101 = scmp.ne.s32.totalorder %s92, %s93
      %p102 = scmp.eq.s32.totalorder %s28, 0
      %p103 = por %p101, %p102
      %p104 = scmp.ne.s32.totalorder %s92, %s93
      %p105 = scmp.eq.s32.totalorder %s29, 1
      %p106 = por %p104, %p105
      %p108 = scmp.ne.s32.totalorder %s93, %s107
      %p109 = scmp.eq.s32.totalorder %s29, 0
      %p110 = por %p108, %p109
      %s111 = ssub.s32 %s30, %s42
      %p112 = scmp.eq.s32.totalorder %s111, 0
      %s114 = sadd.s32 %s113, 1
      %s115 = scalar_select %p112, %s113, %s114
      %p118 = pneg %p112
      %p119 = scmp.eq.s32.totalorder %s23, 1
      %p120 = por %p118, %p119
      %p121 = scmp.ne.s32.totalorder %s113, %s116
      %p122 = scmp.eq.s32.totalorder %s23, 0
      %p123 = por %p121, %p122
      %p124 = scmp.ne.s32.totalorder %s113, %s116
      %p125 = scmp.eq.s32.totalorder %s28, 1
      %p126 = por %p124, %p125
      %p127 = scmp.ne.s32.totalorder %s116, %s117
      %p128 = scmp.eq.s32.totalorder %s28, 0
      %p129 = por %p127, %p128
      %p130 = scmp.ne.s32.totalorder %s116, %s117
      %p131 = scmp.eq.s32.totalorder %s29, 1
      %p132 = por %p130, %p131
      %p134 = scmp.ne.s32.totalorder %s117, %s133
      %p135 = scmp.eq.s32.totalorder %s29, 0
      %p136 = por %p134, %p135
      %s137 = ssub.s32 %s30, %s42
      %p138 = scmp.eq.s32.totalorder %s137, 0
      %s140 = sadd.s32 %s139, 1
      %s141 = scalar_select %p138, %s139, %s140
      %p144 = pneg %p138
      %p145 = scmp.eq.s32.totalorder %s23, 1
      %p146 = por %p144, %p145
      %p147 = scmp.ne.s32.totalorder %s139, %s142
      %p148 = scmp.eq.s32.totalorder %s23, 0
      %p149 = por %p147, %p148
      %p150 = scmp.ne.s32.totalorder %s139, %s142
      %p151 = scmp.eq.s32.totalorder %s28, 1
      %p152 = por %p150, %p151
      %p153 = scmp.ne.s32.totalorder %s142, %s143
      %p154 = scmp.eq.s32.totalorder %s28, 0
      %p155 = por %p153, %p154
      %p156 = scmp.ne.s32.totalorder %s142, %s143
      %p157 = scmp.eq.s32.totalorder %s29, 1
      %p158 = por %p156, %p157
      %p160 = scmp.ne.s32.totalorder %s143, %s159
      %p161 = scmp.eq.s32.totalorder %s29, 0
      %p162 = por %p160, %p161
      %s163 = ssub.s32 %s31, %s38
      %s164 = ssub.s32 %s30, %s42
      %s165 = sor.u32 %s163, %s164
      %p166 = scmp.eq.s32.totalorder %s165, 0
      %s168 = sadd.s32 %s167, 1
      %s169 = scalar_select %p166, %s167, %s168
      %p172 = pneg %p166
      %p173 = scmp.eq.s32.totalorder %s23, 1
      %p174 = por %p172, %p173
      %p175 = scmp.ne.s32.totalorder %s167, %s170
      %p176 = scmp.eq.s32.totalorder %s23, 0
      %p177 = por %p175, %p176
      %p178 = scmp.ne.s32.totalorder %s167, %s170
      %p179 = scmp.eq.s32.totalorder %s28, 1
      %p180 = por %p178, %p179
      %p181 = scmp.ne.s32.totalorder %s170, %s171
      %p182 = scmp.eq.s32.totalorder %s28, 0
      %p183 = por %p181, %p182
      %p184 = scmp.ne.s32.totalorder %s170, %s171
      %p185 = scmp.eq.s32.totalorder %s29, 1
      %p186 = por %p184, %p185
      %p188 = scmp.ne.s32.totalorder %s171, %s187
      %p189 = scmp.eq.s32.totalorder %s29, 0
      %p190 = por %p188, %p189
      %s191 = ssub.s32 %s31, %s38
      %s192 = ssub.s32 %s30, %s42
      %s193 = sor.u32 %s191, %s192
      %p194 = scmp.eq.s32.totalorder %s193, 0
      %s196 = sadd.s32 %s195, 1
      %s197 = scalar_select %p194, %s195, %s196
      %p200 = pneg %p194
      %p201 = scmp.eq.s32.totalorder %s23, 1
      %p202 = por %p200, %p201
      %p203 = scmp.ne.s32.totalorder %s195, %s198
      %p204 = scmp.eq.s32.totalorder %s23, 0
      %p205 = por %p203, %p204
      %p206 = scmp.ne.s32.totalorder %s195, %s198
      %p207 = scmp.eq.s32.totalorder %s28, 1
      %p208 = por %p206, %p207
      %p209 = scmp.ne.s32.totalorder %s198, %s199
      %p210 = scmp.eq.s32.totalorder %s28, 0
      %p211 = por %p209, %p210
      %p212 = scmp.ne.s32.totalorder %s198, %s199
      %p213 = scmp.eq.s32.totalorder %s29, 1
      %p214 = por %p212, %p213
      %p216 = scmp.ne.s32.totalorder %s199, %s215
      %p217 = scmp.eq.s32.totalorder %s29, 0
      %p218 = por %p216, %p217
      %p219 = scmp.le.s32.totalorder 1, %s23
      %p220 = scmp.lt.s32.totalorder %s23, 3
      %p221 = pnand %p219, %p220
      %p222 = pneg %p221
      // Predicated region
      $region9: #{tpu_custom_call.1} parent=5 // pred_check
        _
      $region10: #{tpu_custom_call.1} parent=5 // pred_check_branch
        %224 = sbr.rel (%p221) target = $region12
      $region11: #{tpu_custom_call.1} parent=5 // pred_region
        %s225 = ssub.s32 %s23, 1
        // Predicated region
        $region13: #{tpu_custom_call.1} parent=11 // pred_check
          %p226 = pneg %p61
        $region14: #{tpu_custom_call.1} parent=11 // pred_check_branch
          %228 = sbr.rel (%p226) target = $region16
        $region15: #{tpu_custom_call.1} parent=11 // pred_region
          %s229 = smul.u32 2, %s33
          %231 = vsyncadd [#allocation3], 0
          %s232 = smul.addr %s229, 6
          %s233 = smul.addr %s232, 4
          %s234 = scalar_lea.hbm %s0, %s233
          %s235 = sshll.u32 %s234, 4
          %s236 = int_to_ptr.hbm [resolvable:$true] %s235
          %s237 = sshll.u32 [#allocation2], 4
          %s238 = int_to_ptr.vmem [resolvable:$true] %s237
          %243 = dma.hbm_to_vmem [thread:$0]  %s236, 768, %s238, [#allocation3], 384, 384, 24
        $region16: #{tpu_custom_call.1} parent=11 // pred_fallthru
          _
        // Predicated region
        $region17: #{tpu_custom_call.1} parent=11 // pred_check
          %p244 = pneg %p82
        $region18: #{tpu_custom_call.1} parent=11 // pred_check_branch
          %246 = sbr.rel (%p244) target = $region20
        $region19: #{tpu_custom_call.1} parent=11 // pred_region
          %248 = vsyncadd [#allocation6], 0
          %s249 = sshll.u32 %s1, 4
          %s250 = int_to_ptr.hbm [resolvable:$true] %s249
          %s251 = sshll.u32 [#allocation5], 4
          %s252 = int_to_ptr.vmem [resolvable:$true] %s251
          %257 = dma.hbm_to_vmem [thread:$0]  %s250, 24576, %s252, [#allocation6], 256, 256, 16
        $region20: #{tpu_custom_call.1} parent=11 // pred_fallthru
          _
        // Predicated region
        $region21: #{tpu_custom_call.1} parent=11 // pred_check
          %p258 = pneg %p103
        $region22: #{tpu_custom_call.1} parent=11 // pred_check_branch
          %260 = sbr.rel (%p258) target = $region24
        $region23: #{tpu_custom_call.1} parent=11 // pred_region
          %262 = vsyncadd [#allocation6], 0
          %s264 = sshll.u32 %s2, 4
          %s265 = int_to_ptr.hbm [resolvable:$true] %s264
          %s266 = sshll.u32 [#allocation7], 4
          %s267 = int_to_ptr.vmem [resolvable:$true] %s266
          %269 = dma.hbm_to_vmem [thread:$0]  %s265, 64, %s267, [#allocation6]
        $region24: #{tpu_custom_call.1} parent=11 // pred_fallthru
          _
      $region12: #{tpu_custom_call.1} parent=5 // pred_fallthru
        _
      %p270 = scmp.lt.s32.totalorder %s23, 2
      // Predicated region
      $region25: #{tpu_custom_call.1} parent=5 // pred_check
        %p271 = pneg %p270
      $region26: #{tpu_custom_call.1} parent=5 // pred_check_branch
        %273 = sbr.rel (%p271) target = $region28
      $region27: #{tpu_custom_call.1} parent=5 // pred_region
        // Predicated region
        $region29: #{tpu_custom_call.1} parent=27 // pred_check
          %p274 = pneg %p123
        $region30: #{tpu_custom_call.1} parent=27 // pred_check_branch
          %276 = sbr.rel (%p274) target = $region32
        $region31: #{tpu_custom_call.1} parent=27 // pred_region
          %s277 = sand.u32 %s23, 1
          %s278 = scalar_lea.sflag [#allocation9], %s277
          %s279 = sand.u32 %s113, 1
          %s280 = smul.addr %s279, 4096
          %s281 = scalar_lea.vmem [#allocation8], %s280
          %s282 = smul.u32 16, %s30
          %284 = vsyncadd %s278, 0
          %s285 = smul.addr %s282, 4
          %s286 = scalar_lea.hbm %s3, %s285
          %s287 = sshll.u32 %s286, 4
          %s288 = int_to_ptr.hbm [resolvable:$true] %s287
          %s289 = sshll.u32 %s281, 4
          %s290 = int_to_ptr.vmem [resolvable:$true] %s289
          %295 = dma.hbm_to_vmem [thread:$0]  %s288, 65536, %s290, %s278, 2048, 1024, 64
        $region32: #{tpu_custom_call.1} parent=27 // pred_fallthru
          _
        // Predicated region
        $region33: #{tpu_custom_call.1} parent=27 // pred_check
          %p296 = pneg %p149
        $region34: #{tpu_custom_call.1} parent=27 // pred_check_branch
          %298 = sbr.rel (%p296) target = $region36
        $region35: #{tpu_custom_call.1} parent=27 // pred_region
          %s299 = sand.u32 %s23, 1
          %s300 = scalar_lea.sflag [#allocation9], %s299
          %s301 = sand.u32 %s139, 1
          %s302 = smul.addr %s301, 16
          %s303 = scalar_lea.vmem [#allocation10], %s302
          %s304 = smul.u32 16, %s30
          %306 = vsyncadd %s300, 0
          %s307 = scalar_lea.hbm %s4, %s304
          %s309 = sshll.u32 %s307, 4
          %s310 = int_to_ptr.hbm [resolvable:$true] %s309
          %s311 = sshll.u32 %s303, 4
          %s312 = int_to_ptr.vmem [resolvable:$true] %s311
          %314 = dma.hbm_to_vmem [thread:$0]  %s310, 256, %s312, %s300
        $region36: #{tpu_custom_call.1} parent=27 // pred_fallthru
          _
        // Predicated region
        $region37: #{tpu_custom_call.1} parent=27 // pred_check
          %p315 = pneg %p177
        $region38: #{tpu_custom_call.1} parent=27 // pred_check_branch
          %317 = sbr.rel (%p315) target = $region40
        $region39: #{tpu_custom_call.1} parent=27 // pred_region
          %s318 = sand.u32 %s167, 1
          %s319 = scalar_lea.sflag [#allocation12], %s318
          %s320 = sand.u32 %s167, 1
          %s321 = smul.addr %s320, 128
          %s322 = scalar_lea.vmem [#allocation11], %s321
          %s323 = smul.u32 2, %s31
          %s324 = smul.u32 16, %s30
          %326 = vsyncadd %s319, 0
          %s327 = smul.addr %s323, 32
          %s328 = sadd.s32 %s324, %s327
          %s329 = smul.addr %s328, 4
          %s330 = scalar_lea.hbm %s5, %s329
          %s331 = sshll.u32 %s330, 4
          %s332 = int_to_ptr.hbm [resolvable:$true] %s331
          %s333 = sshll.u32 %s322, 4
          %s334 = int_to_ptr.vmem [resolvable:$true] %s333
          %339 = dma.hbm_to_vmem [thread:$0]  %s332, 2048, %s334, %s319, 2048, 1024, 64
        $region40: #{tpu_custom_call.1} parent=27 // pred_fallthru
          _
      $region28: #{tpu_custom_call.1} parent=5 // pred_fallthru
        _
      %p340 = scmp.le.s32.totalorder 1, %s23
      %p341 = scmp.lt.s32.totalorder %s23, 3
      %p342 = pnand %p340, %p341
      %p343 = pneg %p342
      // Predicated region
      $region41: #{tpu_custom_call.1} parent=5 // pred_check
        _
      $region42: #{tpu_custom_call.1} parent=5 // pred_check_branch
        %345 = sbr.rel (%p342) target = $region44
      $region43: #{tpu_custom_call.1} parent=5 // pred_region
        %s346 = ssub.s32 %s23, 1
        // Predicated region
        $region45: #{tpu_custom_call.1} parent=43 // pred_check
          %p347 = pneg %p61
        $region46: #{tpu_custom_call.1} parent=43 // pred_check_branch
          %349 = sbr.rel (%p347) target = $region48
        $region47: #{tpu_custom_call.1} parent=43 // pred_region
          %351 = dma.done [#allocation3], 768
        $region48: #{tpu_custom_call.1} parent=43 // pred_fallthru
          _
        // Predicated region
        $region49: #{tpu_custom_call.1} parent=43 // pred_check
          %p352 = pneg %p82
        $region50: #{tpu_custom_call.1} parent=43 // pred_check_branch
          %354 = sbr.rel (%p352) target = $region52
        $region51: #{tpu_custom_call.1} parent=43 // pred_region
          %356 = dma.done [#allocation6], 24576
        $region52: #{tpu_custom_call.1} parent=43 // pred_fallthru
          _
        // Predicated region
        $region53: #{tpu_custom_call.1} parent=43 // pred_check
          %p357 = pneg %p103
        $region54: #{tpu_custom_call.1} parent=43 // pred_check_branch
          %359 = sbr.rel (%p357) target = $region56
        $region55: #{tpu_custom_call.1} parent=43 // pred_region
          %361 = dma.done [#allocation6], 64
        $region56: #{tpu_custom_call.1} parent=43 // pred_fallthru
          _
        %s362 = sand.u32 %s28, 1
        %s363 = scalar_lea.sflag [#allocation9], %s362
        %s364 = sand.u32 %s116, 1
        %s365 = smul.addr %s364, 4096
        %s366 = scalar_lea.vmem [#allocation8], %s365
        // Predicated region
        $region57: #{tpu_custom_call.1} parent=43 // pred_check
          %p367 = pneg %p129
        $region58: #{tpu_custom_call.1} parent=43 // pred_check_branch
          %369 = sbr.rel (%p367) target = $region60
        $region59: #{tpu_custom_call.1} parent=43 // pred_region
          %371 = dma.done %s363, 65536
        $region60: #{tpu_custom_call.1} parent=43 // pred_fallthru
          _
        %s372 = sand.u32 %s28, 1
        %s373 = scalar_lea.sflag [#allocation9], %s372
        %s374 = sand.u32 %s142, 1
        %s375 = smul.addr %s374, 16
        %s376 = scalar_lea.vmem [#allocation10], %s375
        // Predicated region
        $region61: #{tpu_custom_call.1} parent=43 // pred_check
          %p377 = pneg %p155
        $region62: #{tpu_custom_call.1} parent=43 // pred_check_branch
          %379 = sbr.rel (%p377) target = $region64
        $region63: #{tpu_custom_call.1} parent=43 // pred_region
          %381 = dma.done %s373, 256
        $region64: #{tpu_custom_call.1} parent=43 // pred_fallthru
          _
        %s382 = sand.u32 %s170, 1
        %s383 = scalar_lea.sflag [#allocation12], %s382
        %s384 = sand.u32 %s170, 1
        %s385 = smul.addr %s384, 128
        %s386 = scalar_lea.vmem [#allocation11], %s385
        // Predicated region
        $region65: #{tpu_custom_call.1} parent=43 // pred_check
          %p387 = pneg %p183
        $region66: #{tpu_custom_call.1} parent=43 // pred_check_branch
          %389 = sbr.rel (%p387) target = $region68
        $region67: #{tpu_custom_call.1} parent=43 // pred_region
          %391 = dma.done %s383, 2048
        $region68: #{tpu_custom_call.1} parent=43 // pred_fallthru
          _
        %p392 = pneg %p61
        %p393 = pneg %p58
        %p394 = pneg %p82
        %p395 = pneg %p79
        %p396 = pneg %p103
        %p397 = pneg %p100
        %s398 = sand.u32 %s28, 1
        %s399 = scalar_lea.sflag [#allocation9], %s398
        %s400 = sand.u32 %s116, 1
        %s401 = smul.addr %s400, 4096
        %s402 = scalar_lea.vmem [#allocation8], %s401
        %p403 = pneg %p129
        %p404 = pneg %p126
        %s405 = sand.u32 %s28, 1
        %s406 = scalar_lea.sflag [#allocation9], %s405
        %s407 = sand.u32 %s142, 1
        %s408 = smul.addr %s407, 16
        %s409 = scalar_lea.vmem [#allocation10], %s408
        %p410 = pneg %p155
        %p411 = pneg %p152
        %s412 = sand.u32 %s170, 1
        %s413 = scalar_lea.sflag [#allocation12], %s412
        %s414 = sand.u32 %s170, 1
        %s415 = smul.addr %s414, 128
        %s416 = scalar_lea.vmem [#allocation11], %s415
        %p417 = pneg %p183
        %p418 = pneg %p180
        %p419 = pneg %p211
        %p420 = pneg %p208
        %s421 = sand.u32 %s198, 1
        %s422 = scalar_lea.sflag [#allocation4], %s421
        %s423 = sand.u32 %s198, 1
        %s424 = smul.addr %s423, 256
        %s425 = scalar_lea.vmem [#allocation13], %s424
        %s426 = smul.u32 2, %s33
        %s427 = smul.u32 16, %s32
        %s428 = smul.u32 16, %s32
        %s429 = smul.u32 2, %s33
        %s430 = smul.u32 16, %s32
        %s431 = smul.u32 2, %s33
        %s432 = smul.u32 16, %s32
        %v433 = vld [vmem:[#allocation2] sm:$0xff]
        %v434 = vld [vmem:[#allocation2 + $0x8] sm:$0xff]
        %v435 = vld [vmem:[#allocation2 + $0x10] sm:$0xff]
        %v436 = vld [vmem:[#allocation2 + $0x18] sm:$0xff]
        %v437 = vld [vmem:[#allocation2 + $0x20] sm:$0xff]
        %v438 = vld [vmem:[#allocation2 + $0x28] sm:$0xff]
        %v439 = vld [vmem:[#allocation5] sm:$0xff]
        %v440 = vld [vmem:[#allocation5 + $0x8] sm:$0xff]
        %v441 = vld [vmem:[#allocation5 + $0x10] sm:$0xff]
        %v442 = vld [vmem:[#allocation5 + $0x18] sm:$0xff]
        %v443 = vld [vmem:[#allocation5 + $0x20] sm:$0xff]
        %v444 = vld [vmem:[#allocation5 + $0x28] sm:$0xff]
        %v445 = vld [vmem:[#allocation5 + $0x30] sm:$0xff]
        %v446 = vld [vmem:[#allocation5 + $0x38] sm:$0xff]
        %v447 = vld [vmem:[#allocation5 + $0x40] sm:$0xff]
        %v448 = vld [vmem:[#allocation5 + $0x48] sm:$0xff]
        %v449 = vld [vmem:[#allocation5 + $0x50] sm:$0xff]
        %v450 = vld [vmem:[#allocation5 + $0x58] sm:$0xff]
        %v451 = vld [vmem:[#allocation5 + $0x60] sm:$0xff]
        %v452 = vld [vmem:[#allocation5 + $0x68] sm:$0xff]
        %v453 = vld [vmem:[#allocation5 + $0x70] sm:$0xff]
        %v454 = vld [vmem:[#allocation5 + $0x78] sm:$0xff]
        %v455 = vld [vmem:[#allocation5 + $0x80] sm:$0xff]
        %v456 = vld [vmem:[#allocation5 + $0x88] sm:$0xff]
        %v457 = vld [vmem:[#allocation5 + $0x90] sm:$0xff]
        %v458 = vld [vmem:[#allocation5 + $0x98] sm:$0xff]
        %v459 = vld [vmem:[#allocation5 + $0xa0] sm:$0xff]
        %v460 = vld [vmem:[#allocation5 + $0xa8] sm:$0xff]
        %v461 = vld [vmem:[#allocation5 + $0xb0] sm:$0xff]
        %v462 = vld [vmem:[#allocation5 + $0xb8] sm:$0xff]
        %v463 = vld [vmem:[#allocation5 + $0xc0] sm:$0xff]
        %v464 = vld [vmem:[#allocation5 + $0xc8] sm:$0xff]
        %v465 = vld [vmem:[#allocation5 + $0xd0] sm:$0xff]
        %v466 = vld [vmem:[#allocation5 + $0xd8] sm:$0xff]
        %v467 = vld [vmem:[#allocation5 + $0xe0] sm:$0xff]
        %v468 = vld [vmem:[#allocation5 + $0xe8] sm:$0xff]
        %v469 = vld [vmem:[#allocation5 + $0xf0] sm:$0xff]
        %v470 = vld [vmem:[#allocation5 + $0xf8] sm:$0xff]
        %v471 = vld [vmem:[#allocation5 + $0x100] sm:$0xff]
        %v472 = vld [vmem:[#allocation5 + $0x108] sm:$0xff]
        %v473 = vld [vmem:[#allocation5 + $0x110] sm:$0xff]
        %v474 = vld [vmem:[#allocation5 + $0x118] sm:$0xff]
        %v475 = vld [vmem:[#allocation5 + $0x120] sm:$0xff]
        %v476 = vld [vmem:[#allocation5 + $0x128] sm:$0xff]
        %v477 = vld [vmem:[#allocation5 + $0x130] sm:$0xff]
        %v478 = vld [vmem:[#allocation5 + $0x138] sm:$0xff]
        %v479 = vld [vmem:[#allocation5 + $0x140] sm:$0xff]
        %v480 = vld [vmem:[#allocation5 + $0x148] sm:$0xff]
        %v481 = vld [vmem:[#allocation5 + $0x150] sm:$0xff]
        %v482 = vld [vmem:[#allocation5 + $0x158] sm:$0xff]
        %v483 = vld [vmem:[#allocation5 + $0x160] sm:$0xff]
        %v484 = vld [vmem:[#allocation5 + $0x168] sm:$0xff]
        %v485 = vld [vmem:[#allocation5 + $0x170] sm:$0xff]
        %v486 = vld [vmem:[#allocation5 + $0x178] sm:$0xff]
        %v487 = vld [vmem:[#allocation5 + $0x180] sm:$0xff]
        %v488 = vld [vmem:[#allocation5 + $0x188] sm:$0xff]
        %v489 = vld [vmem:[#allocation5 + $0x190] sm:$0xff]
        %v490 = vld [vmem:[#allocation5 + $0x198] sm:$0xff]
        %v491 = vld [vmem:[#allocation5 + $0x1a0] sm:$0xff]
        %v492 = vld [vmem:[#allocation5 + $0x1a8] sm:$0xff]
        %v493 = vld [vmem:[#allocation5 + $0x1b0] sm:$0xff]
        %v494 = vld [vmem:[#allocation5 + $0x1b8] sm:$0xff]
        %v495 = vld [vmem:[#allocation5 + $0x1c0] sm:$0xff]
        %v496 = vld [vmem:[#allocation5 + $0x1c8] sm:$0xff]
        %v497 = vld [vmem:[#allocation5 + $0x1d0] sm:$0xff]
        %v498 = vld [vmem:[#allocation5 + $0x1d8] sm:$0xff]
        %v499 = vld [vmem:[#allocation5 + $0x1e0] sm:$0xff]
        %v500 = vld [vmem:[#allocation5 + $0x1e8] sm:$0xff]
        %v501 = vld [vmem:[#allocation5 + $0x1f0] sm:$0xff]
        %v502 = vld [vmem:[#allocation5 + $0x1f8] sm:$0xff]
        %v503 = vld [vmem:[#allocation5 + $0x200] sm:$0xff]
        %v504 = vld [vmem:[#allocation5 + $0x208] sm:$0xff]
        %v505 = vld [vmem:[#allocation5 + $0x210] sm:$0xff]
        %v506 = vld [vmem:[#allocation5 + $0x218] sm:$0xff]
        %v507 = vld [vmem:[#allocation5 + $0x220] sm:$0xff]
        %v508 = vld [vmem:[#allocation5 + $0x228] sm:$0xff]
        %v509 = vld [vmem:[#allocation5 + $0x230] sm:$0xff]
        %v510 = vld [vmem:[#allocation5 + $0x238] sm:$0xff]
        %v511 = vld [vmem:[#allocation5 + $0x240] sm:$0xff]
        %v512 = vld [vmem:[#allocation5 + $0x248] sm:$0xff]
        %v513 = vld [vmem:[#allocation5 + $0x250] sm:$0xff]
        %v514 = vld [vmem:[#allocation5 + $0x258] sm:$0xff]
        %v515 = vld [vmem:[#allocation5 + $0x260] sm:$0xff]
        %v516 = vld [vmem:[#allocation5 + $0x268] sm:$0xff]
        %v517 = vld [vmem:[#allocation5 + $0x270] sm:$0xff]
        %v518 = vld [vmem:[#allocation5 + $0x278] sm:$0xff]
        %v519 = vld [vmem:[#allocation5 + $0x280] sm:$0xff]
        %v520 = vld [vmem:[#allocation5 + $0x288] sm:$0xff]
        %v521 = vld [vmem:[#allocation5 + $0x290] sm:$0xff]
        %v522 = vld [vmem:[#allocation5 + $0x298] sm:$0xff]
        %v523 = vld [vmem:[#allocation5 + $0x2a0] sm:$0xff]
        %v524 = vld [vmem:[#allocation5 + $0x2a8] sm:$0xff]
        %v525 = vld [vmem:[#allocation5 + $0x2b0] sm:$0xff]
        %v526 = vld [vmem:[#allocation5 + $0x2b8] sm:$0xff]
        %v527 = vld [vmem:[#allocation5 + $0x2c0] sm:$0xff]
        %v528 = vld [vmem:[#allocation5 + $0x2c8] sm:$0xff]
        %v529 = vld [vmem:[#allocation5 + $0x2d0] sm:$0xff]
        %v530 = vld [vmem:[#allocation5 + $0x2d8] sm:$0xff]
        %v531 = vld [vmem:[#allocation5 + $0x2e0] sm:$0xff]
        %v532 = vld [vmem:[#allocation5 + $0x2e8] sm:$0xff]
        %v533 = vld [vmem:[#allocation5 + $0x2f0] sm:$0xff]
        %v534 = vld [vmem:[#allocation5 + $0x2f8] sm:$0xff]
        %v535 = vld [vmem:[#allocation5 + $0x300] sm:$0xff]
        %v536 = vld [vmem:[#allocation5 + $0x308] sm:$0xff]
        %v537 = vld [vmem:[#allocation5 + $0x310] sm:$0xff]
        %v538 = vld [vmem:[#allocation5 + $0x318] sm:$0xff]
        %v539 = vld [vmem:[#allocation5 + $0x320] sm:$0xff]
        %v540 = vld [vmem:[#allocation5 + $0x328] sm:$0xff]
        %v541 = vld [vmem:[#allocation5 + $0x330] sm:$0xff]
        %v542 = vld [vmem:[#allocation5 + $0x338] sm:$0xff]
        %v543 = vld [vmem:[#allocation5 + $0x340] sm:$0xff]
        %v544 = vld [vmem:[#allocation5 + $0x348] sm:$0xff]
        %v545 = vld [vmem:[#allocation5 + $0x350] sm:$0xff]
        %v546 = vld [vmem:[#allocation5 + $0x358] sm:$0xff]
        %v547 = vld [vmem:[#allocation5 + $0x360] sm:$0xff]
        %v548 = vld [vmem:[#allocation5 + $0x368] sm:$0xff]
        %v549 = vld [vmem:[#allocation5 + $0x370] sm:$0xff]
        %v550 = vld [vmem:[#allocation5 + $0x378] sm:$0xff]
        %v551 = vld [vmem:[#allocation5 + $0x380] sm:$0xff]
        %v552 = vld [vmem:[#allocation5 + $0x388] sm:$0xff]
        %v553 = vld [vmem:[#allocation5 + $0x390] sm:$0xff]
        %v554 = vld [vmem:[#allocation5 + $0x398] sm:$0xff]
        %v555 = vld [vmem:[#allocation5 + $0x3a0] sm:$0xff]
        %v556 = vld [vmem:[#allocation5 + $0x3a8] sm:$0xff]
        %v557 = vld [vmem:[#allocation5 + $0x3b0] sm:$0xff]
        %v558 = vld [vmem:[#allocation5 + $0x3b8] sm:$0xff]
        %v559 = vld [vmem:[#allocation5 + $0x3c0] sm:$0xff]
        %v560 = vld [vmem:[#allocation5 + $0x3c8] sm:$0xff]
        %v561 = vld [vmem:[#allocation5 + $0x3d0] sm:$0xff]
        %v562 = vld [vmem:[#allocation5 + $0x3d8] sm:$0xff]
        %v563 = vld [vmem:[#allocation5 + $0x3e0] sm:$0xff]
        %v564 = vld [vmem:[#allocation5 + $0x3e8] sm:$0xff]
        %v565 = vld [vmem:[#allocation5 + $0x3f0] sm:$0xff]
        %v566 = vld [vmem:[#allocation5 + $0x3f8] sm:$0xff]
        %v567 = vld [vmem:[#allocation5 + $0x400] sm:$0xff]
        %v568 = vld [vmem:[#allocation5 + $0x408] sm:$0xff]
        %v569 = vld [vmem:[#allocation5 + $0x410] sm:$0xff]
        %v570 = vld [vmem:[#allocation5 + $0x418] sm:$0xff]
        %v571 = vld [vmem:[#allocation5 + $0x420] sm:$0xff]
        %v572 = vld [vmem:[#allocation5 + $0x428] sm:$0xff]
        %v573 = vld [vmem:[#allocation5 + $0x430] sm:$0xff]
        %v574 = vld [vmem:[#allocation5 + $0x438] sm:$0xff]
        %v575 = vld [vmem:[#allocation5 + $0x440] sm:$0xff]
        %v576 = vld [vmem:[#allocation5 + $0x448] sm:$0xff]
        %v577 = vld [vmem:[#allocation5 + $0x450] sm:$0xff]
        %v578 = vld [vmem:[#allocation5 + $0x458] sm:$0xff]
        %v579 = vld [vmem:[#allocation5 + $0x460] sm:$0xff]
        %v580 = vld [vmem:[#allocation5 + $0x468] sm:$0xff]
        %v581 = vld [vmem:[#allocation5 + $0x470] sm:$0xff]
        %v582 = vld [vmem:[#allocation5 + $0x478] sm:$0xff]
        %v583 = vld [vmem:[#allocation5 + $0x480] sm:$0xff]
        %v584 = vld [vmem:[#allocation5 + $0x488] sm:$0xff]
        %v585 = vld [vmem:[#allocation5 + $0x490] sm:$0xff]
        %v586 = vld [vmem:[#allocation5 + $0x498] sm:$0xff]
        %v587 = vld [vmem:[#allocation5 + $0x4a0] sm:$0xff]
        %v588 = vld [vmem:[#allocation5 + $0x4a8] sm:$0xff]
        %v589 = vld [vmem:[#allocation5 + $0x4b0] sm:$0xff]
        %v590 = vld [vmem:[#allocation5 + $0x4b8] sm:$0xff]
        %v591 = vld [vmem:[#allocation5 + $0x4c0] sm:$0xff]
        %v592 = vld [vmem:[#allocation5 + $0x4c8] sm:$0xff]
        %v593 = vld [vmem:[#allocation5 + $0x4d0] sm:$0xff]
        %v594 = vld [vmem:[#allocation5 + $0x4d8] sm:$0xff]
        %v595 = vld [vmem:[#allocation5 + $0x4e0] sm:$0xff]
        %v596 = vld [vmem:[#allocation5 + $0x4e8] sm:$0xff]
        %v597 = vld [vmem:[#allocation5 + $0x4f0] sm:$0xff]
        %v598 = vld [vmem:[#allocation5 + $0x4f8] sm:$0xff]
        %v599 = vld [vmem:[#allocation5 + $0x500] sm:$0xff]
        %v600 = vld [vmem:[#allocation5 + $0x508] sm:$0xff]
        %v601 = vld [vmem:[#allocation5 + $0x510] sm:$0xff]
        %v602 = vld [vmem:[#allocation5 + $0x518] sm:$0xff]
        %v603 = vld [vmem:[#allocation5 + $0x520] sm:$0xff]
        %v604 = vld [vmem:[#allocation5 + $0x528] sm:$0xff]
        %v605 = vld [vmem:[#allocation5 + $0x530] sm:$0xff]
        %v606 = vld [vmem:[#allocation5 + $0x538] sm:$0xff]
        %v607 = vld [vmem:[#allocation5 + $0x540] sm:$0xff]
        %v608 = vld [vmem:[#allocation5 + $0x548] sm:$0xff]
        %v609 = vld [vmem:[#allocation5 + $0x550] sm:$0xff]
        %v610 = vld [vmem:[#allocation5 + $0x558] sm:$0xff]
        %v611 = vld [vmem:[#allocation5 + $0x560] sm:$0xff]
        %v612 = vld [vmem:[#allocation5 + $0x568] sm:$0xff]
        %v613 = vld [vmem:[#allocation5 + $0x570] sm:$0xff]
        %v614 = vld [vmem:[#allocation5 + $0x578] sm:$0xff]
        %v615 = vld [vmem:[#allocation5 + $0x580] sm:$0xff]
        %v616 = vld [vmem:[#allocation5 + $0x588] sm:$0xff]
        %v617 = vld [vmem:[#allocation5 + $0x590] sm:$0xff]
        %v618 = vld [vmem:[#allocation5 + $0x598] sm:$0xff]
        %v619 = vld [vmem:[#allocation5 + $0x5a0] sm:$0xff]
        %v620 = vld [vmem:[#allocation5 + $0x5a8] sm:$0xff]
        %v621 = vld [vmem:[#allocation5 + $0x5b0] sm:$0xff]
        %v622 = vld [vmem:[#allocation5 + $0x5b8] sm:$0xff]
        %v623 = vld [vmem:[#allocation5 + $0x5c0] sm:$0xff]
        %v624 = vld [vmem:[#allocation5 + $0x5c8] sm:$0xff]
        %v625 = vld [vmem:[#allocation5 + $0x5d0] sm:$0xff]
        %v626 = vld [vmem:[#allocation5 + $0x5d8] sm:$0xff]
        %v627 = vld [vmem:[#allocation5 + $0x5e0] sm:$0xff]
        %v628 = vld [vmem:[#allocation5 + $0x5e8] sm:$0xff]
        %v629 = vld [vmem:[#allocation5 + $0x5f0] sm:$0xff]
        %v630 = vld [vmem:[#allocation5 + $0x5f8] sm:$0xff]
        %v631 = vld [vmem:[#allocation7] sm:$0xf]
        %v633 = vperm.slane %v631, 0
        %v634 = vperm.slane %v631, 1
        %v635 = vperm.slane %v631, 2
        %v636 = vperm.slane %v631, 3
        %v647 = vunpack.c.l.b16 %v433
        %v648 = vunpack.c.h.b16 %v433
        %v649 = vunpack.c.l.b16 %v434
        %v650 = vunpack.c.h.b16 %v434
        %v651 = vunpack.c.l.b16 %v435
        %v652 = vunpack.c.h.b16 %v435
        %v653 = vunpack.c.l.b16 %v436
        %v654 = vunpack.c.h.b16 %v436
        %v655 = vunpack.c.l.b16 %v437
        %v656 = vunpack.c.h.b16 %v437
        %v657 = vunpack.c.l.b16 %v438
        %v658 = vunpack.c.h.b16 %v438
        %v659 = vpack.c.b16 %v653, %v647
        %v660 = vpack.c.b16 %v654, %v648
        %v661 = vpack.c.b16 %v655, %v649
        %v662 = vpack.c.b16 %v656, %v650
        %v663 = vpack.c.b16 %v657, %v651
        %v664 = vpack.c.b16 %v658, %v652
        %v863 = vunpack.c.l.b16 %v439
        %v864 = vunpack.c.h.b16 %v439
        %v865 = vunpack.c.l.b16 %v440
        %v866 = vunpack.c.h.b16 %v440
        %v867 = vunpack.c.l.b16 %v441
        %v868 = vunpack.c.h.b16 %v441
        %v869 = vunpack.c.l.b16 %v442
        %v870 = vunpack.c.h.b16 %v442
        %v871 = vunpack.c.l.b16 %v443
        %v872 = vunpack.c.h.b16 %v443
        %v873 = vunpack.c.l.b16 %v444
        %v874 = vunpack.c.h.b16 %v444
        %v875 = vunpack.c.l.b16 %v445
        %v876 = vunpack.c.h.b16 %v445
        %v877 = vunpack.c.l.b16 %v446
        %v878 = vunpack.c.h.b16 %v446
        %v879 = vunpack.c.l.b16 %v447
        %v880 = vunpack.c.h.b16 %v447
        %v881 = vunpack.c.l.b16 %v448
        %v882 = vunpack.c.h.b16 %v448
        %v883 = vunpack.c.l.b16 %v449
        %v884 = vunpack.c.h.b16 %v449
        %v885 = vunpack.c.l.b16 %v450
        %v886 = vunpack.c.h.b16 %v450
        %v887 = vunpack.c.l.b16 %v451
        %v888 = vunpack.c.h.b16 %v451
        %v889 = vunpack.c.l.b16 %v452
        %v890 = vunpack.c.h.b16 %v452
        %v891 = vunpack.c.l.b16 %v453
        %v892 = vunpack.c.h.b16 %v453
        %v893 = vunpack.c.l.b16 %v454
        %v894 = vunpack.c.h.b16 %v454
        %v895 = vunpack.c.l.b16 %v455
        %v896 = vunpack.c.h.b16 %v455
        %v897 = vunpack.c.l.b16 %v456
        %v898 = vunpack.c.h.b16 %v456
        %v899 = vunpack.c.l.b16 %v457
        %v900 = vunpack.c.h.b16 %v457
        %v901 = vunpack.c.l.b16 %v458
        %v902 = vunpack.c.h.b16 %v458
        %v903 = vunpack.c.l.b16 %v459
        %v904 = vunpack.c.h.b16 %v459
        %v905 = vunpack.c.l.b16 %v460
        %v906 = vunpack.c.h.b16 %v460
        %v907 = vunpack.c.l.b16 %v461
        %v908 = vunpack.c.h.b16 %v461
        %v909 = vunpack.c.l.b16 %v462
        %v910 = vunpack.c.h.b16 %v462
        %v911 = vunpack.c.l.b16 %v463
        %v912 = vunpack.c.h.b16 %v463
        %v913 = vunpack.c.l.b16 %v464
        %v914 = vunpack.c.h.b16 %v464
        %v915 = vunpack.c.l.b16 %v465
        %v916 = vunpack.c.h.b16 %v465
        %v917 = vunpack.c.l.b16 %v466
        %v918 = vunpack.c.h.b16 %v466
        %v919 = vunpack.c.l.b16 %v467
        %v920 = vunpack.c.h.b16 %v467
        %v921 = vunpack.c.l.b16 %v468
        %v922 = vunpack.c.h.b16 %v468
        %v923 = vunpack.c.l.b16 %v469
        %v924 = vunpack.c.h.b16 %v469
        %v925 = vunpack.c.l.b16 %v470
        %v926 = vunpack.c.h.b16 %v470
        %v927 = vunpack.c.l.b16 %v471
        %v928 = vunpack.c.h.b16 %v471
        %v929 = vunpack.c.l.b16 %v472
        %v930 = vunpack.c.h.b16 %v472
        %v931 = vunpack.c.l.b16 %v473
        %v932 = vunpack.c.h.b16 %v473
        %v933 = vunpack.c.l.b16 %v474
        %v934 = vunpack.c.h.b16 %v474
        %v935 = vunpack.c.l.b16 %v475
        %v936 = vunpack.c.h.b16 %v475
        %v937 = vunpack.c.l.b16 %v476
        %v938 = vunpack.c.h.b16 %v476
        %v939 = vunpack.c.l.b16 %v477
        %v940 = vunpack.c.h.b16 %v477
        %v941 = vunpack.c.l.b16 %v478
        %v942 = vunpack.c.h.b16 %v478
        %v943 = vunpack.c.l.b16 %v479
        %v944 = vunpack.c.h.b16 %v479
        %v945 = vunpack.c.l.b16 %v480
        %v946 = vunpack.c.h.b16 %v480
        %v947 = vunpack.c.l.b16 %v481
        %v948 = vunpack.c.h.b16 %v481
        %v949 = vunpack.c.l.b16 %v482
        %v950 = vunpack.c.h.b16 %v482
        %v951 = vunpack.c.l.b16 %v483
        %v952 = vunpack.c.h.b16 %v483
        %v953 = vunpack.c.l.b16 %v484
        %v954 = vunpack.c.h.b16 %v484
        %v955 = vunpack.c.l.b16 %v485
        %v956 = vunpack.c.h.b16 %v485
        %v957 = vunpack.c.l.b16 %v486
        %v958 = vunpack.c.h.b16 %v486
        %v959 = vunpack.c.l.b16 %v487
        %v960 = vunpack.c.h.b16 %v487
        %v961 = vunpack.c.l.b16 %v488
        %v962 = vunpack.c.h.b16 %v488
        %v963 = vunpack.c.l.b16 %v489
        %v964 = vunpack.c.h.b16 %v489
        %v965 = vunpack.c.l.b16 %v490
        %v966 = vunpack.c.h.b16 %v490
        %v967 = vunpack.c.l.b16 %v491
        %v968 = vunpack.c.h.b16 %v491
        %v969 = vunpack.c.l.b16 %v492
        %v970 = vunpack.c.h.b16 %v492
        %v971 = vunpack.c.l.b16 %v493
        %v972 = vunpack.c.h.b16 %v493
        %v973 = vunpack.c.l.b16 %v494
        %v974 = vunpack.c.h.b16 %v494
        %v975 = vunpack.c.l.b16 %v495
        %v976 = vunpack.c.h.b16 %v495
        %v977 = vunpack.c.l.b16 %v496
        %v978 = vunpack.c.h.b16 %v496
        %v979 = vunpack.c.l.b16 %v497
        %v980 = vunpack.c.h.b16 %v497
        %v981 = vunpack.c.l.b16 %v498
        %v982 = vunpack.c.h.b16 %v498
        %v983 = vunpack.c.l.b16 %v499
        %v984 = vunpack.c.h.b16 %v499
        %v985 = vunpack.c.l.b16 %v500
        %v986 = vunpack.c.h.b16 %v500
        %v987 = vunpack.c.l.b16 %v501
        %v988 = vunpack.c.h.b16 %v501
        %v989 = vunpack.c.l.b16 %v502
        %v990 = vunpack.c.h.b16 %v502
        %v991 = vunpack.c.l.b16 %v503
        %v992 = vunpack.c.h.b16 %v503
        %v993 = vunpack.c.l.b16 %v504
        %v994 = vunpack.c.h.b16 %v504
        %v995 = vunpack.c.l.b16 %v505
        %v996 = vunpack.c.h.b16 %v505
        %v997 = vunpack.c.l.b16 %v506
        %v998 = vunpack.c.h.b16 %v506
        %v999 = vunpack.c.l.b16 %v507
        %v1000 = vunpack.c.h.b16 %v507
        %v1001 = vunpack.c.l.b16 %v508
        %v1002 = vunpack.c.h.b16 %v508
        %v1003 = vunpack.c.l.b16 %v509
        %v1004 = vunpack.c.h.b16 %v509
        %v1005 = vunpack.c.l.b16 %v510
        %v1006 = vunpack.c.h.b16 %v510
        %v1007 = vunpack.c.l.b16 %v511
        %v1008 = vunpack.c.h.b16 %v511
        %v1009 = vunpack.c.l.b16 %v512
        %v1010 = vunpack.c.h.b16 %v512
        %v1011 = vunpack.c.l.b16 %v513
        %v1012 = vunpack.c.h.b16 %v513
        %v1013 = vunpack.c.l.b16 %v514
        %v1014 = vunpack.c.h.b16 %v514
        %v1015 = vunpack.c.l.b16 %v515
        %v1016 = vunpack.c.h.b16 %v515
        %v1017 = vunpack.c.l.b16 %v516
        %v1018 = vunpack.c.h.b16 %v516
        %v1019 = vunpack.c.l.b16 %v517
        %v1020 = vunpack.c.h.b16 %v517
        %v1021 = vunpack.c.l.b16 %v518
        %v1022 = vunpack.c.h.b16 %v518
        %v1023 = vunpack.c.l.b16 %v519
        %v1024 = vunpack.c.h.b16 %v519
        %v1025 = vunpack.c.l.b16 %v520
        %v1026 = vunpack.c.h.b16 %v520
        %v1027 = vunpack.c.l.b16 %v521
        %v1028 = vunpack.c.h.b16 %v521
        %v1029 = vunpack.c.l.b16 %v522
        %v1030 = vunpack.c.h.b16 %v522
        %v1031 = vunpack.c.l.b16 %v523
        %v1032 = vunpack.c.h.b16 %v523
        %v1033 = vunpack.c.l.b16 %v524
        %v1034 = vunpack.c.h.b16 %v524
        %v1035 = vunpack.c.l.b16 %v525
        %v1036 = vunpack.c.h.b16 %v525
        %v1037 = vunpack.c.l.b16 %v526
        %v1038 = vunpack.c.h.b16 %v526
        %v1039 = vunpack.c.l.b16 %v527
        %v1040 = vunpack.c.h.b16 %v527
        %v1041 = vunpack.c.l.b16 %v528
        %v1042 = vunpack.c.h.b16 %v528
        %v1043 = vunpack.c.l.b16 %v529
        %v1044 = vunpack.c.h.b16 %v529
        %v1045 = vunpack.c.l.b16 %v530
        %v1046 = vunpack.c.h.b16 %v530
        %v1047 = vunpack.c.l.b16 %v531
        %v1048 = vunpack.c.h.b16 %v531
        %v1049 = vunpack.c.l.b16 %v532
        %v1050 = vunpack.c.h.b16 %v532
        %v1051 = vunpack.c.l.b16 %v533
        %v1052 = vunpack.c.h.b16 %v533
        %v1053 = vunpack.c.l.b16 %v534
        %v1054 = vunpack.c.h.b16 %v534
        %v1055 = vunpack.c.l.b16 %v535
        %v1056 = vunpack.c.h.b16 %v535
        %v1057 = vunpack.c.l.b16 %v536
        %v1058 = vunpack.c.h.b16 %v536
        %v1059 = vunpack.c.l.b16 %v537
        %v1060 = vunpack.c.h.b16 %v537
        %v1061 = vunpack.c.l.b16 %v538
        %v1062 = vunpack.c.h.b16 %v538
        %v1063 = vunpack.c.l.b16 %v539
        %v1064 = vunpack.c.h.b16 %v539
        %v1065 = vunpack.c.l.b16 %v540
        %v1066 = vunpack.c.h.b16 %v540
        %v1067 = vunpack.c.l.b16 %v541
        %v1068 = vunpack.c.h.b16 %v541
        %v1069 = vunpack.c.l.b16 %v542
        %v1070 = vunpack.c.h.b16 %v542
        %v1071 = vunpack.c.l.b16 %v543
        %v1072 = vunpack.c.h.b16 %v543
        %v1073 = vunpack.c.l.b16 %v544
        %v1074 = vunpack.c.h.b16 %v544
        %v1075 = vunpack.c.l.b16 %v545
        %v1076 = vunpack.c.h.b16 %v545
        %v1077 = vunpack.c.l.b16 %v546
        %v1078 = vunpack.c.h.b16 %v546
        %v1079 = vunpack.c.l.b16 %v547
        %v1080 = vunpack.c.h.b16 %v547
        %v1081 = vunpack.c.l.b16 %v548
        %v1082 = vunpack.c.h.b16 %v548
        %v1083 = vunpack.c.l.b16 %v549
        %v1084 = vunpack.c.h.b16 %v549
        %v1085 = vunpack.c.l.b16 %v550
        %v1086 = vunpack.c.h.b16 %v550
        %v1087 = vunpack.c.l.b16 %v551
        %v1088 = vunpack.c.h.b16 %v551
        %v1089 = vunpack.c.l.b16 %v552
        %v1090 = vunpack.c.h.b16 %v552
        %v1091 = vunpack.c.l.b16 %v553
        %v1092 = vunpack.c.h.b16 %v553
        %v1093 = vunpack.c.l.b16 %v554
        %v1094 = vunpack.c.h.b16 %v554
        %v1095 = vunpack.c.l.b16 %v555
        %v1096 = vunpack.c.h.b16 %v555
        %v1097 = vunpack.c.l.b16 %v556
        %v1098 = vunpack.c.h.b16 %v556
        %v1099 = vunpack.c.l.b16 %v557
        %v1100 = vunpack.c.h.b16 %v557
        %v1101 = vunpack.c.l.b16 %v558
        %v1102 = vunpack.c.h.b16 %v558
        %v1103 = vunpack.c.l.b16 %v559
        %v1104 = vunpack.c.h.b16 %v559
        %v1105 = vunpack.c.l.b16 %v560
        %v1106 = vunpack.c.h.b16 %v560
        %v1107 = vunpack.c.l.b16 %v561
        %v1108 = vunpack.c.h.b16 %v561
        %v1109 = vunpack.c.l.b16 %v562
        %v1110 = vunpack.c.h.b16 %v562
        %v1111 = vunpack.c.l.b16 %v563
        %v1112 = vunpack.c.h.b16 %v563
        %v1113 = vunpack.c.l.b16 %v564
        %v1114 = vunpack.c.h.b16 %v564
        %v1115 = vunpack.c.l.b16 %v565
        %v1116 = vunpack.c.h.b16 %v565
        %v1117 = vunpack.c.l.b16 %v566
        %v1118 = vunpack.c.h.b16 %v566
        %v1119 = vunpack.c.l.b16 %v567
        %v1120 = vunpack.c.h.b16 %v567
        %v1121 = vunpack.c.l.b16 %v568
        %v1122 = vunpack.c.h.b16 %v568
        %v1123 = vunpack.c.l.b16 %v569
        %v1124 = vunpack.c.h.b16 %v569
        %v1125 = vunpack.c.l.b16 %v570
        %v1126 = vunpack.c.h.b16 %v570
        %v1127 = vunpack.c.l.b16 %v571
        %v1128 = vunpack.c.h.b16 %v571
        %v1129 = vunpack.c.l.b16 %v572
        %v1130 = vunpack.c.h.b16 %v572
        %v1131 = vunpack.c.l.b16 %v573
        %v1132 = vunpack.c.h.b16 %v573
        %v1133 = vunpack.c.l.b16 %v574
        %v1134 = vunpack.c.h.b16 %v574
        %v1135 = vunpack.c.l.b16 %v575
        %v1136 = vunpack.c.h.b16 %v575
        %v1137 = vunpack.c.l.b16 %v576
        %v1138 = vunpack.c.h.b16 %v576
        %v1139 = vunpack.c.l.b16 %v577
        %v1140 = vunpack.c.h.b16 %v577
        %v1141 = vunpack.c.l.b16 %v578
        %v1142 = vunpack.c.h.b16 %v578
        %v1143 = vunpack.c.l.b16 %v579
        %v1144 = vunpack.c.h.b16 %v579
        %v1145 = vunpack.c.l.b16 %v580
        %v1146 = vunpack.c.h.b16 %v580
        %v1147 = vunpack.c.l.b16 %v581
        %v1148 = vunpack.c.h.b16 %v581
        %v1149 = vunpack.c.l.b16 %v582
        %v1150 = vunpack.c.h.b16 %v582
        %v1151 = vunpack.c.l.b16 %v583
        %v1152 = vunpack.c.h.b16 %v583
        %v1153 = vunpack.c.l.b16 %v584
        %v1154 = vunpack.c.h.b16 %v584
        %v1155 = vunpack.c.l.b16 %v585
        %v1156 = vunpack.c.h.b16 %v585
        %v1157 = vunpack.c.l.b16 %v586
        %v1158 = vunpack.c.h.b16 %v586
        %v1159 = vunpack.c.l.b16 %v587
        %v1160 = vunpack.c.h.b16 %v587
        %v1161 = vunpack.c.l.b16 %v588
        %v1162 = vunpack.c.h.b16 %v588
        %v1163 = vunpack.c.l.b16 %v589
        %v1164 = vunpack.c.h.b16 %v589
        %v1165 = vunpack.c.l.b16 %v590
        %v1166 = vunpack.c.h.b16 %v590
        %v1167 = vunpack.c.l.b16 %v591
        %v1168 = vunpack.c.h.b16 %v591
        %v1169 = vunpack.c.l.b16 %v592
        %v1170 = vunpack.c.h.b16 %v592
        %v1171 = vunpack.c.l.b16 %v593
        %v1172 = vunpack.c.h.b16 %v593
        %v1173 = vunpack.c.l.b16 %v594
        %v1174 = vunpack.c.h.b16 %v594
        %v1175 = vunpack.c.l.b16 %v595
        %v1176 = vunpack.c.h.b16 %v595
        %v1177 = vunpack.c.l.b16 %v596
        %v1178 = vunpack.c.h.b16 %v596
        %v1179 = vunpack.c.l.b16 %v597
        %v1180 = vunpack.c.h.b16 %v597
        %v1181 = vunpack.c.l.b16 %v598
        %v1182 = vunpack.c.h.b16 %v598
        %v1183 = vunpack.c.l.b16 %v599
        %v1184 = vunpack.c.h.b16 %v599
        %v1185 = vunpack.c.l.b16 %v600
        %v1186 = vunpack.c.h.b16 %v600
        %v1187 = vunpack.c.l.b16 %v601
        %v1188 = vunpack.c.h.b16 %v601
        %v1189 = vunpack.c.l.b16 %v602
        %v1190 = vunpack.c.h.b16 %v602
        %v1191 = vunpack.c.l.b16 %v603
        %v1192 = vunpack.c.h.b16 %v603
        %v1193 = vunpack.c.l.b16 %v604
        %v1194 = vunpack.c.h.b16 %v604
        %v1195 = vunpack.c.l.b16 %v605
        %v1196 = vunpack.c.h.b16 %v605
        %v1197 = vunpack.c.l.b16 %v606
        %v1198 = vunpack.c.h.b16 %v606
        %v1199 = vunpack.c.l.b16 %v607
        %v1200 = vunpack.c.h.b16 %v607
        %v1201 = vunpack.c.l.b16 %v608
        %v1202 = vunpack.c.h.b16 %v608
        %v1203 = vunpack.c.l.b16 %v609
        %v1204 = vunpack.c.h.b16 %v609
        %v1205 = vunpack.c.l.b16 %v610
        %v1206 = vunpack.c.h.b16 %v610
        %v1207 = vunpack.c.l.b16 %v611
        %v1208 = vunpack.c.h.b16 %v611
        %v1209 = vunpack.c.l.b16 %v612
        %v1210 = vunpack.c.h.b16 %v612
        %v1211 = vunpack.c.l.b16 %v613
        %v1212 = vunpack.c.h.b16 %v613
        %v1213 = vunpack.c.l.b16 %v614
        %v1214 = vunpack.c.h.b16 %v614
        %v1215 = vunpack.c.l.b16 %v615
        %v1216 = vunpack.c.h.b16 %v615
        %v1217 = vunpack.c.l.b16 %v616
        %v1218 = vunpack.c.h.b16 %v616
        %v1219 = vunpack.c.l.b16 %v617
        %v1220 = vunpack.c.h.b16 %v617
        %v1221 = vunpack.c.l.b16 %v618
        %v1222 = vunpack.c.h.b16 %v618
        %v1223 = vunpack.c.l.b16 %v619
        %v1224 = vunpack.c.h.b16 %v619
        %v1225 = vunpack.c.l.b16 %v620
        %v1226 = vunpack.c.h.b16 %v620
        %v1227 = vunpack.c.l.b16 %v621
        %v1228 = vunpack.c.h.b16 %v621
        %v1229 = vunpack.c.l.b16 %v622
        %v1230 = vunpack.c.h.b16 %v622
        %v1231 = vunpack.c.l.b16 %v623
        %v1232 = vunpack.c.h.b16 %v623
        %v1233 = vunpack.c.l.b16 %v624
        %v1234 = vunpack.c.h.b16 %v624
        %v1235 = vunpack.c.l.b16 %v625
        %v1236 = vunpack.c.h.b16 %v625
        %v1237 = vunpack.c.l.b16 %v626
        %v1238 = vunpack.c.h.b16 %v626
        %v1239 = vunpack.c.l.b16 %v627
        %v1240 = vunpack.c.h.b16 %v627
        %v1241 = vunpack.c.l.b16 %v628
        %v1242 = vunpack.c.h.b16 %v628
        %v1243 = vunpack.c.l.b16 %v629
        %v1244 = vunpack.c.h.b16 %v629
        %v1245 = vunpack.c.l.b16 %v630
        %v1246 = vunpack.c.h.b16 %v630
        %v1247 = vpack.c.b16 %v867, %v863
        %v1248 = vpack.c.b16 %v868, %v864
        %v1249 = vpack.c.b16 %v869, %v865
        %v1250 = vpack.c.b16 %v870, %v866
        %v1251 = vpack.c.b16 %v875, %v871
        %v1252 = vpack.c.b16 %v876, %v872
        %v1253 = vpack.c.b16 %v877, %v873
        %v1254 = vpack.c.b16 %v878, %v874
        %v1255 = vpack.c.b16 %v883, %v879
        %v1256 = vpack.c.b16 %v884, %v880
        %v1257 = vpack.c.b16 %v885, %v881
        %v1258 = vpack.c.b16 %v886, %v882
        %v1259 = vpack.c.b16 %v891, %v887
        %v1260 = vpack.c.b16 %v892, %v888
        %v1261 = vpack.c.b16 %v893, %v889
        %v1262 = vpack.c.b16 %v894, %v890
        %v1263 = vpack.c.b16 %v899, %v895
        %v1264 = vpack.c.b16 %v900, %v896
        %v1265 = vpack.c.b16 %v901, %v897
        %v1266 = vpack.c.b16 %v902, %v898
        %v1267 = vpack.c.b16 %v907, %v903
        %v1268 = vpack.c.b16 %v908, %v904
        %v1269 = vpack.c.b16 %v909, %v905
        %v1270 = vpack.c.b16 %v910, %v906
        %v1271 = vpack.c.b16 %v915, %v911
        %v1272 = vpack.c.b16 %v916, %v912
        %v1273 = vpack.c.b16 %v917, %v913
        %v1274 = vpack.c.b16 %v918, %v914
        %v1275 = vpack.c.b16 %v923, %v919
        %v1276 = vpack.c.b16 %v924, %v920
        %v1277 = vpack.c.b16 %v925, %v921
        %v1278 = vpack.c.b16 %v926, %v922
        %v1279 = vpack.c.b16 %v931, %v927
        %v1280 = vpack.c.b16 %v932, %v928
        %v1281 = vpack.c.b16 %v933, %v929
        %v1282 = vpack.c.b16 %v934, %v930
        %v1283 = vpack.c.b16 %v939, %v935
        %v1284 = vpack.c.b16 %v940, %v936
        %v1285 = vpack.c.b16 %v941, %v937
        %v1286 = vpack.c.b16 %v942, %v938
        %v1287 = vpack.c.b16 %v947, %v943
        %v1288 = vpack.c.b16 %v948, %v944
        %v1289 = vpack.c.b16 %v949, %v945
        %v1290 = vpack.c.b16 %v950, %v946
        %v1291 = vpack.c.b16 %v955, %v951
        %v1292 = vpack.c.b16 %v956, %v952
        %v1293 = vpack.c.b16 %v957, %v953
        %v1294 = vpack.c.b16 %v958, %v954
        %v1295 = vpack.c.b16 %v963, %v959
        %v1296 = vpack.c.b16 %v964, %v960
        %v1297 = vpack.c.b16 %v965, %v961
        %v1298 = vpack.c.b16 %v966, %v962
        %v1299 = vpack.c.b16 %v971, %v967
        %v1300 = vpack.c.b16 %v972, %v968
        %v1301 = vpack.c.b16 %v973, %v969
        %v1302 = vpack.c.b16 %v974, %v970
        %v1303 = vpack.c.b16 %v979, %v975
        %v1304 = vpack.c.b16 %v980, %v976
        %v1305 = vpack.c.b16 %v981, %v977
        %v1306 = vpack.c.b16 %v982, %v978
        %v1307 = vpack.c.b16 %v987, %v983
        %v1308 = vpack.c.b16 %v988, %v984
        %v1309 = vpack.c.b16 %v989, %v985
        %v1310 = vpack.c.b16 %v990, %v986
        %v1311 = vpack.c.b16 %v995, %v991
        %v1312 = vpack.c.b16 %v996, %v992
        %v1313 = vpack.c.b16 %v997, %v993
        %v1314 = vpack.c.b16 %v998, %v994
        %v1315 = vpack.c.b16 %v1003, %v999
        %v1316 = vpack.c.b16 %v1004, %v1000
        %v1317 = vpack.c.b16 %v1005, %v1001
        %v1318 = vpack.c.b16 %v1006, %v1002
        %v1319 = vpack.c.b16 %v1011, %v1007
        %v1320 = vpack.c.b16 %v1012, %v1008
        %v1321 = vpack.c.b16 %v1013, %v1009
        %v1322 = vpack.c.b16 %v1014, %v1010
        %v1323 = vpack.c.b16 %v1019, %v1015
        %v1324 = vpack.c.b16 %v1020, %v1016
        %v1325 = vpack.c.b16 %v1021, %v1017
        %v1326 = vpack.c.b16 %v1022, %v1018
        %v1327 = vpack.c.b16 %v1027, %v1023
        %v1328 = vpack.c.b16 %v1028, %v1024
        %v1329 = vpack.c.b16 %v1029, %v1025
        %v1330 = vpack.c.b16 %v1030, %v1026
        %v1331 = vpack.c.b16 %v1035, %v1031
        %v1332 = vpack.c.b16 %v1036, %v1032
        %v1333 = vpack.c.b16 %v1037, %v1033
        %v1334 = vpack.c.b16 %v1038, %v1034
        %v1335 = vpack.c.b16 %v1043, %v1039
        %v1336 = vpack.c.b16 %v1044, %v1040
        %v1337 = vpack.c.b16 %v1045, %v1041
        %v1338 = vpack.c.b16 %v1046, %v1042
        %v1339 = vpack.c.b16 %v1051, %v1047
        %v1340 = vpack.c.b16 %v1052, %v1048
        %v1341 = vpack.c.b16 %v1053, %v1049
        %v1342 = vpack.c.b16 %v1054, %v1050
        %v1343 = vpack.c.b16 %v1059, %v1055
        %v1344 = vpack.c.b16 %v1060, %v1056
        %v1345 = vpack.c.b16 %v1061, %v1057
        %v1346 = vpack.c.b16 %v1062, %v1058
        %v1347 = vpack.c.b16 %v1067, %v1063
        %v1348 = vpack.c.b16 %v1068, %v1064
        %v1349 = vpack.c.b16 %v1069, %v1065
        %v1350 = vpack.c.b16 %v1070, %v1066
        %v1351 = vpack.c.b16 %v1075, %v1071
        %v1352 = vpack.c.b16 %v1076, %v1072
        %v1353 = vpack.c.b16 %v1077, %v1073
        %v1354 = vpack.c.b16 %v1078, %v1074
        %v1355 = vpack.c.b16 %v1083, %v1079
        %v1356 = vpack.c.b16 %v1084, %v1080
        %v1357 = vpack.c.b16 %v1085, %v1081
        %v1358 = vpack.c.b16 %v1086, %v1082
        %v1359 = vpack.c.b16 %v1091, %v1087
        %v1360 = vpack.c.b16 %v1092, %v1088
        %v1361 = vpack.c.b16 %v1093, %v1089
        %v1362 = vpack.c.b16 %v1094, %v1090
        %v1363 = vpack.c.b16 %v1099, %v1095
        %v1364 = vpack.c.b16 %v1100, %v1096
        %v1365 = vpack.c.b16 %v1101, %v1097
        %v1366 = vpack.c.b16 %v1102, %v1098
        %v1367 = vpack.c.b16 %v1107, %v1103
        %v1368 = vpack.c.b16 %v1108, %v1104
        %v1369 = vpack.c.b16 %v1109, %v1105
        %v1370 = vpack.c.b16 %v1110, %v1106
        %v1371 = vpack.c.b16 %v1115, %v1111
        %v1372 = vpack.c.b16 %v1116, %v1112
        %v1373 = vpack.c.b16 %v1117, %v1113
        %v1374 = vpack.c.b16 %v1118, %v1114
        %v1375 = vpack.c.b16 %v1123, %v1119
        %v1376 = vpack.c.b16 %v1124, %v1120
        %v1377 = vpack.c.b16 %v1125, %v1121
        %v1378 = vpack.c.b16 %v1126, %v1122
        %v1379 = vpack.c.b16 %v1131, %v1127
        %v1380 = vpack.c.b16 %v1132, %v1128
        %v1381 = vpack.c.b16 %v1133, %v1129
        %v1382 = vpack.c.b16 %v1134, %v1130
        %v1383 = vpack.c.b16 %v1139, %v1135
        %v1384 = vpack.c.b16 %v1140, %v1136
        %v1385 = vpack.c.b16 %v1141, %v1137
        %v1386 = vpack.c.b16 %v1142, %v1138
        %v1387 = vpack.c.b16 %v1147, %v1143
        %v1388 = vpack.c.b16 %v1148, %v1144
        %v1389 = vpack.c.b16 %v1149, %v1145
        %v1390 = vpack.c.b16 %v1150, %v1146
        %v1391 = vpack.c.b16 %v1155, %v1151
        %v1392 = vpack.c.b16 %v1156, %v1152
        %v1393 = vpack.c.b16 %v1157, %v1153
        %v1394 = vpack.c.b16 %v1158, %v1154
        %v1395 = vpack.c.b16 %v1163, %v1159
        %v1396 = vpack.c.b16 %v1164, %v1160
        %v1397 = vpack.c.b16 %v1165, %v1161
        %v1398 = vpack.c.b16 %v1166, %v1162
        %v1399 = vpack.c.b16 %v1171, %v1167
        %v1400 = vpack.c.b16 %v1172, %v1168
        %v1401 = vpack.c.b16 %v1173, %v1169
        %v1402 = vpack.c.b16 %v1174, %v1170
        %v1403 = vpack.c.b16 %v1179, %v1175
        %v1404 = vpack.c.b16 %v1180, %v1176
        %v1405 = vpack.c.b16 %v1181, %v1177
        %v1406 = vpack.c.b16 %v1182, %v1178
        %v1407 = vpack.c.b16 %v1187, %v1183
        %v1408 = vpack.c.b16 %v1188, %v1184
        %v1409 = vpack.c.b16 %v1189, %v1185
        %v1410 = vpack.c.b16 %v1190, %v1186
        %v1411 = vpack.c.b16 %v1195, %v1191
        %v1412 = vpack.c.b16 %v1196, %v1192
        %v1413 = vpack.c.b16 %v1197, %v1193
        %v1414 = vpack.c.b16 %v1198, %v1194
        %v1415 = vpack.c.b16 %v1203, %v1199
        %v1416 = vpack.c.b16 %v1204, %v1200
        %v1417 = vpack.c.b16 %v1205, %v1201
        %v1418 = vpack.c.b16 %v1206, %v1202
        %v1419 = vpack.c.b16 %v1211, %v1207
        %v1420 = vpack.c.b16 %v1212, %v1208
        %v1421 = vpack.c.b16 %v1213, %v1209
        %v1422 = vpack.c.b16 %v1214, %v1210
        %v1423 = vpack.c.b16 %v1219, %v1215
        %v1424 = vpack.c.b16 %v1220, %v1216
        %v1425 = vpack.c.b16 %v1221, %v1217
        %v1426 = vpack.c.b16 %v1222, %v1218
        %v1427 = vpack.c.b16 %v1227, %v1223
        %v1428 = vpack.c.b16 %v1228, %v1224
        %v1429 = vpack.c.b16 %v1229, %v1225
        %v1430 = vpack.c.b16 %v1230, %v1226
        %v1431 = vpack.c.b16 %v1235, %v1231
        %v1432 = vpack.c.b16 %v1236, %v1232
        %v1433 = vpack.c.b16 %v1237, %v1233
        %v1434 = vpack.c.b16 %v1238, %v1234
        %v1435 = vpack.c.b16 %v1243, %v1239
        %v1436 = vpack.c.b16 %v1244, %v1240
        %v1437 = vpack.c.b16 %v1245, %v1241
        %v1438 = vpack.c.b16 %v1246, %v1242
        %1631 = vmatpush.bf16.msra.mxu0 %v1275
        %1632 = vmatpush.bf16.msra.mxu0 %v1271
        %1633 = vmatpush.bf16.msra.mxu0 %v1267
        %1634 = vmatpush.bf16.msra.mxu0 %v1263
        %1635 = vmatpush.bf16.msra.mxu0 %v1259
        %1636 = vmatpush.bf16.msra.mxu0 %v1255
        %1637 = vmatpush.bf16.msra.mxu0 %v1251
        %1638 = vmatpush.bf16.msra.mxu0 %v1247
        %1639 = vmatmul.bf16.gmra.mxu0 %v659
        %v1640 = vpop.f32.mrf.mxu0
        %v1641 = vadd.f32 %v633, %v1640
        %v1642 = vpop.f32.mrf.mxu0
        %v1643 = vadd.f32 %v633, %v1642
        %1644 = vdwg.mxu0
        %1645 = vmatpush.bf16.msra.mxu0 %v1307
        %1646 = vmatpush.bf16.msra.mxu0 %v1303
        %1647 = vmatpush.bf16.msra.mxu0 %v1299
        %1648 = vmatpush.bf16.msra.mxu0 %v1295
        %1649 = vmatpush.bf16.msra.mxu0 %v1291
        %1650 = vmatpush.bf16.msra.mxu0 %v1287
        %1651 = vmatpush.bf16.msra.mxu0 %v1283
        %1652 = vmatpush.bf16.msra.mxu0 %v1279
        %1653 = vmatmul.bf16.gmra.mxu0 %v660
        %v1654 = vpop.f32.mrf.mxu0
        %v1655 = vadd.f32 %v1641, %v1654
        %v1656 = vpop.f32.mrf.mxu0
        %v1657 = vadd.f32 %v1643, %v1656
        %1658 = vdwg.mxu0
        %1659 = vmatpush.bf16.msra.mxu0 %v1339
        %1660 = vmatpush.bf16.msra.mxu0 %v1335
        %1661 = vmatpush.bf16.msra.mxu0 %v1331
        %1662 = vmatpush.bf16.msra.mxu0 %v1327
        %1663 = vmatpush.bf16.msra.mxu0 %v1323
        %1664 = vmatpush.bf16.msra.mxu0 %v1319
        %1665 = vmatpush.bf16.msra.mxu0 %v1315
        %1666 = vmatpush.bf16.msra.mxu0 %v1311
        %1667 = vmatmul.bf16.gmra.mxu0 %v661
        %v1668 = vpop.f32.mrf.mxu0
        %v1669 = vadd.f32 %v1655, %v1668
        %v1670 = vpop.f32.mrf.mxu0
        %v1671 = vadd.f32 %v1657, %v1670
        %1672 = vdwg.mxu0
        %1673 = vmatpush.bf16.msra.mxu0 %v1371
        %1674 = vmatpush.bf16.msra.mxu0 %v1367
        %1675 = vmatpush.bf16.msra.mxu0 %v1363
        %1676 = vmatpush.bf16.msra.mxu0 %v1359
        %1677 = vmatpush.bf16.msra.mxu0 %v1355
        %1678 = vmatpush.bf16.msra.mxu0 %v1351
        %1679 = vmatpush.bf16.msra.mxu0 %v1347
        %1680 = vmatpush.bf16.msra.mxu0 %v1343
        %1681 = vmatmul.bf16.gmra.mxu0 %v662
        %v1682 = vpop.f32.mrf.mxu0
        %v1683 = vadd.f32 %v1669, %v1682
        %v1684 = vpop.f32.mrf.mxu0
        %v1685 = vadd.f32 %v1671, %v1684
        %1686 = vdwg.mxu0
        %1687 = vmatpush.bf16.msra.mxu0 %v1403
        %1688 = vmatpush.bf16.msra.mxu0 %v1399
        %1689 = vmatpush.bf16.msra.mxu0 %v1395
        %1690 = vmatpush.bf16.msra.mxu0 %v1391
        %1691 = vmatpush.bf16.msra.mxu0 %v1387
        %1692 = vmatpush.bf16.msra.mxu0 %v1383
        %1693 = vmatpush.bf16.msra.mxu0 %v1379
        %1694 = vmatpush.bf16.msra.mxu0 %v1375
        %1695 = vmatmul.bf16.gmra.mxu0 %v663
        %v1696 = vpop.f32.mrf.mxu0
        %v1697 = vadd.f32 %v1683, %v1696
        %v1698 = vpop.f32.mrf.mxu0
        %v1699 = vadd.f32 %v1685, %v1698
        %1700 = vdwg.mxu0
        %1701 = vmatpush.bf16.msra.mxu0 %v1435
        %1702 = vmatpush.bf16.msra.mxu0 %v1431
        %1703 = vmatpush.bf16.msra.mxu0 %v1427
        %1704 = vmatpush.bf16.msra.mxu0 %v1423
        %1705 = vmatpush.bf16.msra.mxu0 %v1419
        %1706 = vmatpush.bf16.msra.mxu0 %v1415
        %1707 = vmatpush.bf16.msra.mxu0 %v1411
        %1708 = vmatpush.bf16.msra.mxu0 %v1407
        %1709 = vmatmul.bf16.gmra.mxu0 %v664
        %v1710 = vpop.f32.mrf.mxu0
        %v1711 = vadd.f32 %v1697, %v1710
        %v1712 = vpop.f32.mrf.mxu0
        %v1713 = vadd.f32 %v1699, %v1712
        %1714 = vdwg.mxu0
        %1715 = vmatpush.bf16.msra.mxu0 %v1276
        %1716 = vmatpush.bf16.msra.mxu0 %v1272
        %1717 = vmatpush.bf16.msra.mxu0 %v1268
        %1718 = vmatpush.bf16.msra.mxu0 %v1264
        %1719 = vmatpush.bf16.msra.mxu0 %v1260
        %1720 = vmatpush.bf16.msra.mxu0 %v1256
        %1721 = vmatpush.bf16.msra.mxu0 %v1252
        %1722 = vmatpush.bf16.msra.mxu0 %v1248
        %1723 = vmatmul.bf16.gmra.mxu0 %v659
        %v1724 = vpop.f32.mrf.mxu0
        %v1725 = vadd.f32 %v634, %v1724
        %v1726 = vpop.f32.mrf.mxu0
        %v1727 = vadd.f32 %v634, %v1726
        %1728 = vdwg.mxu0
        %1729 = vmatpush.bf16.msra.mxu0 %v1308
        %1730 = vmatpush.bf16.msra.mxu0 %v1304
        %1731 = vmatpush.bf16.msra.mxu0 %v1300
        %1732 = vmatpush.bf16.msra.mxu0 %v1296
        %1733 = vmatpush.bf16.msra.mxu0 %v1292
        %1734 = vmatpush.bf16.msra.mxu0 %v1288
        %1735 = vmatpush.bf16.msra.mxu0 %v1284
        %1736 = vmatpush.bf16.msra.mxu0 %v1280
        %1737 = vmatmul.bf16.gmra.mxu0 %v660
        %v1738 = vpop.f32.mrf.mxu0
        %v1739 = vadd.f32 %v1725, %v1738
        %v1740 = vpop.f32.mrf.mxu0
        %v1741 = vadd.f32 %v1727, %v1740
        %1742 = vdwg.mxu0
        %1743 = vmatpush.bf16.msra.mxu0 %v1340
        %1744 = vmatpush.bf16.msra.mxu0 %v1336
        %1745 = vmatpush.bf16.msra.mxu0 %v1332
        %1746 = vmatpush.bf16.msra.mxu0 %v1328
        %1747 = vmatpush.bf16.msra.mxu0 %v1324
        %1748 = vmatpush.bf16.msra.mxu0 %v1320
        %1749 = vmatpush.bf16.msra.mxu0 %v1316
        %1750 = vmatpush.bf16.msra.mxu0 %v1312
        %1751 = vmatmul.bf16.gmra.mxu0 %v661
        %v1752 = vpop.f32.mrf.mxu0
        %v1753 = vadd.f32 %v1739, %v1752
        %v1754 = vpop.f32.mrf.mxu0
        %v1755 = vadd.f32 %v1741, %v1754
        %1756 = vdwg.mxu0
        %1757 = vmatpush.bf16.msra.mxu0 %v1372
        %1758 = vmatpush.bf16.msra.mxu0 %v1368
        %1759 = vmatpush.bf16.msra.mxu0 %v1364
        %1760 = vmatpush.bf16.msra.mxu0 %v1360
        %1761 = vmatpush.bf16.msra.mxu0 %v1356
        %1762 = vmatpush.bf16.msra.mxu0 %v1352
        %1763 = vmatpush.bf16.msra.mxu0 %v1348
        %1764 = vmatpush.bf16.msra.mxu0 %v1344
        %1765 = vmatmul.bf16.gmra.mxu0 %v662
        %v1766 = vpop.f32.mrf.mxu0
        %v1767 = vadd.f32 %v1753, %v1766
        %v1768 = vpop.f32.mrf.mxu0
        %v1769 = vadd.f32 %v1755, %v1768
        %1770 = vdwg.mxu0
        %1771 = vmatpush.bf16.msra.mxu0 %v1404
        %1772 = vmatpush.bf16.msra.mxu0 %v1400
        %1773 = vmatpush.bf16.msra.mxu0 %v1396
        %1774 = vmatpush.bf16.msra.mxu0 %v1392
        %1775 = vmatpush.bf16.msra.mxu0 %v1388
        %1776 = vmatpush.bf16.msra.mxu0 %v1384
        %1777 = vmatpush.bf16.msra.mxu0 %v1380
        %1778 = vmatpush.bf16.msra.mxu0 %v1376
        %1779 = vmatmul.bf16.gmra.mxu0 %v663
        %v1780 = vpop.f32.mrf.mxu0
        %v1781 = vadd.f32 %v1767, %v1780
        %v1782 = vpop.f32.mrf.mxu0
        %v1783 = vadd.f32 %v1769, %v1782
        %1784 = vdwg.mxu0
        %1785 = vmatpush.bf16.msra.mxu0 %v1436
        %1786 = vmatpush.bf16.msra.mxu0 %v1432
        %1787 = vmatpush.bf16.msra.mxu0 %v1428
        %1788 = vmatpush.bf16.msra.mxu0 %v1424
        %1789 = vmatpush.bf16.msra.mxu0 %v1420
        %1790 = vmatpush.bf16.msra.mxu0 %v1416
        %1791 = vmatpush.bf16.msra.mxu0 %v1412
        %1792 = vmatpush.bf16.msra.mxu0 %v1408
        %1793 = vmatmul.bf16.gmra.mxu0 %v664
        %v1794 = vpop.f32.mrf.mxu0
        %v1795 = vadd.f32 %v1781, %v1794
        %v1796 = vpop.f32.mrf.mxu0
        %v1797 = vadd.f32 %v1783, %v1796
        %1798 = vdwg.mxu0
        %1799 = vmatpush.bf16.msra.mxu0 %v1277
        %1800 = vmatpush.bf16.msra.mxu0 %v1273
        %1801 = vmatpush.bf16.msra.mxu0 %v1269
        %1802 = vmatpush.bf16.msra.mxu0 %v1265
        %1803 = vmatpush.bf16.msra.mxu0 %v1261
        %1804 = vmatpush.bf16.msra.mxu0 %v1257
        %1805 = vmatpush.bf16.msra.mxu0 %v1253
        %1806 = vmatpush.bf16.msra.mxu0 %v1249
        %1807 = vmatmul.bf16.gmra.mxu0 %v659
        %v1808 = vpop.f32.mrf.mxu0
        %v1809 = vadd.f32 %v635, %v1808
        %v1810 = vpop.f32.mrf.mxu0
        %v1811 = vadd.f32 %v635, %v1810
        %1812 = vdwg.mxu0
        %1813 = vmatpush.bf16.msra.mxu0 %v1309
        %1814 = vmatpush.bf16.msra.mxu0 %v1305
        %1815 = vmatpush.bf16.msra.mxu0 %v1301
        %1816 = vmatpush.bf16.msra.mxu0 %v1297
        %1817 = vmatpush.bf16.msra.mxu0 %v1293
        %1818 = vmatpush.bf16.msra.mxu0 %v1289
        %1819 = vmatpush.bf16.msra.mxu0 %v1285
        %1820 = vmatpush.bf16.msra.mxu0 %v1281
        %1821 = vmatmul.bf16.gmra.mxu0 %v660
        %v1822 = vpop.f32.mrf.mxu0
        %v1823 = vadd.f32 %v1809, %v1822
        %v1824 = vpop.f32.mrf.mxu0
        %v1825 = vadd.f32 %v1811, %v1824
        %1826 = vdwg.mxu0
        %1827 = vmatpush.bf16.msra.mxu0 %v1341
        %1828 = vmatpush.bf16.msra.mxu0 %v1337
        %1829 = vmatpush.bf16.msra.mxu0 %v1333
        %1830 = vmatpush.bf16.msra.mxu0 %v1329
        %1831 = vmatpush.bf16.msra.mxu0 %v1325
        %1832 = vmatpush.bf16.msra.mxu0 %v1321
        %1833 = vmatpush.bf16.msra.mxu0 %v1317
        %1834 = vmatpush.bf16.msra.mxu0 %v1313
        %1835 = vmatmul.bf16.gmra.mxu0 %v661
        %v1836 = vpop.f32.mrf.mxu0
        %v1837 = vadd.f32 %v1823, %v1836
        %v1838 = vpop.f32.mrf.mxu0
        %v1839 = vadd.f32 %v1825, %v1838
        %1840 = vdwg.mxu0
        %1841 = vmatpush.bf16.msra.mxu0 %v1373
        %1842 = vmatpush.bf16.msra.mxu0 %v1369
        %1843 = vmatpush.bf16.msra.mxu0 %v1365
        %1844 = vmatpush.bf16.msra.mxu0 %v1361
        %1845 = vmatpush.bf16.msra.mxu0 %v1357
        %1846 = vmatpush.bf16.msra.mxu0 %v1353
        %1847 = vmatpush.bf16.msra.mxu0 %v1349
        %1848 = vmatpush.bf16.msra.mxu0 %v1345
        %1849 = vmatmul.bf16.gmra.mxu0 %v662
        %v1850 = vpop.f32.mrf.mxu0
        %v1851 = vadd.f32 %v1837, %v1850
        %v1852 = vpop.f32.mrf.mxu0
        %v1853 = vadd.f32 %v1839, %v1852
        %1854 = vdwg.mxu0
        %1855 = vmatpush.bf16.msra.mxu0 %v1405
        %1856 = vmatpush.bf16.msra.mxu0 %v1401
        %1857 = vmatpush.bf16.msra.mxu0 %v1397
        %1858 = vmatpush.bf16.msra.mxu0 %v1393
        %1859 = vmatpush.bf16.msra.mxu0 %v1389
        %1860 = vmatpush.bf16.msra.mxu0 %v1385
        %1861 = vmatpush.bf16.msra.mxu0 %v1381
        %1862 = vmatpush.bf16.msra.mxu0 %v1377
        %1863 = vmatmul.bf16.gmra.mxu0 %v663
        %v1864 = vpop.f32.mrf.mxu0
        %v1865 = vadd.f32 %v1851, %v1864
        %v1866 = vpop.f32.mrf.mxu0
        %v1867 = vadd.f32 %v1853, %v1866
        %1868 = vdwg.mxu0
        %1869 = vmatpush.bf16.msra.mxu0 %v1437
        %1870 = vmatpush.bf16.msra.mxu0 %v1433
        %1871 = vmatpush.bf16.msra.mxu0 %v1429
        %1872 = vmatpush.bf16.msra.mxu0 %v1425
        %1873 = vmatpush.bf16.msra.mxu0 %v1421
        %1874 = vmatpush.bf16.msra.mxu0 %v1417
        %1875 = vmatpush.bf16.msra.mxu0 %v1413
        %1876 = vmatpush.bf16.msra.mxu0 %v1409
        %1877 = vmatmul.bf16.gmra.mxu0 %v664
        %v1878 = vpop.f32.mrf.mxu0
        %v1879 = vadd.f32 %v1865, %v1878
        %v1880 = vpop.f32.mrf.mxu0
        %v1881 = vadd.f32 %v1867, %v1880
        %1882 = vdwg.mxu0
        %1883 = vmatpush.bf16.msra.mxu0 %v1278
        %1884 = vmatpush.bf16.msra.mxu0 %v1274
        %1885 = vmatpush.bf16.msra.mxu0 %v1270
        %1886 = vmatpush.bf16.msra.mxu0 %v1266
        %1887 = vmatpush.bf16.msra.mxu0 %v1262
        %1888 = vmatpush.bf16.msra.mxu0 %v1258
        %1889 = vmatpush.bf16.msra.mxu0 %v1254
        %1890 = vmatpush.bf16.msra.mxu0 %v1250
        %1891 = vmatmul.bf16.gmra.mxu0 %v659
        %v1892 = vpop.f32.mrf.mxu0
        %v1893 = vadd.f32 %v636, %v1892
        %v1894 = vpop.f32.mrf.mxu0
        %v1895 = vadd.f32 %v636, %v1894
        %1896 = vdwg.mxu0
        %1897 = vmatpush.bf16.msra.mxu0 %v1310
        %1898 = vmatpush.bf16.msra.mxu0 %v1306
        %1899 = vmatpush.bf16.msra.mxu0 %v1302
        %1900 = vmatpush.bf16.msra.mxu0 %v1298
        %1901 = vmatpush.bf16.msra.mxu0 %v1294
        %1902 = vmatpush.bf16.msra.mxu0 %v1290
        %1903 = vmatpush.bf16.msra.mxu0 %v1286
        %1904 = vmatpush.bf16.msra.mxu0 %v1282
        %1905 = vmatmul.bf16.gmra.mxu0 %v660
        %v1906 = vpop.f32.mrf.mxu0
        %v1907 = vadd.f32 %v1893, %v1906
        %v1908 = vpop.f32.mrf.mxu0
        %v1909 = vadd.f32 %v1895, %v1908
        %1910 = vdwg.mxu0
        %1911 = vmatpush.bf16.msra.mxu0 %v1342
        %1912 = vmatpush.bf16.msra.mxu0 %v1338
        %1913 = vmatpush.bf16.msra.mxu0 %v1334
        %1914 = vmatpush.bf16.msra.mxu0 %v1330
        %1915 = vmatpush.bf16.msra.mxu0 %v1326
        %1916 = vmatpush.bf16.msra.mxu0 %v1322
        %1917 = vmatpush.bf16.msra.mxu0 %v1318
        %1918 = vmatpush.bf16.msra.mxu0 %v1314
        %1919 = vmatmul.bf16.gmra.mxu0 %v661
        %v1920 = vpop.f32.mrf.mxu0
        %v1921 = vadd.f32 %v1907, %v1920
        %v1922 = vpop.f32.mrf.mxu0
        %v1923 = vadd.f32 %v1909, %v1922
        %1924 = vdwg.mxu0
        %1925 = vmatpush.bf16.msra.mxu0 %v1374
        %1926 = vmatpush.bf16.msra.mxu0 %v1370
        %1927 = vmatpush.bf16.msra.mxu0 %v1366
        %1928 = vmatpush.bf16.msra.mxu0 %v1362
        %1929 = vmatpush.bf16.msra.mxu0 %v1358
        %1930 = vmatpush.bf16.msra.mxu0 %v1354
        %1931 = vmatpush.bf16.msra.mxu0 %v1350
        %1932 = vmatpush.bf16.msra.mxu0 %v1346
        %1933 = vmatmul.bf16.gmra.mxu0 %v662
        %v1934 = vpop.f32.mrf.mxu0
        %v1935 = vadd.f32 %v1921, %v1934
        %v1936 = vpop.f32.mrf.mxu0
        %v1937 = vadd.f32 %v1923, %v1936
        %1938 = vdwg.mxu0
        %1939 = vmatpush.bf16.msra.mxu0 %v1406
        %1940 = vmatpush.bf16.msra.mxu0 %v1402
        %1941 = vmatpush.bf16.msra.mxu0 %v1398
        %1942 = vmatpush.bf16.msra.mxu0 %v1394
        %1943 = vmatpush.bf16.msra.mxu0 %v1390
        %1944 = vmatpush.bf16.msra.mxu0 %v1386
        %1945 = vmatpush.bf16.msra.mxu0 %v1382
        %1946 = vmatpush.bf16.msra.mxu0 %v1378
        %1947 = vmatmul.bf16.gmra.mxu0 %v663
        %v1948 = vpop.f32.mrf.mxu0
        %v1949 = vadd.f32 %v1935, %v1948
        %v1950 = vpop.f32.mrf.mxu0
        %v1951 = vadd.f32 %v1937, %v1950
        %1952 = vdwg.mxu0
        %1953 = vmatpush.bf16.msra.mxu0 %v1438
        %1954 = vmatpush.bf16.msra.mxu0 %v1434
        %1955 = vmatpush.bf16.msra.mxu0 %v1430
        %1956 = vmatpush.bf16.msra.mxu0 %v1426
        %1957 = vmatpush.bf16.msra.mxu0 %v1422
        %1958 = vmatpush.bf16.msra.mxu0 %v1418
        %1959 = vmatpush.bf16.msra.mxu0 %v1414
        %1960 = vmatpush.bf16.msra.mxu0 %v1410
        %1961 = vmatmul.bf16.gmra.mxu0 %v664
        %v1962 = vpop.f32.mrf.mxu0
        %v1963 = vadd.f32 %v1949, %v1962
        %v1964 = vpop.f32.mrf.mxu0
        %v1965 = vadd.f32 %v1951, %v1964
        %1966 = vdwg.mxu0
        %v1967 = vmax.f32 %v1711, 0.0
        %v1968 = vmax.f32 %v1795, 0.0
        %v1969 = vmax.f32 %v1879, 0.0
        %v1970 = vmax.f32 %v1963, 0.0
        %v1971 = vmax.f32 %v1713, 0.0
        %v1972 = vmax.f32 %v1797, 0.0
        %v1973 = vmax.f32 %v1881, 0.0
        %v1974 = vmax.f32 %v1965, 0.0
        %v1975 = vpack.c.bf16 %v1971, %v1967
        %v1976 = vpack.c.bf16 %v1972, %v1968
        %v1977 = vpack.c.bf16 %v1973, %v1969
        %v1978 = vpack.c.bf16 %v1974, %v1970
        %v1979 = vld [vmem:[%s366] sm:$0xff]
        %v1980 = vld [vmem:[%s366 + $0x8] sm:$0xff]
        %v1981 = vld [vmem:[%s366 + $0x10] sm:$0xff]
        %v1982 = vld [vmem:[%s366 + $0x18] sm:$0xff]
        %v1983 = vld [vmem:[%s366 + $0x20] sm:$0xff]
        %v1984 = vld [vmem:[%s366 + $0x28] sm:$0xff]
        %v1985 = vld [vmem:[%s366 + $0x30] sm:$0xff]
        %v1986 = vld [vmem:[%s366 + $0x38] sm:$0xff]
        %v1987 = vld [vmem:[%s366 + $0x40] sm:$0xff]
        %v1988 = vld [vmem:[%s366 + $0x48] sm:$0xff]
        %v1989 = vld [vmem:[%s366 + $0x50] sm:$0xff]
        %v1990 = vld [vmem:[%s366 + $0x58] sm:$0xff]
        %v1991 = vld [vmem:[%s366 + $0x60] sm:$0xff]
        %v1992 = vld [vmem:[%s366 + $0x68] sm:$0xff]
        %v1993 = vld [vmem:[%s366 + $0x70] sm:$0xff]
        %v1994 = vld [vmem:[%s366 + $0x78] sm:$0xff]
        %v1995 = vld [vmem:[%s366 + $0x80] sm:$0xff]
        %v1996 = vld [vmem:[%s366 + $0x88] sm:$0xff]
        %v1997 = vld [vmem:[%s366 + $0x90] sm:$0xff]
        %v1998 = vld [vmem:[%s366 + $0x98] sm:$0xff]
        %v1999 = vld [vmem:[%s366 + $0xa0] sm:$0xff]
        %v2000 = vld [vmem:[%s366 + $0xa8] sm:$0xff]
        %v2001 = vld [vmem:[%s366 + $0xb0] sm:$0xff]
        %v2002 = vld [vmem:[%s366 + $0xb8] sm:$0xff]
        %v2003 = vld [vmem:[%s366 + $0xc0] sm:$0xff]
        %v2004 = vld [vmem:[%s366 + $0xc8] sm:$0xff]
        %v2005 = vld [vmem:[%s366 + $0xd0] sm:$0xff]
        %v2006 = vld [vmem:[%s366 + $0xd8] sm:$0xff]
        %v2007 = vld [vmem:[%s366 + $0xe0] sm:$0xff]
        %v2008 = vld [vmem:[%s366 + $0xe8] sm:$0xff]
        %v2009 = vld [vmem:[%s366 + $0xf0] sm:$0xff]
        %v2010 = vld [vmem:[%s366 + $0xf8] sm:$0xff]
        %v2011 = vld [vmem:[%s366 + $0x100] sm:$0xff]
        %v2012 = vld [vmem:[%s366 + $0x108] sm:$0xff]
        %v2013 = vld [vmem:[%s366 + $0x110] sm:$0xff]
        %v2014 = vld [vmem:[%s366 + $0x118] sm:$0xff]
        %v2015 = vld [vmem:[%s366 + $0x120] sm:$0xff]
        %v2016 = vld [vmem:[%s366 + $0x128] sm:$0xff]
        %v2017 = vld [vmem:[%s366 + $0x130] sm:$0xff]
        %v2018 = vld [vmem:[%s366 + $0x138] sm:$0xff]
        %v2019 = vld [vmem:[%s366 + $0x140] sm:$0xff]
        %v2020 = vld [vmem:[%s366 + $0x148] sm:$0xff]
        %v2021 = vld [vmem:[%s366 + $0x150] sm:$0xff]
        %v2022 = vld [vmem:[%s366 + $0x158] sm:$0xff]
        %v2023 = vld [vmem:[%s366 + $0x160] sm:$0xff]
        %v2024 = vld [vmem:[%s366 + $0x168] sm:$0xff]
        %v2025 = vld [vmem:[%s366 + $0x170] sm:$0xff]
        %v2026 = vld [vmem:[%s366 + $0x178] sm:$0xff]
        %v2027 = vld [vmem:[%s366 + $0x180] sm:$0xff]
        %v2028 = vld [vmem:[%s366 + $0x188] sm:$0xff]
        %v2029 = vld [vmem:[%s366 + $0x190] sm:$0xff]
        %v2030 = vld [vmem:[%s366 + $0x198] sm:$0xff]
        %v2031 = vld [vmem:[%s366 + $0x1a0] sm:$0xff]
        %v2032 = vld [vmem:[%s366 + $0x1a8] sm:$0xff]
        %v2033 = vld [vmem:[%s366 + $0x1b0] sm:$0xff]
        %v2034 = vld [vmem:[%s366 + $0x1b8] sm:$0xff]
        %v2035 = vld [vmem:[%s366 + $0x1c0] sm:$0xff]
        %v2036 = vld [vmem:[%s366 + $0x1c8] sm:$0xff]
        %v2037 = vld [vmem:[%s366 + $0x1d0] sm:$0xff]
        %v2038 = vld [vmem:[%s366 + $0x1d8] sm:$0xff]
        %v2039 = vld [vmem:[%s366 + $0x1e0] sm:$0xff]
        %v2040 = vld [vmem:[%s366 + $0x1e8] sm:$0xff]
        %v2041 = vld [vmem:[%s366 + $0x1f0] sm:$0xff]
        %v2042 = vld [vmem:[%s366 + $0x1f8] sm:$0xff]
        %v2043 = vld [vmem:[%s366 + $0x200] sm:$0xff]
        %v2044 = vld [vmem:[%s366 + $0x208] sm:$0xff]
        %v2045 = vld [vmem:[%s366 + $0x210] sm:$0xff]
        %v2046 = vld [vmem:[%s366 + $0x218] sm:$0xff]
        %v2047 = vld [vmem:[%s366 + $0x220] sm:$0xff]
        %v2048 = vld [vmem:[%s366 + $0x228] sm:$0xff]
        %v2049 = vld [vmem:[%s366 + $0x230] sm:$0xff]
        %v2050 = vld [vmem:[%s366 + $0x238] sm:$0xff]
        %v2051 = vld [vmem:[%s366 + $0x240] sm:$0xff]
        %v2052 = vld [vmem:[%s366 + $0x248] sm:$0xff]
        %v2053 = vld [vmem:[%s366 + $0x250] sm:$0xff]
        %v2054 = vld [vmem:[%s366 + $0x258] sm:$0xff]
        %v2055 = vld [vmem:[%s366 + $0x260] sm:$0xff]
        %v2056 = vld [vmem:[%s366 + $0x268] sm:$0xff]
        %v2057 = vld [vmem:[%s366 + $0x270] sm:$0xff]
        %v2058 = vld [vmem:[%s366 + $0x278] sm:$0xff]
        %v2059 = vld [vmem:[%s366 + $0x280] sm:$0xff]
        %v2060 = vld [vmem:[%s366 + $0x288] sm:$0xff]
        %v2061 = vld [vmem:[%s366 + $0x290] sm:$0xff]
        %v2062 = vld [vmem:[%s366 + $0x298] sm:$0xff]
        %v2063 = vld [vmem:[%s366 + $0x2a0] sm:$0xff]
        %v2064 = vld [vmem:[%s366 + $0x2a8] sm:$0xff]
        %v2065 = vld [vmem:[%s366 + $0x2b0] sm:$0xff]
        %v2066 = vld [vmem:[%s366 + $0x2b8] sm:$0xff]
        %v2067 = vld [vmem:[%s366 + $0x2c0] sm:$0xff]
        %v2068 = vld [vmem:[%s366 + $0x2c8] sm:$0xff]
        %v2069 = vld [vmem:[%s366 + $0x2d0] sm:$0xff]
        %v2070 = vld [vmem:[%s366 + $0x2d8] sm:$0xff]
        %v2071 = vld [vmem:[%s366 + $0x2e0] sm:$0xff]
        %v2072 = vld [vmem:[%s366 + $0x2e8] sm:$0xff]
        %v2073 = vld [vmem:[%s366 + $0x2f0] sm:$0xff]
        %v2074 = vld [vmem:[%s366 + $0x2f8] sm:$0xff]
        %v2075 = vld [vmem:[%s366 + $0x300] sm:$0xff]
        %v2076 = vld [vmem:[%s366 + $0x308] sm:$0xff]
        %v2077 = vld [vmem:[%s366 + $0x310] sm:$0xff]
        %v2078 = vld [vmem:[%s366 + $0x318] sm:$0xff]
        %v2079 = vld [vmem:[%s366 + $0x320] sm:$0xff]
        %v2080 = vld [vmem:[%s366 + $0x328] sm:$0xff]
        %v2081 = vld [vmem:[%s366 + $0x330] sm:$0xff]
        %v2082 = vld [vmem:[%s366 + $0x338] sm:$0xff]
        %v2083 = vld [vmem:[%s366 + $0x340] sm:$0xff]
        %v2084 = vld [vmem:[%s366 + $0x348] sm:$0xff]
        %v2085 = vld [vmem:[%s366 + $0x350] sm:$0xff]
        %v2086 = vld [vmem:[%s366 + $0x358] sm:$0xff]
        %v2087 = vld [vmem:[%s366 + $0x360] sm:$0xff]
        %v2088 = vld [vmem:[%s366 + $0x368] sm:$0xff]
        %v2089 = vld [vmem:[%s366 + $0x370] sm:$0xff]
        %v2090 = vld [vmem:[%s366 + $0x378] sm:$0xff]
        %v2091 = vld [vmem:[%s366 + $0x380] sm:$0xff]
        %v2092 = vld [vmem:[%s366 + $0x388] sm:$0xff]
        %v2093 = vld [vmem:[%s366 + $0x390] sm:$0xff]
        %v2094 = vld [vmem:[%s366 + $0x398] sm:$0xff]
        %v2095 = vld [vmem:[%s366 + $0x3a0] sm:$0xff]
        %v2096 = vld [vmem:[%s366 + $0x3a8] sm:$0xff]
        %v2097 = vld [vmem:[%s366 + $0x3b0] sm:$0xff]
        %v2098 = vld [vmem:[%s366 + $0x3b8] sm:$0xff]
        %v2099 = vld [vmem:[%s366 + $0x3c0] sm:$0xff]
        %v2100 = vld [vmem:[%s366 + $0x3c8] sm:$0xff]
        %v2101 = vld [vmem:[%s366 + $0x3d0] sm:$0xff]
        %v2102 = vld [vmem:[%s366 + $0x3d8] sm:$0xff]
        %v2103 = vld [vmem:[%s366 + $0x3e0] sm:$0xff]
        %v2104 = vld [vmem:[%s366 + $0x3e8] sm:$0xff]
        %v2105 = vld [vmem:[%s366 + $0x3f0] sm:$0xff]
        %v2106 = vld [vmem:[%s366 + $0x3f8] sm:$0xff]
        %v2107 = vld [vmem:[%s366 + $0x400] sm:$0xff]
        %v2108 = vld [vmem:[%s366 + $0x408] sm:$0xff]
        %v2109 = vld [vmem:[%s366 + $0x410] sm:$0xff]
        %v2110 = vld [vmem:[%s366 + $0x418] sm:$0xff]
        %v2111 = vld [vmem:[%s366 + $0x420] sm:$0xff]
        %v2112 = vld [vmem:[%s366 + $0x428] sm:$0xff]
        %v2113 = vld [vmem:[%s366 + $0x430] sm:$0xff]
        %v2114 = vld [vmem:[%s366 + $0x438] sm:$0xff]
        %v2115 = vld [vmem:[%s366 + $0x440] sm:$0xff]
        %v2116 = vld [vmem:[%s366 + $0x448] sm:$0xff]
        %v2117 = vld [vmem:[%s366 + $0x450] sm:$0xff]
        %v2118 = vld [vmem:[%s366 + $0x458] sm:$0xff]
        %v2119 = vld [vmem:[%s366 + $0x460] sm:$0xff]
        %v2120 = vld [vmem:[%s366 + $0x468] sm:$0xff]
        %v2121 = vld [vmem:[%s366 + $0x470] sm:$0xff]
        %v2122 = vld [vmem:[%s366 + $0x478] sm:$0xff]
        %v2123 = vld [vmem:[%s366 + $0x480] sm:$0xff]
        %v2124 = vld [vmem:[%s366 + $0x488] sm:$0xff]
        %v2125 = vld [vmem:[%s366 + $0x490] sm:$0xff]
        %v2126 = vld [vmem:[%s366 + $0x498] sm:$0xff]
        %v2127 = vld [vmem:[%s366 + $0x4a0] sm:$0xff]
        %v2128 = vld [vmem:[%s366 + $0x4a8] sm:$0xff]
        %v2129 = vld [vmem:[%s366 + $0x4b0] sm:$0xff]
        %v2130 = vld [vmem:[%s366 + $0x4b8] sm:$0xff]
        %v2131 = vld [vmem:[%s366 + $0x4c0] sm:$0xff]
        %v2132 = vld [vmem:[%s366 + $0x4c8] sm:$0xff]
        %v2133 = vld [vmem:[%s366 + $0x4d0] sm:$0xff]
        %v2134 = vld [vmem:[%s366 + $0x4d8] sm:$0xff]
        %v2135 = vld [vmem:[%s366 + $0x4e0] sm:$0xff]
        %v2136 = vld [vmem:[%s366 + $0x4e8] sm:$0xff]
        %v2137 = vld [vmem:[%s366 + $0x4f0] sm:$0xff]
        %v2138 = vld [vmem:[%s366 + $0x4f8] sm:$0xff]
        %v2139 = vld [vmem:[%s366 + $0x500] sm:$0xff]
        %v2140 = vld [vmem:[%s366 + $0x508] sm:$0xff]
        %v2141 = vld [vmem:[%s366 + $0x510] sm:$0xff]
        %v2142 = vld [vmem:[%s366 + $0x518] sm:$0xff]
        %v2143 = vld [vmem:[%s366 + $0x520] sm:$0xff]
        %v2144 = vld [vmem:[%s366 + $0x528] sm:$0xff]
        %v2145 = vld [vmem:[%s366 + $0x530] sm:$0xff]
        %v2146 = vld [vmem:[%s366 + $0x538] sm:$0xff]
        %v2147 = vld [vmem:[%s366 + $0x540] sm:$0xff]
        %v2148 = vld [vmem:[%s366 + $0x548] sm:$0xff]
        %v2149 = vld [vmem:[%s366 + $0x550] sm:$0xff]
        %v2150 = vld [vmem:[%s366 + $0x558] sm:$0xff]
        %v2151 = vld [vmem:[%s366 + $0x560] sm:$0xff]
        %v2152 = vld [vmem:[%s366 + $0x568] sm:$0xff]
        %v2153 = vld [vmem:[%s366 + $0x570] sm:$0xff]
        %v2154 = vld [vmem:[%s366 + $0x578] sm:$0xff]
        %v2155 = vld [vmem:[%s366 + $0x580] sm:$0xff]
        %v2156 = vld [vmem:[%s366 + $0x588] sm:$0xff]
        %v2157 = vld [vmem:[%s366 + $0x590] sm:$0xff]
        %v2158 = vld [vmem:[%s366 + $0x598] sm:$0xff]
        %v2159 = vld [vmem:[%s366 + $0x5a0] sm:$0xff]
        %v2160 = vld [vmem:[%s366 + $0x5a8] sm:$0xff]
        %v2161 = vld [vmem:[%s366 + $0x5b0] sm:$0xff]
        %v2162 = vld [vmem:[%s366 + $0x5b8] sm:$0xff]
        %v2163 = vld [vmem:[%s366 + $0x5c0] sm:$0xff]
        %v2164 = vld [vmem:[%s366 + $0x5c8] sm:$0xff]
        %v2165 = vld [vmem:[%s366 + $0x5d0] sm:$0xff]
        %v2166 = vld [vmem:[%s366 + $0x5d8] sm:$0xff]
        %v2167 = vld [vmem:[%s366 + $0x5e0] sm:$0xff]
        %v2168 = vld [vmem:[%s366 + $0x5e8] sm:$0xff]
        %v2169 = vld [vmem:[%s366 + $0x5f0] sm:$0xff]
        %v2170 = vld [vmem:[%s366 + $0x5f8] sm:$0xff]
        %v2171 = vld [vmem:[%s366 + $0x600] sm:$0xff]
        %v2172 = vld [vmem:[%s366 + $0x608] sm:$0xff]
        %v2173 = vld [vmem:[%s366 + $0x610] sm:$0xff]
        %v2174 = vld [vmem:[%s366 + $0x618] sm:$0xff]
        %v2175 = vld [vmem:[%s366 + $0x620] sm:$0xff]
        %v2176 = vld [vmem:[%s366 + $0x628] sm:$0xff]
        %v2177 = vld [vmem:[%s366 + $0x630] sm:$0xff]
        %v2178 = vld [vmem:[%s366 + $0x638] sm:$0xff]
        %v2179 = vld [vmem:[%s366 + $0x640] sm:$0xff]
        %v2180 = vld [vmem:[%s366 + $0x648] sm:$0xff]
        %v2181 = vld [vmem:[%s366 + $0x650] sm:$0xff]
        %v2182 = vld [vmem:[%s366 + $0x658] sm:$0xff]
        %v2183 = vld [vmem:[%s366 + $0x660] sm:$0xff]
        %v2184 = vld [vmem:[%s366 + $0x668] sm:$0xff]
        %v2185 = vld [vmem:[%s366 + $0x670] sm:$0xff]
        %v2186 = vld [vmem:[%s366 + $0x678] sm:$0xff]
        %v2187 = vld [vmem:[%s366 + $0x680] sm:$0xff]
        %v2188 = vld [vmem:[%s366 + $0x688] sm:$0xff]
        %v2189 = vld [vmem:[%s366 + $0x690] sm:$0xff]
        %v2190 = vld [vmem:[%s366 + $0x698] sm:$0xff]
        %v2191 = vld [vmem:[%s366 + $0x6a0] sm:$0xff]
        %v2192 = vld [vmem:[%s366 + $0x6a8] sm:$0xff]
        %v2193 = vld [vmem:[%s366 + $0x6b0] sm:$0xff]
        %v2194 = vld [vmem:[%s366 + $0x6b8] sm:$0xff]
        %v2195 = vld [vmem:[%s366 + $0x6c0] sm:$0xff]
        %v2196 = vld [vmem:[%s366 + $0x6c8] sm:$0xff]
        %v2197 = vld [vmem:[%s366 + $0x6d0] sm:$0xff]
        %v2198 = vld [vmem:[%s366 + $0x6d8] sm:$0xff]
        %v2199 = vld [vmem:[%s366 + $0x6e0] sm:$0xff]
        %v2200 = vld [vmem:[%s366 + $0x6e8] sm:$0xff]
        %v2201 = vld [vmem:[%s366 + $0x6f0] sm:$0xff]
        %v2202 = vld [vmem:[%s366 + $0x6f8] sm:$0xff]
        %v2203 = vld [vmem:[%s366 + $0x700] sm:$0xff]
        %v2204 = vld [vmem:[%s366 + $0x708] sm:$0xff]
        %v2205 = vld [vmem:[%s366 + $0x710] sm:$0xff]
        %v2206 = vld [vmem:[%s366 + $0x718] sm:$0xff]
        %v2207 = vld [vmem:[%s366 + $0x720] sm:$0xff]
        %v2208 = vld [vmem:[%s366 + $0x728] sm:$0xff]
        %v2209 = vld [vmem:[%s366 + $0x730] sm:$0xff]
        %v2210 = vld [vmem:[%s366 + $0x738] sm:$0xff]
        %v2211 = vld [vmem:[%s366 + $0x740] sm:$0xff]
        %v2212 = vld [vmem:[%s366 + $0x748] sm:$0xff]
        %v2213 = vld [vmem:[%s366 + $0x750] sm:$0xff]
        %v2214 = vld [vmem:[%s366 + $0x758] sm:$0xff]
        %v2215 = vld [vmem:[%s366 + $0x760] sm:$0xff]
        %v2216 = vld [vmem:[%s366 + $0x768] sm:$0xff]
        %v2217 = vld [vmem:[%s366 + $0x770] sm:$0xff]
        %v2218 = vld [vmem:[%s366 + $0x778] sm:$0xff]
        %v2219 = vld [vmem:[%s366 + $0x780] sm:$0xff]
        %v2220 = vld [vmem:[%s366 + $0x788] sm:$0xff]
        %v2221 = vld [vmem:[%s366 + $0x790] sm:$0xff]
        %v2222 = vld [vmem:[%s366 + $0x798] sm:$0xff]
        %v2223 = vld [vmem:[%s366 + $0x7a0] sm:$0xff]
        %v2224 = vld [vmem:[%s366 + $0x7a8] sm:$0xff]
        %v2225 = vld [vmem:[%s366 + $0x7b0] sm:$0xff]
        %v2226 = vld [vmem:[%s366 + $0x7b8] sm:$0xff]
        %v2227 = vld [vmem:[%s366 + $0x7c0] sm:$0xff]
        %v2228 = vld [vmem:[%s366 + $0x7c8] sm:$0xff]
        %v2229 = vld [vmem:[%s366 + $0x7d0] sm:$0xff]
        %v2230 = vld [vmem:[%s366 + $0x7d8] sm:$0xff]
        %v2231 = vld [vmem:[%s366 + $0x7e0] sm:$0xff]
        %v2232 = vld [vmem:[%s366 + $0x7e8] sm:$0xff]
        %v2233 = vld [vmem:[%s366 + $0x7f0] sm:$0xff]
        %v2234 = vld [vmem:[%s366 + $0x7f8] sm:$0xff]
        %v2235 = vld [vmem:[%s366 + $0x800] sm:$0xff]
        %v2236 = vld [vmem:[%s366 + $0x808] sm:$0xff]
        %v2237 = vld [vmem:[%s366 + $0x810] sm:$0xff]
        %v2238 = vld [vmem:[%s366 + $0x818] sm:$0xff]
        %v2239 = vld [vmem:[%s366 + $0x820] sm:$0xff]
        %v2240 = vld [vmem:[%s366 + $0x828] sm:$0xff]
        %v2241 = vld [vmem:[%s366 + $0x830] sm:$0xff]
        %v2242 = vld [vmem:[%s366 + $0x838] sm:$0xff]
        %v2243 = vld [vmem:[%s366 + $0x840] sm:$0xff]
        %v2244 = vld [vmem:[%s366 + $0x848] sm:$0xff]
        %v2245 = vld [vmem:[%s366 + $0x850] sm:$0xff]
        %v2246 = vld [vmem:[%s366 + $0x858] sm:$0xff]
        %v2247 = vld [vmem:[%s366 + $0x860] sm:$0xff]
        %v2248 = vld [vmem:[%s366 + $0x868] sm:$0xff]
        %v2249 = vld [vmem:[%s366 + $0x870] sm:$0xff]
        %v2250 = vld [vmem:[%s366 + $0x878] sm:$0xff]
        %v2251 = vld [vmem:[%s366 + $0x880] sm:$0xff]
        %v2252 = vld [vmem:[%s366 + $0x888] sm:$0xff]
        %v2253 = vld [vmem:[%s366 + $0x890] sm:$0xff]
        %v2254 = vld [vmem:[%s366 + $0x898] sm:$0xff]
        %v2255 = vld [vmem:[%s366 + $0x8a0] sm:$0xff]
        %v2256 = vld [vmem:[%s366 + $0x8a8] sm:$0xff]
        %v2257 = vld [vmem:[%s366 + $0x8b0] sm:$0xff]
        %v2258 = vld [vmem:[%s366 + $0x8b8] sm:$0xff]
        %v2259 = vld [vmem:[%s366 + $0x8c0] sm:$0xff]
        %v2260 = vld [vmem:[%s366 + $0x8c8] sm:$0xff]
        %v2261 = vld [vmem:[%s366 + $0x8d0] sm:$0xff]
        %v2262 = vld [vmem:[%s366 + $0x8d8] sm:$0xff]
        %v2263 = vld [vmem:[%s366 + $0x8e0] sm:$0xff]
        %v2264 = vld [vmem:[%s366 + $0x8e8] sm:$0xff]
        %v2265 = vld [vmem:[%s366 + $0x8f0] sm:$0xff]
        %v2266 = vld [vmem:[%s366 + $0x8f8] sm:$0xff]
        %v2267 = vld [vmem:[%s366 + $0x900] sm:$0xff]
        %v2268 = vld [vmem:[%s366 + $0x908] sm:$0xff]
        %v2269 = vld [vmem:[%s366 + $0x910] sm:$0xff]
        %v2270 = vld [vmem:[%s366 + $0x918] sm:$0xff]
        %v2271 = vld [vmem:[%s366 + $0x920] sm:$0xff]
        %v2272 = vld [vmem:[%s366 + $0x928] sm:$0xff]
        %v2273 = vld [vmem:[%s366 + $0x930] sm:$0xff]
        %v2274 = vld [vmem:[%s366 + $0x938] sm:$0xff]
        %v2275 = vld [vmem:[%s366 + $0x940] sm:$0xff]
        %v2276 = vld [vmem:[%s366 + $0x948] sm:$0xff]
        %v2277 = vld [vmem:[%s366 + $0x950] sm:$0xff]
        %v2278 = vld [vmem:[%s366 + $0x958] sm:$0xff]
        %v2279 = vld [vmem:[%s366 + $0x960] sm:$0xff]
        %v2280 = vld [vmem:[%s366 + $0x968] sm:$0xff]
        %v2281 = vld [vmem:[%s366 + $0x970] sm:$0xff]
        %v2282 = vld [vmem:[%s366 + $0x978] sm:$0xff]
        %v2283 = vld [vmem:[%s366 + $0x980] sm:$0xff]
        %v2284 = vld [vmem:[%s366 + $0x988] sm:$0xff]
        %v2285 = vld [vmem:[%s366 + $0x990] sm:$0xff]
        %v2286 = vld [vmem:[%s366 + $0x998] sm:$0xff]
        %v2287 = vld [vmem:[%s366 + $0x9a0] sm:$0xff]
        %v2288 = vld [vmem:[%s366 + $0x9a8] sm:$0xff]
        %v2289 = vld [vmem:[%s366 + $0x9b0] sm:$0xff]
        %v2290 = vld [vmem:[%s366 + $0x9b8] sm:$0xff]
        %v2291 = vld [vmem:[%s366 + $0x9c0] sm:$0xff]
        %v2292 = vld [vmem:[%s366 + $0x9c8] sm:$0xff]
        %v2293 = vld [vmem:[%s366 + $0x9d0] sm:$0xff]
        %v2294 = vld [vmem:[%s366 + $0x9d8] sm:$0xff]
        %v2295 = vld [vmem:[%s366 + $0x9e0] sm:$0xff]
        %v2296 = vld [vmem:[%s366 + $0x9e8] sm:$0xff]
        %v2297 = vld [vmem:[%s366 + $0x9f0] sm:$0xff]
        %v2298 = vld [vmem:[%s366 + $0x9f8] sm:$0xff]
        %v2299 = vld [vmem:[%s366 + $0xa00] sm:$0xff]
        %v2300 = vld [vmem:[%s366 + $0xa08] sm:$0xff]
        %v2301 = vld [vmem:[%s366 + $0xa10] sm:$0xff]
        %v2302 = vld [vmem:[%s366 + $0xa18] sm:$0xff]
        %v2303 = vld [vmem:[%s366 + $0xa20] sm:$0xff]
        %v2304 = vld [vmem:[%s366 + $0xa28] sm:$0xff]
        %v2305 = vld [vmem:[%s366 + $0xa30] sm:$0xff]
        %v2306 = vld [vmem:[%s366 + $0xa38] sm:$0xff]
        %v2307 = vld [vmem:[%s366 + $0xa40] sm:$0xff]
        %v2308 = vld [vmem:[%s366 + $0xa48] sm:$0xff]
        %v2309 = vld [vmem:[%s366 + $0xa50] sm:$0xff]
        %v2310 = vld [vmem:[%s366 + $0xa58] sm:$0xff]
        %v2311 = vld [vmem:[%s366 + $0xa60] sm:$0xff]
        %v2312 = vld [vmem:[%s366 + $0xa68] sm:$0xff]
        %v2313 = vld [vmem:[%s366 + $0xa70] sm:$0xff]
        %v2314 = vld [vmem:[%s366 + $0xa78] sm:$0xff]
        %v2315 = vld [vmem:[%s366 + $0xa80] sm:$0xff]
        %v2316 = vld [vmem:[%s366 + $0xa88] sm:$0xff]
        %v2317 = vld [vmem:[%s366 + $0xa90] sm:$0xff]
        %v2318 = vld [vmem:[%s366 + $0xa98] sm:$0xff]
        %v2319 = vld [vmem:[%s366 + $0xaa0] sm:$0xff]
        %v2320 = vld [vmem:[%s366 + $0xaa8] sm:$0xff]
        %v2321 = vld [vmem:[%s366 + $0xab0] sm:$0xff]
        %v2322 = vld [vmem:[%s366 + $0xab8] sm:$0xff]
        %v2323 = vld [vmem:[%s366 + $0xac0] sm:$0xff]
        %v2324 = vld [vmem:[%s366 + $0xac8] sm:$0xff]
        %v2325 = vld [vmem:[%s366 + $0xad0] sm:$0xff]
        %v2326 = vld [vmem:[%s366 + $0xad8] sm:$0xff]
        %v2327 = vld [vmem:[%s366 + $0xae0] sm:$0xff]
        %v2328 = vld [vmem:[%s366 + $0xae8] sm:$0xff]
        %v2329 = vld [vmem:[%s366 + $0xaf0] sm:$0xff]
        %v2330 = vld [vmem:[%s366 + $0xaf8] sm:$0xff]
        %v2331 = vld [vmem:[%s366 + $0xb00] sm:$0xff]
        %v2332 = vld [vmem:[%s366 + $0xb08] sm:$0xff]
        %v2333 = vld [vmem:[%s366 + $0xb10] sm:$0xff]
        %v2334 = vld [vmem:[%s366 + $0xb18] sm:$0xff]
        %v2335 = vld [vmem:[%s366 + $0xb20] sm:$0xff]
        %v2336 = vld [vmem:[%s366 + $0xb28] sm:$0xff]
        %v2337 = vld [vmem:[%s366 + $0xb30] sm:$0xff]
        %v2338 = vld [vmem:[%s366 + $0xb38] sm:$0xff]
        %v2339 = vld [vmem:[%s366 + $0xb40] sm:$0xff]
        %v2340 = vld [vmem:[%s366 + $0xb48] sm:$0xff]
        %v2341 = vld [vmem:[%s366 + $0xb50] sm:$0xff]
        %v2342 = vld [vmem:[%s366 + $0xb58] sm:$0xff]
        %v2343 = vld [vmem:[%s366 + $0xb60] sm:$0xff]
        %v2344 = vld [vmem:[%s366 + $0xb68] sm:$0xff]
        %v2345 = vld [vmem:[%s366 + $0xb70] sm:$0xff]
        %v2346 = vld [vmem:[%s366 + $0xb78] sm:$0xff]
        %v2347 = vld [vmem:[%s366 + $0xb80] sm:$0xff]
        %v2348 = vld [vmem:[%s366 + $0xb88] sm:$0xff]
        %v2349 = vld [vmem:[%s366 + $0xb90] sm:$0xff]
        %v2350 = vld [vmem:[%s366 + $0xb98] sm:$0xff]
        %v2351 = vld [vmem:[%s366 + $0xba0] sm:$0xff]
        %v2352 = vld [vmem:[%s366 + $0xba8] sm:$0xff]
        %v2353 = vld [vmem:[%s366 + $0xbb0] sm:$0xff]
        %v2354 = vld [vmem:[%s366 + $0xbb8] sm:$0xff]
        %v2355 = vld [vmem:[%s366 + $0xbc0] sm:$0xff]
        %v2356 = vld [vmem:[%s366 + $0xbc8] sm:$0xff]
        %v2357 = vld [vmem:[%s366 + $0xbd0] sm:$0xff]
        %v2358 = vld [vmem:[%s366 + $0xbd8] sm:$0xff]
        %v2359 = vld [vmem:[%s366 + $0xbe0] sm:$0xff]
        %v2360 = vld [vmem:[%s366 + $0xbe8] sm:$0xff]
        %v2361 = vld [vmem:[%s366 + $0xbf0] sm:$0xff]
        %v2362 = vld [vmem:[%s366 + $0xbf8] sm:$0xff]
        %v2363 = vld [vmem:[%s366 + $0xc00] sm:$0xff]
        %v2364 = vld [vmem:[%s366 + $0xc08] sm:$0xff]
        %v2365 = vld [vmem:[%s366 + $0xc10] sm:$0xff]
        %v2366 = vld [vmem:[%s366 + $0xc18] sm:$0xff]
        %v2367 = vld [vmem:[%s366 + $0xc20] sm:$0xff]
        %v2368 = vld [vmem:[%s366 + $0xc28] sm:$0xff]
        %v2369 = vld [vmem:[%s366 + $0xc30] sm:$0xff]
        %v2370 = vld [vmem:[%s366 + $0xc38] sm:$0xff]
        %v2371 = vld [vmem:[%s366 + $0xc40] sm:$0xff]
        %v2372 = vld [vmem:[%s366 + $0xc48] sm:$0xff]
        %v2373 = vld [vmem:[%s366 + $0xc50] sm:$0xff]
        %v2374 = vld [vmem:[%s366 + $0xc58] sm:$0xff]
        %v2375 = vld [vmem:[%s366 + $0xc60] sm:$0xff]
        %v2376 = vld [vmem:[%s366 + $0xc68] sm:$0xff]
        %v2377 = vld [vmem:[%s366 + $0xc70] sm:$0xff]
        %v2378 = vld [vmem:[%s366 + $0xc78] sm:$0xff]
        %v2379 = vld [vmem:[%s366 + $0xc80] sm:$0xff]
        %v2380 = vld [vmem:[%s366 + $0xc88] sm:$0xff]
        %v2381 = vld [vmem:[%s366 + $0xc90] sm:$0xff]
        %v2382 = vld [vmem:[%s366 + $0xc98] sm:$0xff]
        %v2383 = vld [vmem:[%s366 + $0xca0] sm:$0xff]
        %v2384 = vld [vmem:[%s366 + $0xca8] sm:$0xff]
        %v2385 = vld [vmem:[%s366 + $0xcb0] sm:$0xff]
        %v2386 = vld [vmem:[%s366 + $0xcb8] sm:$0xff]
        %v2387 = vld [vmem:[%s366 + $0xcc0] sm:$0xff]
        %v2388 = vld [vmem:[%s366 + $0xcc8] sm:$0xff]
        %v2389 = vld [vmem:[%s366 + $0xcd0] sm:$0xff]
        %v2390 = vld [vmem:[%s366 + $0xcd8] sm:$0xff]
        %v2391 = vld [vmem:[%s366 + $0xce0] sm:$0xff]
        %v2392 = vld [vmem:[%s366 + $0xce8] sm:$0xff]
        %v2393 = vld [vmem:[%s366 + $0xcf0] sm:$0xff]
        %v2394 = vld [vmem:[%s366 + $0xcf8] sm:$0xff]
        %v2395 = vld [vmem:[%s366 + $0xd00] sm:$0xff]
        %v2396 = vld [vmem:[%s366 + $0xd08] sm:$0xff]
        %v2397 = vld [vmem:[%s366 + $0xd10] sm:$0xff]
        %v2398 = vld [vmem:[%s366 + $0xd18] sm:$0xff]
        %v2399 = vld [vmem:[%s366 + $0xd20] sm:$0xff]
        %v2400 = vld [vmem:[%s366 + $0xd28] sm:$0xff]
        %v2401 = vld [vmem:[%s366 + $0xd30] sm:$0xff]
        %v2402 = vld [vmem:[%s366 + $0xd38] sm:$0xff]
        %v2403 = vld [vmem:[%s366 + $0xd40] sm:$0xff]
        %v2404 = vld [vmem:[%s366 + $0xd48] sm:$0xff]
        %v2405 = vld [vmem:[%s366 + $0xd50] sm:$0xff]
        %v2406 = vld [vmem:[%s366 + $0xd58] sm:$0xff]
        %v2407 = vld [vmem:[%s366 + $0xd60] sm:$0xff]
        %v2408 = vld [vmem:[%s366 + $0xd68] sm:$0xff]
        %v2409 = vld [vmem:[%s366 + $0xd70] sm:$0xff]
        %v2410 = vld [vmem:[%s366 + $0xd78] sm:$0xff]
        %v2411 = vld [vmem:[%s366 + $0xd80] sm:$0xff]
        %v2412 = vld [vmem:[%s366 + $0xd88] sm:$0xff]
        %v2413 = vld [vmem:[%s366 + $0xd90] sm:$0xff]
        %v2414 = vld [vmem:[%s366 + $0xd98] sm:$0xff]
        %v2415 = vld [vmem:[%s366 + $0xda0] sm:$0xff]
        %v2416 = vld [vmem:[%s366 + $0xda8] sm:$0xff]
        %v2417 = vld [vmem:[%s366 + $0xdb0] sm:$0xff]
        %v2418 = vld [vmem:[%s366 + $0xdb8] sm:$0xff]
        %v2419 = vld [vmem:[%s366 + $0xdc0] sm:$0xff]
        %v2420 = vld [vmem:[%s366 + $0xdc8] sm:$0xff]
        %v2421 = vld [vmem:[%s366 + $0xdd0] sm:$0xff]
        %v2422 = vld [vmem:[%s366 + $0xdd8] sm:$0xff]
        %v2423 = vld [vmem:[%s366 + $0xde0] sm:$0xff]
        %v2424 = vld [vmem:[%s366 + $0xde8] sm:$0xff]
        %v2425 = vld [vmem:[%s366 + $0xdf0] sm:$0xff]
        %v2426 = vld [vmem:[%s366 + $0xdf8] sm:$0xff]
        %v2427 = vld [vmem:[%s366 + $0xe00] sm:$0xff]
        %v2428 = vld [vmem:[%s366 + $0xe08] sm:$0xff]
        %v2429 = vld [vmem:[%s366 + $0xe10] sm:$0xff]
        %v2430 = vld [vmem:[%s366 + $0xe18] sm:$0xff]
        %v2431 = vld [vmem:[%s366 + $0xe20] sm:$0xff]
        %v2432 = vld [vmem:[%s366 + $0xe28] sm:$0xff]
        %v2433 = vld [vmem:[%s366 + $0xe30] sm:$0xff]
        %v2434 = vld [vmem:[%s366 + $0xe38] sm:$0xff]
        %v2435 = vld [vmem:[%s366 + $0xe40] sm:$0xff]
        %v2436 = vld [vmem:[%s366 + $0xe48] sm:$0xff]
        %v2437 = vld [vmem:[%s366 + $0xe50] sm:$0xff]
        %v2438 = vld [vmem:[%s366 + $0xe58] sm:$0xff]
        %v2439 = vld [vmem:[%s366 + $0xe60] sm:$0xff]
        %v2440 = vld [vmem:[%s366 + $0xe68] sm:$0xff]
        %v2441 = vld [vmem:[%s366 + $0xe70] sm:$0xff]
        %v2442 = vld [vmem:[%s366 + $0xe78] sm:$0xff]
        %v2443 = vld [vmem:[%s366 + $0xe80] sm:$0xff]
        %v2444 = vld [vmem:[%s366 + $0xe88] sm:$0xff]
        %v2445 = vld [vmem:[%s366 + $0xe90] sm:$0xff]
        %v2446 = vld [vmem:[%s366 + $0xe98] sm:$0xff]
        %v2447 = vld [vmem:[%s366 + $0xea0] sm:$0xff]
        %v2448 = vld [vmem:[%s366 + $0xea8] sm:$0xff]
        %v2449 = vld [vmem:[%s366 + $0xeb0] sm:$0xff]
        %v2450 = vld [vmem:[%s366 + $0xeb8] sm:$0xff]
        %v2451 = vld [vmem:[%s366 + $0xec0] sm:$0xff]
        %v2452 = vld [vmem:[%s366 + $0xec8] sm:$0xff]
        %v2453 = vld [vmem:[%s366 + $0xed0] sm:$0xff]
        %v2454 = vld [vmem:[%s366 + $0xed8] sm:$0xff]
        %v2455 = vld [vmem:[%s366 + $0xee0] sm:$0xff]
        %v2456 = vld [vmem:[%s366 + $0xee8] sm:$0xff]
        %v2457 = vld [vmem:[%s366 + $0xef0] sm:$0xff]
        %v2458 = vld [vmem:[%s366 + $0xef8] sm:$0xff]
        %v2459 = vld [vmem:[%s366 + $0xf00] sm:$0xff]
        %v2460 = vld [vmem:[%s366 + $0xf08] sm:$0xff]
        %v2461 = vld [vmem:[%s366 + $0xf10] sm:$0xff]
        %v2462 = vld [vmem:[%s366 + $0xf18] sm:$0xff]
        %v2463 = vld [vmem:[%s366 + $0xf20] sm:$0xff]
        %v2464 = vld [vmem:[%s366 + $0xf28] sm:$0xff]
        %v2465 = vld [vmem:[%s366 + $0xf30] sm:$0xff]
        %v2466 = vld [vmem:[%s366 + $0xf38] sm:$0xff]
        %v2467 = vld [vmem:[%s366 + $0xf40] sm:$0xff]
        %v2468 = vld [vmem:[%s366 + $0xf48] sm:$0xff]
        %v2469 = vld [vmem:[%s366 + $0xf50] sm:$0xff]
        %v2470 = vld [vmem:[%s366 + $0xf58] sm:$0xff]
        %v2471 = vld [vmem:[%s366 + $0xf60] sm:$0xff]
        %v2472 = vld [vmem:[%s366 + $0xf68] sm:$0xff]
        %v2473 = vld [vmem:[%s366 + $0xf70] sm:$0xff]
        %v2474 = vld [vmem:[%s366 + $0xf78] sm:$0xff]
        %v2475 = vld [vmem:[%s366 + $0xf80] sm:$0xff]
        %v2476 = vld [vmem:[%s366 + $0xf88] sm:$0xff]
        %v2477 = vld [vmem:[%s366 + $0xf90] sm:$0xff]
        %v2478 = vld [vmem:[%s366 + $0xf98] sm:$0xff]
        %v2479 = vld [vmem:[%s366 + $0xfa0] sm:$0xff]
        %v2480 = vld [vmem:[%s366 + $0xfa8] sm:$0xff]
        %v2481 = vld [vmem:[%s366 + $0xfb0] sm:$0xff]
        %v2482 = vld [vmem:[%s366 + $0xfb8] sm:$0xff]
        %v2483 = vld [vmem:[%s366 + $0xfc0] sm:$0xff]
        %v2484 = vld [vmem:[%s366 + $0xfc8] sm:$0xff]
        %v2485 = vld [vmem:[%s366 + $0xfd0] sm:$0xff]
        %v2486 = vld [vmem:[%s366 + $0xfd8] sm:$0xff]
        %v2487 = vld [vmem:[%s366 + $0xfe0] sm:$0xff]
        %v2488 = vld [vmem:[%s366 + $0xfe8] sm:$0xff]
        %v2489 = vld [vmem:[%s366 + $0xff0] sm:$0xff]
        %v2490 = vld [vmem:[%s366 + $0xff8] sm:$0xff]
        %v2491 = vld [vmem:[%s376] sm:$0xff]
        %v2492 = vld [vmem:[%s376 + $0x8] sm:$0xff]
        %v2495 = vperm.slane %v2491, 0
        %v2496 = vperm.slane %v2491, 1
        %v2497 = vperm.slane %v2491, 2
        %v2498 = vperm.slane %v2491, 3
        %v2499 = vperm.slane %v2491, 4
        %v2500 = vperm.slane %v2491, 5
        %v2501 = vperm.slane %v2491, 6
        %v2502 = vperm.slane %v2491, 7
        %v2503 = vperm.slane %v2492, 0
        %v2504 = vperm.slane %v2492, 1
        %v2505 = vperm.slane %v2492, 2
        %v2506 = vperm.slane %v2492, 3
        %v2507 = vperm.slane %v2492, 4
        %v2508 = vperm.slane %v2492, 5
        %v2509 = vperm.slane %v2492, 6
        %v2510 = vperm.slane %v2492, 7
        %v3039 = vunpack.c.l.b16 %v1979
        %v3040 = vunpack.c.h.b16 %v1979
        %v3041 = vunpack.c.l.b16 %v1980
        %v3042 = vunpack.c.h.b16 %v1980
        %v3043 = vunpack.c.l.b16 %v1981
        %v3044 = vunpack.c.h.b16 %v1981
        %v3045 = vunpack.c.l.b16 %v1982
        %v3046 = vunpack.c.h.b16 %v1982
        %v3047 = vunpack.c.l.b16 %v1983
        %v3048 = vunpack.c.h.b16 %v1983
        %v3049 = vunpack.c.l.b16 %v1984
        %v3050 = vunpack.c.h.b16 %v1984
        %v3051 = vunpack.c.l.b16 %v1985
        %v3052 = vunpack.c.h.b16 %v1985
        %v3053 = vunpack.c.l.b16 %v1986
        %v3054 = vunpack.c.h.b16 %v1986
        %v3055 = vunpack.c.l.b16 %v1987
        %v3056 = vunpack.c.h.b16 %v1987
        %v3057 = vunpack.c.l.b16 %v1988
        %v3058 = vunpack.c.h.b16 %v1988
        %v3059 = vunpack.c.l.b16 %v1989
        %v3060 = vunpack.c.h.b16 %v1989
        %v3061 = vunpack.c.l.b16 %v1990
        %v3062 = vunpack.c.h.b16 %v1990
        %v3063 = vunpack.c.l.b16 %v1991
        %v3064 = vunpack.c.h.b16 %v1991
        %v3065 = vunpack.c.l.b16 %v1992
        %v3066 = vunpack.c.h.b16 %v1992
        %v3067 = vunpack.c.l.b16 %v1993
        %v3068 = vunpack.c.h.b16 %v1993
        %v3069 = vunpack.c.l.b16 %v1994
        %v3070 = vunpack.c.h.b16 %v1994
        %v3071 = vunpack.c.l.b16 %v1995
        %v3072 = vunpack.c.h.b16 %v1995
        %v3073 = vunpack.c.l.b16 %v1996
        %v3074 = vunpack.c.h.b16 %v1996
        %v3075 = vunpack.c.l.b16 %v1997
        %v3076 = vunpack.c.h.b16 %v1997
        %v3077 = vunpack.c.l.b16 %v1998
        %v3078 = vunpack.c.h.b16 %v1998
        %v3079 = vunpack.c.l.b16 %v1999
        %v3080 = vunpack.c.h.b16 %v1999
        %v3081 = vunpack.c.l.b16 %v2000
        %v3082 = vunpack.c.h.b16 %v2000
        %v3083 = vunpack.c.l.b16 %v2001
        %v3084 = vunpack.c.h.b16 %v2001
        %v3085 = vunpack.c.l.b16 %v2002
        %v3086 = vunpack.c.h.b16 %v2002
        %v3087 = vunpack.c.l.b16 %v2003
        %v3088 = vunpack.c.h.b16 %v2003
        %v3089 = vunpack.c.l.b16 %v2004
        %v3090 = vunpack.c.h.b16 %v2004
        %v3091 = vunpack.c.l.b16 %v2005
        %v3092 = vunpack.c.h.b16 %v2005
        %v3093 = vunpack.c.l.b16 %v2006
        %v3094 = vunpack.c.h.b16 %v2006
        %v3095 = vunpack.c.l.b16 %v2007
        %v3096 = vunpack.c.h.b16 %v2007
        %v3097 = vunpack.c.l.b16 %v2008
        %v3098 = vunpack.c.h.b16 %v2008
        %v3099 = vunpack.c.l.b16 %v2009
        %v3100 = vunpack.c.h.b16 %v2009
        %v3101 = vunpack.c.l.b16 %v2010
        %v3102 = vunpack.c.h.b16 %v2010
        %v3103 = vunpack.c.l.b16 %v2011
        %v3104 = vunpack.c.h.b16 %v2011
        %v3105 = vunpack.c.l.b16 %v2012
        %v3106 = vunpack.c.h.b16 %v2012
        %v3107 = vunpack.c.l.b16 %v2013
        %v3108 = vunpack.c.h.b16 %v2013
        %v3109 = vunpack.c.l.b16 %v2014
        %v3110 = vunpack.c.h.b16 %v2014
        %v3111 = vunpack.c.l.b16 %v2015
        %v3112 = vunpack.c.h.b16 %v2015
        %v3113 = vunpack.c.l.b16 %v2016
        %v3114 = vunpack.c.h.b16 %v2016
        %v3115 = vunpack.c.l.b16 %v2017
        %v3116 = vunpack.c.h.b16 %v2017
        %v3117 = vunpack.c.l.b16 %v2018
        %v3118 = vunpack.c.h.b16 %v2018
        %v3119 = vunpack.c.l.b16 %v2019
        %v3120 = vunpack.c.h.b16 %v2019
        %v3121 = vunpack.c.l.b16 %v2020
        %v3122 = vunpack.c.h.b16 %v2020
        %v3123 = vunpack.c.l.b16 %v2021
        %v3124 = vunpack.c.h.b16 %v2021
        %v3125 = vunpack.c.l.b16 %v2022
        %v3126 = vunpack.c.h.b16 %v2022
        %v3127 = vunpack.c.l.b16 %v2023
        %v3128 = vunpack.c.h.b16 %v2023
        %v3129 = vunpack.c.l.b16 %v2024
        %v3130 = vunpack.c.h.b16 %v2024
        %v3131 = vunpack.c.l.b16 %v2025
        %v3132 = vunpack.c.h.b16 %v2025
        %v3133 = vunpack.c.l.b16 %v2026
        %v3134 = vunpack.c.h.b16 %v2026
        %v3135 = vunpack.c.l.b16 %v2027
        %v3136 = vunpack.c.h.b16 %v2027
        %v3137 = vunpack.c.l.b16 %v2028
        %v3138 = vunpack.c.h.b16 %v2028
        %v3139 = vunpack.c.l.b16 %v2029
        %v3140 = vunpack.c.h.b16 %v2029
        %v3141 = vunpack.c.l.b16 %v2030
        %v3142 = vunpack.c.h.b16 %v2030
        %v3143 = vunpack.c.l.b16 %v2031
        %v3144 = vunpack.c.h.b16 %v2031
        %v3145 = vunpack.c.l.b16 %v2032
        %v3146 = vunpack.c.h.b16 %v2032
        %v3147 = vunpack.c.l.b16 %v2033
        %v3148 = vunpack.c.h.b16 %v2033
        %v3149 = vunpack.c.l.b16 %v2034
        %v3150 = vunpack.c.h.b16 %v2034
        %v3151 = vunpack.c.l.b16 %v2035
        %v3152 = vunpack.c.h.b16 %v2035
        %v3153 = vunpack.c.l.b16 %v2036
        %v3154 = vunpack.c.h.b16 %v2036
        %v3155 = vunpack.c.l.b16 %v2037
        %v3156 = vunpack.c.h.b16 %v2037
        %v3157 = vunpack.c.l.b16 %v2038
        %v3158 = vunpack.c.h.b16 %v2038
        %v3159 = vunpack.c.l.b16 %v2039
        %v3160 = vunpack.c.h.b16 %v2039
        %v3161 = vunpack.c.l.b16 %v2040
        %v3162 = vunpack.c.h.b16 %v2040
        %v3163 = vunpack.c.l.b16 %v2041
        %v3164 = vunpack.c.h.b16 %v2041
        %v3165 = vunpack.c.l.b16 %v2042
        %v3166 = vunpack.c.h.b16 %v2042
        %v3167 = vunpack.c.l.b16 %v2043
        %v3168 = vunpack.c.h.b16 %v2043
        %v3169 = vunpack.c.l.b16 %v2044
        %v3170 = vunpack.c.h.b16 %v2044
        %v3171 = vunpack.c.l.b16 %v2045
        %v3172 = vunpack.c.h.b16 %v2045
        %v3173 = vunpack.c.l.b16 %v2046
        %v3174 = vunpack.c.h.b16 %v2046
        %v3175 = vunpack.c.l.b16 %v2047
        %v3176 = vunpack.c.h.b16 %v2047
        %v3177 = vunpack.c.l.b16 %v2048
        %v3178 = vunpack.c.h.b16 %v2048
        %v3179 = vunpack.c.l.b16 %v2049
        %v3180 = vunpack.c.h.b16 %v2049
        %v3181 = vunpack.c.l.b16 %v2050
        %v3182 = vunpack.c.h.b16 %v2050
        %v3183 = vunpack.c.l.b16 %v2051
        %v3184 = vunpack.c.h.b16 %v2051
        %v3185 = vunpack.c.l.b16 %v2052
        %v3186 = vunpack.c.h.b16 %v2052
        %v3187 = vunpack.c.l.b16 %v2053
        %v3188 = vunpack.c.h.b16 %v2053
        %v3189 = vunpack.c.l.b16 %v2054
        %v3190 = vunpack.c.h.b16 %v2054
        %v3191 = vunpack.c.l.b16 %v2055
        %v3192 = vunpack.c.h.b16 %v2055
        %v3193 = vunpack.c.l.b16 %v2056
        %v3194 = vunpack.c.h.b16 %v2056
        %v3195 = vunpack.c.l.b16 %v2057
        %v3196 = vunpack.c.h.b16 %v2057
        %v3197 = vunpack.c.l.b16 %v2058
        %v3198 = vunpack.c.h.b16 %v2058
        %v3199 = vunpack.c.l.b16 %v2059
        %v3200 = vunpack.c.h.b16 %v2059
        %v3201 = vunpack.c.l.b16 %v2060
        %v3202 = vunpack.c.h.b16 %v2060
        %v3203 = vunpack.c.l.b16 %v2061
        %v3204 = vunpack.c.h.b16 %v2061
        %v3205 = vunpack.c.l.b16 %v2062
        %v3206 = vunpack.c.h.b16 %v2062
        %v3207 = vunpack.c.l.b16 %v2063
        %v3208 = vunpack.c.h.b16 %v2063
        %v3209 = vunpack.c.l.b16 %v2064
        %v3210 = vunpack.c.h.b16 %v2064
        %v3211 = vunpack.c.l.b16 %v2065
        %v3212 = vunpack.c.h.b16 %v2065
        %v3213 = vunpack.c.l.b16 %v2066
        %v3214 = vunpack.c.h.b16 %v2066
        %v3215 = vunpack.c.l.b16 %v2067
        %v3216 = vunpack.c.h.b16 %v2067
        %v3217 = vunpack.c.l.b16 %v2068
        %v3218 = vunpack.c.h.b16 %v2068
        %v3219 = vunpack.c.l.b16 %v2069
        %v3220 = vunpack.c.h.b16 %v2069
        %v3221 = vunpack.c.l.b16 %v2070
        %v3222 = vunpack.c.h.b16 %v2070
        %v3223 = vunpack.c.l.b16 %v2071
        %v3224 = vunpack.c.h.b16 %v2071
        %v3225 = vunpack.c.l.b16 %v2072
        %v3226 = vunpack.c.h.b16 %v2072
        %v3227 = vunpack.c.l.b16 %v2073
        %v3228 = vunpack.c.h.b16 %v2073
        %v3229 = vunpack.c.l.b16 %v2074
        %v3230 = vunpack.c.h.b16 %v2074
        %v3231 = vunpack.c.l.b16 %v2075
        %v3232 = vunpack.c.h.b16 %v2075
        %v3233 = vunpack.c.l.b16 %v2076
        %v3234 = vunpack.c.h.b16 %v2076
        %v3235 = vunpack.c.l.b16 %v2077
        %v3236 = vunpack.c.h.b16 %v2077
        %v3237 = vunpack.c.l.b16 %v2078
        %v3238 = vunpack.c.h.b16 %v2078
        %v3239 = vunpack.c.l.b16 %v2079
        %v3240 = vunpack.c.h.b16 %v2079
        %v3241 = vunpack.c.l.b16 %v2080
        %v3242 = vunpack.c.h.b16 %v2080
        %v3243 = vunpack.c.l.b16 %v2081
        %v3244 = vunpack.c.h.b16 %v2081
        %v3245 = vunpack.c.l.b16 %v2082
        %v3246 = vunpack.c.h.b16 %v2082
        %v3247 = vunpack.c.l.b16 %v2083
        %v3248 = vunpack.c.h.b16 %v2083
        %v3249 = vunpack.c.l.b16 %v2084
        %v3250 = vunpack.c.h.b16 %v2084
        %v3251 = vunpack.c.l.b16 %v2085
        %v3252 = vunpack.c.h.b16 %v2085
        %v3253 = vunpack.c.l.b16 %v2086
        %v3254 = vunpack.c.h.b16 %v2086
        %v3255 = vunpack.c.l.b16 %v2087
        %v3256 = vunpack.c.h.b16 %v2087
        %v3257 = vunpack.c.l.b16 %v2088
        %v3258 = vunpack.c.h.b16 %v2088
        %v3259 = vunpack.c.l.b16 %v2089
        %v3260 = vunpack.c.h.b16 %v2089
        %v3261 = vunpack.c.l.b16 %v2090
        %v3262 = vunpack.c.h.b16 %v2090
        %v3263 = vunpack.c.l.b16 %v2091
        %v3264 = vunpack.c.h.b16 %v2091
        %v3265 = vunpack.c.l.b16 %v2092
        %v3266 = vunpack.c.h.b16 %v2092
        %v3267 = vunpack.c.l.b16 %v2093
        %v3268 = vunpack.c.h.b16 %v2093
        %v3269 = vunpack.c.l.b16 %v2094
        %v3270 = vunpack.c.h.b16 %v2094
        %v3271 = vunpack.c.l.b16 %v2095
        %v3272 = vunpack.c.h.b16 %v2095
        %v3273 = vunpack.c.l.b16 %v2096
        %v3274 = vunpack.c.h.b16 %v2096
        %v3275 = vunpack.c.l.b16 %v2097
        %v3276 = vunpack.c.h.b16 %v2097
        %v3277 = vunpack.c.l.b16 %v2098
        %v3278 = vunpack.c.h.b16 %v2098
        %v3279 = vunpack.c.l.b16 %v2099
        %v3280 = vunpack.c.h.b16 %v2099
        %v3281 = vunpack.c.l.b16 %v2100
        %v3282 = vunpack.c.h.b16 %v2100
        %v3283 = vunpack.c.l.b16 %v2101
        %v3284 = vunpack.c.h.b16 %v2101
        %v3285 = vunpack.c.l.b16 %v2102
        %v3286 = vunpack.c.h.b16 %v2102
        %v3287 = vunpack.c.l.b16 %v2103
        %v3288 = vunpack.c.h.b16 %v2103
        %v3289 = vunpack.c.l.b16 %v2104
        %v3290 = vunpack.c.h.b16 %v2104
        %v3291 = vunpack.c.l.b16 %v2105
        %v3292 = vunpack.c.h.b16 %v2105
        %v3293 = vunpack.c.l.b16 %v2106
        %v3294 = vunpack.c.h.b16 %v2106
        %v3295 = vunpack.c.l.b16 %v2107
        %v3296 = vunpack.c.h.b16 %v2107
        %v3297 = vunpack.c.l.b16 %v2108
        %v3298 = vunpack.c.h.b16 %v2108
        %v3299 = vunpack.c.l.b16 %v2109
        %v3300 = vunpack.c.h.b16 %v2109
        %v3301 = vunpack.c.l.b16 %v2110
        %v3302 = vunpack.c.h.b16 %v2110
        %v3303 = vunpack.c.l.b16 %v2111
        %v3304 = vunpack.c.h.b16 %v2111
        %v3305 = vunpack.c.l.b16 %v2112
        %v3306 = vunpack.c.h.b16 %v2112
        %v3307 = vunpack.c.l.b16 %v2113
        %v3308 = vunpack.c.h.b16 %v2113
        %v3309 = vunpack.c.l.b16 %v2114
        %v3310 = vunpack.c.h.b16 %v2114
        %v3311 = vunpack.c.l.b16 %v2115
        %v3312 = vunpack.c.h.b16 %v2115
        %v3313 = vunpack.c.l.b16 %v2116
        %v3314 = vunpack.c.h.b16 %v2116
        %v3315 = vunpack.c.l.b16 %v2117
        %v3316 = vunpack.c.h.b16 %v2117
        %v3317 = vunpack.c.l.b16 %v2118
        %v3318 = vunpack.c.h.b16 %v2118
        %v3319 = vunpack.c.l.b16 %v2119
        %v3320 = vunpack.c.h.b16 %v2119
        %v3321 = vunpack.c.l.b16 %v2120
        %v3322 = vunpack.c.h.b16 %v2120
        %v3323 = vunpack.c.l.b16 %v2121
        %v3324 = vunpack.c.h.b16 %v2121
        %v3325 = vunpack.c.l.b16 %v2122
        %v3326 = vunpack.c.h.b16 %v2122
        %v3327 = vunpack.c.l.b16 %v2123
        %v3328 = vunpack.c.h.b16 %v2123
        %v3329 = vunpack.c.l.b16 %v2124
        %v3330 = vunpack.c.h.b16 %v2124
        %v3331 = vunpack.c.l.b16 %v2125
        %v3332 = vunpack.c.h.b16 %v2125
        %v3333 = vunpack.c.l.b16 %v2126
        %v3334 = vunpack.c.h.b16 %v2126
        %v3335 = vunpack.c.l.b16 %v2127
        %v3336 = vunpack.c.h.b16 %v2127
        %v3337 = vunpack.c.l.b16 %v2128
        %v3338 = vunpack.c.h.b16 %v2128
        %v3339 = vunpack.c.l.b16 %v2129
        %v3340 = vunpack.c.h.b16 %v2129
        %v3341 = vunpack.c.l.b16 %v2130
        %v3342 = vunpack.c.h.b16 %v2130
        %v3343 = vunpack.c.l.b16 %v2131
        %v3344 = vunpack.c.h.b16 %v2131
        %v3345 = vunpack.c.l.b16 %v2132
        %v3346 = vunpack.c.h.b16 %v2132
        %v3347 = vunpack.c.l.b16 %v2133
        %v3348 = vunpack.c.h.b16 %v2133
        %v3349 = vunpack.c.l.b16 %v2134
        %v3350 = vunpack.c.h.b16 %v2134
        %v3351 = vunpack.c.l.b16 %v2135
        %v3352 = vunpack.c.h.b16 %v2135
        %v3353 = vunpack.c.l.b16 %v2136
        %v3354 = vunpack.c.h.b16 %v2136
        %v3355 = vunpack.c.l.b16 %v2137
        %v3356 = vunpack.c.h.b16 %v2137
        %v3357 = vunpack.c.l.b16 %v2138
        %v3358 = vunpack.c.h.b16 %v2138
        %v3359 = vunpack.c.l.b16 %v2139
        %v3360 = vunpack.c.h.b16 %v2139
        %v3361 = vunpack.c.l.b16 %v2140
        %v3362 = vunpack.c.h.b16 %v2140
        %v3363 = vunpack.c.l.b16 %v2141
        %v3364 = vunpack.c.h.b16 %v2141
        %v3365 = vunpack.c.l.b16 %v2142
        %v3366 = vunpack.c.h.b16 %v2142
        %v3367 = vunpack.c.l.b16 %v2143
        %v3368 = vunpack.c.h.b16 %v2143
        %v3369 = vunpack.c.l.b16 %v2144
        %v3370 = vunpack.c.h.b16 %v2144
        %v3371 = vunpack.c.l.b16 %v2145
        %v3372 = vunpack.c.h.b16 %v2145
        %v3373 = vunpack.c.l.b16 %v2146
        %v3374 = vunpack.c.h.b16 %v2146
        %v3375 = vunpack.c.l.b16 %v2147
        %v3376 = vunpack.c.h.b16 %v2147
        %v3377 = vunpack.c.l.b16 %v2148
        %v3378 = vunpack.c.h.b16 %v2148
        %v3379 = vunpack.c.l.b16 %v2149
        %v3380 = vunpack.c.h.b16 %v2149
        %v3381 = vunpack.c.l.b16 %v2150
        %v3382 = vunpack.c.h.b16 %v2150
        %v3383 = vunpack.c.l.b16 %v2151
        %v3384 = vunpack.c.h.b16 %v2151
        %v3385 = vunpack.c.l.b16 %v2152
        %v3386 = vunpack.c.h.b16 %v2152
        %v3387 = vunpack.c.l.b16 %v2153
        %v3388 = vunpack.c.h.b16 %v2153
        %v3389 = vunpack.c.l.b16 %v2154
        %v3390 = vunpack.c.h.b16 %v2154
        %v3391 = vunpack.c.l.b16 %v2155
        %v3392 = vunpack.c.h.b16 %v2155
        %v3393 = vunpack.c.l.b16 %v2156
        %v3394 = vunpack.c.h.b16 %v2156
        %v3395 = vunpack.c.l.b16 %v2157
        %v3396 = vunpack.c.h.b16 %v2157
        %v3397 = vunpack.c.l.b16 %v2158
        %v3398 = vunpack.c.h.b16 %v2158
        %v3399 = vunpack.c.l.b16 %v2159
        %v3400 = vunpack.c.h.b16 %v2159
        %v3401 = vunpack.c.l.b16 %v2160
        %v3402 = vunpack.c.h.b16 %v2160
        %v3403 = vunpack.c.l.b16 %v2161
        %v3404 = vunpack.c.h.b16 %v2161
        %v3405 = vunpack.c.l.b16 %v2162
        %v3406 = vunpack.c.h.b16 %v2162
        %v3407 = vunpack.c.l.b16 %v2163
        %v3408 = vunpack.c.h.b16 %v2163
        %v3409 = vunpack.c.l.b16 %v2164
        %v3410 = vunpack.c.h.b16 %v2164
        %v3411 = vunpack.c.l.b16 %v2165
        %v3412 = vunpack.c.h.b16 %v2165
        %v3413 = vunpack.c.l.b16 %v2166
        %v3414 = vunpack.c.h.b16 %v2166
        %v3415 = vunpack.c.l.b16 %v2167
        %v3416 = vunpack.c.h.b16 %v2167
        %v3417 = vunpack.c.l.b16 %v2168
        %v3418 = vunpack.c.h.b16 %v2168
        %v3419 = vunpack.c.l.b16 %v2169
        %v3420 = vunpack.c.h.b16 %v2169
        %v3421 = vunpack.c.l.b16 %v2170
        %v3422 = vunpack.c.h.b16 %v2170
        %v3423 = vunpack.c.l.b16 %v2171
        %v3424 = vunpack.c.h.b16 %v2171
        %v3425 = vunpack.c.l.b16 %v2172
        %v3426 = vunpack.c.h.b16 %v2172
        %v3427 = vunpack.c.l.b16 %v2173
        %v3428 = vunpack.c.h.b16 %v2173
        %v3429 = vunpack.c.l.b16 %v2174
        %v3430 = vunpack.c.h.b16 %v2174
        %v3431 = vunpack.c.l.b16 %v2175
        %v3432 = vunpack.c.h.b16 %v2175
        %v3433 = vunpack.c.l.b16 %v2176
        %v3434 = vunpack.c.h.b16 %v2176
        %v3435 = vunpack.c.l.b16 %v2177
        %v3436 = vunpack.c.h.b16 %v2177
        %v3437 = vunpack.c.l.b16 %v2178
        %v3438 = vunpack.c.h.b16 %v2178
        %v3439 = vunpack.c.l.b16 %v2179
        %v3440 = vunpack.c.h.b16 %v2179
        %v3441 = vunpack.c.l.b16 %v2180
        %v3442 = vunpack.c.h.b16 %v2180
        %v3443 = vunpack.c.l.b16 %v2181
        %v3444 = vunpack.c.h.b16 %v2181
        %v3445 = vunpack.c.l.b16 %v2182
        %v3446 = vunpack.c.h.b16 %v2182
        %v3447 = vunpack.c.l.b16 %v2183
        %v3448 = vunpack.c.h.b16 %v2183
        %v3449 = vunpack.c.l.b16 %v2184
        %v3450 = vunpack.c.h.b16 %v2184
        %v3451 = vunpack.c.l.b16 %v2185
        %v3452 = vunpack.c.h.b16 %v2185
        %v3453 = vunpack.c.l.b16 %v2186
        %v3454 = vunpack.c.h.b16 %v2186
        %v3455 = vunpack.c.l.b16 %v2187
        %v3456 = vunpack.c.h.b16 %v2187
        %v3457 = vunpack.c.l.b16 %v2188
        %v3458 = vunpack.c.h.b16 %v2188
        %v3459 = vunpack.c.l.b16 %v2189
        %v3460 = vunpack.c.h.b16 %v2189
        %v3461 = vunpack.c.l.b16 %v2190
        %v3462 = vunpack.c.h.b16 %v2190
        %v3463 = vunpack.c.l.b16 %v2191
        %v3464 = vunpack.c.h.b16 %v2191
        %v3465 = vunpack.c.l.b16 %v2192
        %v3466 = vunpack.c.h.b16 %v2192
        %v3467 = vunpack.c.l.b16 %v2193
        %v3468 = vunpack.c.h.b16 %v2193
        %v3469 = vunpack.c.l.b16 %v2194
        %v3470 = vunpack.c.h.b16 %v2194
        %v3471 = vunpack.c.l.b16 %v2195
        %v3472 = vunpack.c.h.b16 %v2195
        %v3473 = vunpack.c.l.b16 %v2196
        %v3474 = vunpack.c.h.b16 %v2196
        %v3475 = vunpack.c.l.b16 %v2197
        %v3476 = vunpack.c.h.b16 %v2197
        %v3477 = vunpack.c.l.b16 %v2198
        %v3478 = vunpack.c.h.b16 %v2198
        %v3479 = vunpack.c.l.b16 %v2199
        %v3480 = vunpack.c.h.b16 %v2199
        %v3481 = vunpack.c.l.b16 %v2200
        %v3482 = vunpack.c.h.b16 %v2200
        %v3483 = vunpack.c.l.b16 %v2201
        %v3484 = vunpack.c.h.b16 %v2201
        %v3485 = vunpack.c.l.b16 %v2202
        %v3486 = vunpack.c.h.b16 %v2202
        %v3487 = vunpack.c.l.b16 %v2203
        %v3488 = vunpack.c.h.b16 %v2203
        %v3489 = vunpack.c.l.b16 %v2204
        %v3490 = vunpack.c.h.b16 %v2204
        %v3491 = vunpack.c.l.b16 %v2205
        %v3492 = vunpack.c.h.b16 %v2205
        %v3493 = vunpack.c.l.b16 %v2206
        %v3494 = vunpack.c.h.b16 %v2206
        %v3495 = vunpack.c.l.b16 %v2207
        %v3496 = vunpack.c.h.b16 %v2207
        %v3497 = vunpack.c.l.b16 %v2208
        %v3498 = vunpack.c.h.b16 %v2208
        %v3499 = vunpack.c.l.b16 %v2209
        %v3500 = vunpack.c.h.b16 %v2209
        %v3501 = vunpack.c.l.b16 %v2210
        %v3502 = vunpack.c.h.b16 %v2210
        %v3503 = vunpack.c.l.b16 %v2211
        %v3504 = vunpack.c.h.b16 %v2211
        %v3505 = vunpack.c.l.b16 %v2212
        %v3506 = vunpack.c.h.b16 %v2212
        %v3507 = vunpack.c.l.b16 %v2213
        %v3508 = vunpack.c.h.b16 %v2213
        %v3509 = vunpack.c.l.b16 %v2214
        %v3510 = vunpack.c.h.b16 %v2214
        %v3511 = vunpack.c.l.b16 %v2215
        %v3512 = vunpack.c.h.b16 %v2215
        %v3513 = vunpack.c.l.b16 %v2216
        %v3514 = vunpack.c.h.b16 %v2216
        %v3515 = vunpack.c.l.b16 %v2217
        %v3516 = vunpack.c.h.b16 %v2217
        %v3517 = vunpack.c.l.b16 %v2218
        %v3518 = vunpack.c.h.b16 %v2218
        %v3519 = vunpack.c.l.b16 %v2219
        %v3520 = vunpack.c.h.b16 %v2219
        %v3521 = vunpack.c.l.b16 %v2220
        %v3522 = vunpack.c.h.b16 %v2220
        %v3523 = vunpack.c.l.b16 %v2221
        %v3524 = vunpack.c.h.b16 %v2221
        %v3525 = vunpack.c.l.b16 %v2222
        %v3526 = vunpack.c.h.b16 %v2222
        %v3527 = vunpack.c.l.b16 %v2223
        %v3528 = vunpack.c.h.b16 %v2223
        %v3529 = vunpack.c.l.b16 %v2224
        %v3530 = vunpack.c.h.b16 %v2224
        %v3531 = vunpack.c.l.b16 %v2225
        %v3532 = vunpack.c.h.b16 %v2225
        %v3533 = vunpack.c.l.b16 %v2226
        %v3534 = vunpack.c.h.b16 %v2226
        %v3535 = vunpack.c.l.b16 %v2227
        %v3536 = vunpack.c.h.b16 %v2227
        %v3537 = vunpack.c.l.b16 %v2228
        %v3538 = vunpack.c.h.b16 %v2228
        %v3539 = vunpack.c.l.b16 %v2229
        %v3540 = vunpack.c.h.b16 %v2229
        %v3541 = vunpack.c.l.b16 %v2230
        %v3542 = vunpack.c.h.b16 %v2230
        %v3543 = vunpack.c.l.b16 %v2231
        %v3544 = vunpack.c.h.b16 %v2231
        %v3545 = vunpack.c.l.b16 %v2232
        %v3546 = vunpack.c.h.b16 %v2232
        %v3547 = vunpack.c.l.b16 %v2233
        %v3548 = vunpack.c.h.b16 %v2233
        %v3549 = vunpack.c.l.b16 %v2234
        %v3550 = vunpack.c.h.b16 %v2234
        %v3551 = vunpack.c.l.b16 %v2235
        %v3552 = vunpack.c.h.b16 %v2235
        %v3553 = vunpack.c.l.b16 %v2236
        %v3554 = vunpack.c.h.b16 %v2236
        %v3555 = vunpack.c.l.b16 %v2237
        %v3556 = vunpack.c.h.b16 %v2237
        %v3557 = vunpack.c.l.b16 %v2238
        %v3558 = vunpack.c.h.b16 %v2238
        %v3559 = vunpack.c.l.b16 %v2239
        %v3560 = vunpack.c.h.b16 %v2239
        %v3561 = vunpack.c.l.b16 %v2240
        %v3562 = vunpack.c.h.b16 %v2240
        %v3563 = vunpack.c.l.b16 %v2241
        %v3564 = vunpack.c.h.b16 %v2241
        %v3565 = vunpack.c.l.b16 %v2242
        %v3566 = vunpack.c.h.b16 %v2242
        %v3567 = vunpack.c.l.b16 %v2243
        %v3568 = vunpack.c.h.b16 %v2243
        %v3569 = vunpack.c.l.b16 %v2244
        %v3570 = vunpack.c.h.b16 %v2244
        %v3571 = vunpack.c.l.b16 %v2245
        %v3572 = vunpack.c.h.b16 %v2245
        %v3573 = vunpack.c.l.b16 %v2246
        %v3574 = vunpack.c.h.b16 %v2246
        %v3575 = vunpack.c.l.b16 %v2247
        %v3576 = vunpack.c.h.b16 %v2247
        %v3577 = vunpack.c.l.b16 %v2248
        %v3578 = vunpack.c.h.b16 %v2248
        %v3579 = vunpack.c.l.b16 %v2249
        %v3580 = vunpack.c.h.b16 %v2249
        %v3581 = vunpack.c.l.b16 %v2250
        %v3582 = vunpack.c.h.b16 %v2250
        %v3583 = vunpack.c.l.b16 %v2251
        %v3584 = vunpack.c.h.b16 %v2251
        %v3585 = vunpack.c.l.b16 %v2252
        %v3586 = vunpack.c.h.b16 %v2252
        %v3587 = vunpack.c.l.b16 %v2253
        %v3588 = vunpack.c.h.b16 %v2253
        %v3589 = vunpack.c.l.b16 %v2254
        %v3590 = vunpack.c.h.b16 %v2254
        %v3591 = vunpack.c.l.b16 %v2255
        %v3592 = vunpack.c.h.b16 %v2255
        %v3593 = vunpack.c.l.b16 %v2256
        %v3594 = vunpack.c.h.b16 %v2256
        %v3595 = vunpack.c.l.b16 %v2257
        %v3596 = vunpack.c.h.b16 %v2257
        %v3597 = vunpack.c.l.b16 %v2258
        %v3598 = vunpack.c.h.b16 %v2258
        %v3599 = vunpack.c.l.b16 %v2259
        %v3600 = vunpack.c.h.b16 %v2259
        %v3601 = vunpack.c.l.b16 %v2260
        %v3602 = vunpack.c.h.b16 %v2260
        %v3603 = vunpack.c.l.b16 %v2261
        %v3604 = vunpack.c.h.b16 %v2261
        %v3605 = vunpack.c.l.b16 %v2262
        %v3606 = vunpack.c.h.b16 %v2262
        %v3607 = vunpack.c.l.b16 %v2263
        %v3608 = vunpack.c.h.b16 %v2263
        %v3609 = vunpack.c.l.b16 %v2264
        %v3610 = vunpack.c.h.b16 %v2264
        %v3611 = vunpack.c.l.b16 %v2265
        %v3612 = vunpack.c.h.b16 %v2265
        %v3613 = vunpack.c.l.b16 %v2266
        %v3614 = vunpack.c.h.b16 %v2266
        %v3615 = vunpack.c.l.b16 %v2267
        %v3616 = vunpack.c.h.b16 %v2267
        %v3617 = vunpack.c.l.b16 %v2268
        %v3618 = vunpack.c.h.b16 %v2268
        %v3619 = vunpack.c.l.b16 %v2269
        %v3620 = vunpack.c.h.b16 %v2269
        %v3621 = vunpack.c.l.b16 %v2270
        %v3622 = vunpack.c.h.b16 %v2270
        %v3623 = vunpack.c.l.b16 %v2271
        %v3624 = vunpack.c.h.b16 %v2271
        %v3625 = vunpack.c.l.b16 %v2272
        %v3626 = vunpack.c.h.b16 %v2272
        %v3627 = vunpack.c.l.b16 %v2273
        %v3628 = vunpack.c.h.b16 %v2273
        %v3629 = vunpack.c.l.b16 %v2274
        %v3630 = vunpack.c.h.b16 %v2274
        %v3631 = vunpack.c.l.b16 %v2275
        %v3632 = vunpack.c.h.b16 %v2275
        %v3633 = vunpack.c.l.b16 %v2276
        %v3634 = vunpack.c.h.b16 %v2276
        %v3635 = vunpack.c.l.b16 %v2277
        %v3636 = vunpack.c.h.b16 %v2277
        %v3637 = vunpack.c.l.b16 %v2278
        %v3638 = vunpack.c.h.b16 %v2278
        %v3639 = vunpack.c.l.b16 %v2279
        %v3640 = vunpack.c.h.b16 %v2279
        %v3641 = vunpack.c.l.b16 %v2280
        %v3642 = vunpack.c.h.b16 %v2280
        %v3643 = vunpack.c.l.b16 %v2281
        %v3644 = vunpack.c.h.b16 %v2281
        %v3645 = vunpack.c.l.b16 %v2282
        %v3646 = vunpack.c.h.b16 %v2282
        %v3647 = vunpack.c.l.b16 %v2283
        %v3648 = vunpack.c.h.b16 %v2283
        %v3649 = vunpack.c.l.b16 %v2284
        %v3650 = vunpack.c.h.b16 %v2284
        %v3651 = vunpack.c.l.b16 %v2285
        %v3652 = vunpack.c.h.b16 %v2285
        %v3653 = vunpack.c.l.b16 %v2286
        %v3654 = vunpack.c.h.b16 %v2286
        %v3655 = vunpack.c.l.b16 %v2287
        %v3656 = vunpack.c.h.b16 %v2287
        %v3657 = vunpack.c.l.b16 %v2288
        %v3658 = vunpack.c.h.b16 %v2288
        %v3659 = vunpack.c.l.b16 %v2289
        %v3660 = vunpack.c.h.b16 %v2289
        %v3661 = vunpack.c.l.b16 %v2290
        %v3662 = vunpack.c.h.b16 %v2290
        %v3663 = vunpack.c.l.b16 %v2291
        %v3664 = vunpack.c.h.b16 %v2291
        %v3665 = vunpack.c.l.b16 %v2292
        %v3666 = vunpack.c.h.b16 %v2292
        %v3667 = vunpack.c.l.b16 %v2293
        %v3668 = vunpack.c.h.b16 %v2293
        %v3669 = vunpack.c.l.b16 %v2294
        %v3670 = vunpack.c.h.b16 %v2294
        %v3671 = vunpack.c.l.b16 %v2295
        %v3672 = vunpack.c.h.b16 %v2295
        %v3673 = vunpack.c.l.b16 %v2296
        %v3674 = vunpack.c.h.b16 %v2296
        %v3675 = vunpack.c.l.b16 %v2297
        %v3676 = vunpack.c.h.b16 %v2297
        %v3677 = vunpack.c.l.b16 %v2298
        %v3678 = vunpack.c.h.b16 %v2298
        %v3679 = vunpack.c.l.b16 %v2299
        %v3680 = vunpack.c.h.b16 %v2299
        %v3681 = vunpack.c.l.b16 %v2300
        %v3682 = vunpack.c.h.b16 %v2300
        %v3683 = vunpack.c.l.b16 %v2301
        %v3684 = vunpack.c.h.b16 %v2301
        %v3685 = vunpack.c.l.b16 %v2302
        %v3686 = vunpack.c.h.b16 %v2302
        %v3687 = vunpack.c.l.b16 %v2303
        %v3688 = vunpack.c.h.b16 %v2303
        %v3689 = vunpack.c.l.b16 %v2304
        %v3690 = vunpack.c.h.b16 %v2304
        %v3691 = vunpack.c.l.b16 %v2305
        %v3692 = vunpack.c.h.b16 %v2305
        %v3693 = vunpack.c.l.b16 %v2306
        %v3694 = vunpack.c.h.b16 %v2306
        %v3695 = vunpack.c.l.b16 %v2307
        %v3696 = vunpack.c.h.b16 %v2307
        %v3697 = vunpack.c.l.b16 %v2308
        %v3698 = vunpack.c.h.b16 %v2308
        %v3699 = vunpack.c.l.b16 %v2309
        %v3700 = vunpack.c.h.b16 %v2309
        %v3701 = vunpack.c.l.b16 %v2310
        %v3702 = vunpack.c.h.b16 %v2310
        %v3703 = vunpack.c.l.b16 %v2311
        %v3704 = vunpack.c.h.b16 %v2311
        %v3705 = vunpack.c.l.b16 %v2312
        %v3706 = vunpack.c.h.b16 %v2312
        %v3707 = vunpack.c.l.b16 %v2313
        %v3708 = vunpack.c.h.b16 %v2313
        %v3709 = vunpack.c.l.b16 %v2314
        %v3710 = vunpack.c.h.b16 %v2314
        %v3711 = vunpack.c.l.b16 %v2315
        %v3712 = vunpack.c.h.b16 %v2315
        %v3713 = vunpack.c.l.b16 %v2316
        %v3714 = vunpack.c.h.b16 %v2316
        %v3715 = vunpack.c.l.b16 %v2317
        %v3716 = vunpack.c.h.b16 %v2317
        %v3717 = vunpack.c.l.b16 %v2318
        %v3718 = vunpack.c.h.b16 %v2318
        %v3719 = vunpack.c.l.b16 %v2319
        %v3720 = vunpack.c.h.b16 %v2319
        %v3721 = vunpack.c.l.b16 %v2320
        %v3722 = vunpack.c.h.b16 %v2320
        %v3723 = vunpack.c.l.b16 %v2321
        %v3724 = vunpack.c.h.b16 %v2321
        %v3725 = vunpack.c.l.b16 %v2322
        %v3726 = vunpack.c.h.b16 %v2322
        %v3727 = vunpack.c.l.b16 %v2323
        %v3728 = vunpack.c.h.b16 %v2323
        %v3729 = vunpack.c.l.b16 %v2324
        %v3730 = vunpack.c.h.b16 %v2324
        %v3731 = vunpack.c.l.b16 %v2325
        %v3732 = vunpack.c.h.b16 %v2325
        %v3733 = vunpack.c.l.b16 %v2326
        %v3734 = vunpack.c.h.b16 %v2326
        %v3735 = vunpack.c.l.b16 %v2327
        %v3736 = vunpack.c.h.b16 %v2327
        %v3737 = vunpack.c.l.b16 %v2328
        %v3738 = vunpack.c.h.b16 %v2328
        %v3739 = vunpack.c.l.b16 %v2329
        %v3740 = vunpack.c.h.b16 %v2329
        %v3741 = vunpack.c.l.b16 %v2330
        %v3742 = vunpack.c.h.b16 %v2330
        %v3743 = vunpack.c.l.b16 %v2331
        %v3744 = vunpack.c.h.b16 %v2331
        %v3745 = vunpack.c.l.b16 %v2332
        %v3746 = vunpack.c.h.b16 %v2332
        %v3747 = vunpack.c.l.b16 %v2333
        %v3748 = vunpack.c.h.b16 %v2333
        %v3749 = vunpack.c.l.b16 %v2334
        %v3750 = vunpack.c.h.b16 %v2334
        %v3751 = vunpack.c.l.b16 %v2335
        %v3752 = vunpack.c.h.b16 %v2335
        %v3753 = vunpack.c.l.b16 %v2336
        %v3754 = vunpack.c.h.b16 %v2336
        %v3755 = vunpack.c.l.b16 %v2337
        %v3756 = vunpack.c.h.b16 %v2337
        %v3757 = vunpack.c.l.b16 %v2338
        %v3758 = vunpack.c.h.b16 %v2338
        %v3759 = vunpack.c.l.b16 %v2339
        %v3760 = vunpack.c.h.b16 %v2339
        %v3761 = vunpack.c.l.b16 %v2340
        %v3762 = vunpack.c.h.b16 %v2340
        %v3763 = vunpack.c.l.b16 %v2341
        %v3764 = vunpack.c.h.b16 %v2341
        %v3765 = vunpack.c.l.b16 %v2342
        %v3766 = vunpack.c.h.b16 %v2342
        %v3767 = vunpack.c.l.b16 %v2343
        %v3768 = vunpack.c.h.b16 %v2343
        %v3769 = vunpack.c.l.b16 %v2344
        %v3770 = vunpack.c.h.b16 %v2344
        %v3771 = vunpack.c.l.b16 %v2345
        %v3772 = vunpack.c.h.b16 %v2345
        %v3773 = vunpack.c.l.b16 %v2346
        %v3774 = vunpack.c.h.b16 %v2346
        %v3775 = vunpack.c.l.b16 %v2347
        %v3776 = vunpack.c.h.b16 %v2347
        %v3777 = vunpack.c.l.b16 %v2348
        %v3778 = vunpack.c.h.b16 %v2348
        %v3779 = vunpack.c.l.b16 %v2349
        %v3780 = vunpack.c.h.b16 %v2349
        %v3781 = vunpack.c.l.b16 %v2350
        %v3782 = vunpack.c.h.b16 %v2350
        %v3783 = vunpack.c.l.b16 %v2351
        %v3784 = vunpack.c.h.b16 %v2351
        %v3785 = vunpack.c.l.b16 %v2352
        %v3786 = vunpack.c.h.b16 %v2352
        %v3787 = vunpack.c.l.b16 %v2353
        %v3788 = vunpack.c.h.b16 %v2353
        %v3789 = vunpack.c.l.b16 %v2354
        %v3790 = vunpack.c.h.b16 %v2354
        %v3791 = vunpack.c.l.b16 %v2355
        %v3792 = vunpack.c.h.b16 %v2355
        %v3793 = vunpack.c.l.b16 %v2356
        %v3794 = vunpack.c.h.b16 %v2356
        %v3795 = vunpack.c.l.b16 %v2357
        %v3796 = vunpack.c.h.b16 %v2357
        %v3797 = vunpack.c.l.b16 %v2358
        %v3798 = vunpack.c.h.b16 %v2358
        %v3799 = vunpack.c.l.b16 %v2359
        %v3800 = vunpack.c.h.b16 %v2359
        %v3801 = vunpack.c.l.b16 %v2360
        %v3802 = vunpack.c.h.b16 %v2360
        %v3803 = vunpack.c.l.b16 %v2361
        %v3804 = vunpack.c.h.b16 %v2361
        %v3805 = vunpack.c.l.b16 %v2362
        %v3806 = vunpack.c.h.b16 %v2362
        %v3807 = vunpack.c.l.b16 %v2363
        %v3808 = vunpack.c.h.b16 %v2363
        %v3809 = vunpack.c.l.b16 %v2364
        %v3810 = vunpack.c.h.b16 %v2364
        %v3811 = vunpack.c.l.b16 %v2365
        %v3812 = vunpack.c.h.b16 %v2365
        %v3813 = vunpack.c.l.b16 %v2366
        %v3814 = vunpack.c.h.b16 %v2366
        %v3815 = vunpack.c.l.b16 %v2367
        %v3816 = vunpack.c.h.b16 %v2367
        %v3817 = vunpack.c.l.b16 %v2368
        %v3818 = vunpack.c.h.b16 %v2368
        %v3819 = vunpack.c.l.b16 %v2369
        %v3820 = vunpack.c.h.b16 %v2369
        %v3821 = vunpack.c.l.b16 %v2370
        %v3822 = vunpack.c.h.b16 %v2370
        %v3823 = vunpack.c.l.b16 %v2371
        %v3824 = vunpack.c.h.b16 %v2371
        %v3825 = vunpack.c.l.b16 %v2372
        %v3826 = vunpack.c.h.b16 %v2372
        %v3827 = vunpack.c.l.b16 %v2373
        %v3828 = vunpack.c.h.b16 %v2373
        %v3829 = vunpack.c.l.b16 %v2374
        %v3830 = vunpack.c.h.b16 %v2374
        %v3831 = vunpack.c.l.b16 %v2375
        %v3832 = vunpack.c.h.b16 %v2375
        %v3833 = vunpack.c.l.b16 %v2376
        %v3834 = vunpack.c.h.b16 %v2376
        %v3835 = vunpack.c.l.b16 %v2377
        %v3836 = vunpack.c.h.b16 %v2377
        %v3837 = vunpack.c.l.b16 %v2378
        %v3838 = vunpack.c.h.b16 %v2378
        %v3839 = vunpack.c.l.b16 %v2379
        %v3840 = vunpack.c.h.b16 %v2379
        %v3841 = vunpack.c.l.b16 %v2380
        %v3842 = vunpack.c.h.b16 %v2380
        %v3843 = vunpack.c.l.b16 %v2381
        %v3844 = vunpack.c.h.b16 %v2381
        %v3845 = vunpack.c.l.b16 %v2382
        %v3846 = vunpack.c.h.b16 %v2382
        %v3847 = vunpack.c.l.b16 %v2383
        %v3848 = vunpack.c.h.b16 %v2383
        %v3849 = vunpack.c.l.b16 %v2384
        %v3850 = vunpack.c.h.b16 %v2384
        %v3851 = vunpack.c.l.b16 %v2385
        %v3852 = vunpack.c.h.b16 %v2385
        %v3853 = vunpack.c.l.b16 %v2386
        %v3854 = vunpack.c.h.b16 %v2386
        %v3855 = vunpack.c.l.b16 %v2387
        %v3856 = vunpack.c.h.b16 %v2387
        %v3857 = vunpack.c.l.b16 %v2388
        %v3858 = vunpack.c.h.b16 %v2388
        %v3859 = vunpack.c.l.b16 %v2389
        %v3860 = vunpack.c.h.b16 %v2389
        %v3861 = vunpack.c.l.b16 %v2390
        %v3862 = vunpack.c.h.b16 %v2390
        %v3863 = vunpack.c.l.b16 %v2391
        %v3864 = vunpack.c.h.b16 %v2391
        %v3865 = vunpack.c.l.b16 %v2392
        %v3866 = vunpack.c.h.b16 %v2392
        %v3867 = vunpack.c.l.b16 %v2393
        %v3868 = vunpack.c.h.b16 %v2393
        %v3869 = vunpack.c.l.b16 %v2394
        %v3870 = vunpack.c.h.b16 %v2394
        %v3871 = vunpack.c.l.b16 %v2395
        %v3872 = vunpack.c.h.b16 %v2395
        %v3873 = vunpack.c.l.b16 %v2396
        %v3874 = vunpack.c.h.b16 %v2396
        %v3875 = vunpack.c.l.b16 %v2397
        %v3876 = vunpack.c.h.b16 %v2397
        %v3877 = vunpack.c.l.b16 %v2398
        %v3878 = vunpack.c.h.b16 %v2398
        %v3879 = vunpack.c.l.b16 %v2399
        %v3880 = vunpack.c.h.b16 %v2399
        %v3881 = vunpack.c.l.b16 %v2400
        %v3882 = vunpack.c.h.b16 %v2400
        %v3883 = vunpack.c.l.b16 %v2401
        %v3884 = vunpack.c.h.b16 %v2401
        %v3885 = vunpack.c.l.b16 %v2402
        %v3886 = vunpack.c.h.b16 %v2402
        %v3887 = vunpack.c.l.b16 %v2403
        %v3888 = vunpack.c.h.b16 %v2403
        %v3889 = vunpack.c.l.b16 %v2404
        %v3890 = vunpack.c.h.b16 %v2404
        %v3891 = vunpack.c.l.b16 %v2405
        %v3892 = vunpack.c.h.b16 %v2405
        %v3893 = vunpack.c.l.b16 %v2406
        %v3894 = vunpack.c.h.b16 %v2406
        %v3895 = vunpack.c.l.b16 %v2407
        %v3896 = vunpack.c.h.b16 %v2407
        %v3897 = vunpack.c.l.b16 %v2408
        %v3898 = vunpack.c.h.b16 %v2408
        %v3899 = vunpack.c.l.b16 %v2409
        %v3900 = vunpack.c.h.b16 %v2409
        %v3901 = vunpack.c.l.b16 %v2410
        %v3902 = vunpack.c.h.b16 %v2410
        %v3903 = vunpack.c.l.b16 %v2411
        %v3904 = vunpack.c.h.b16 %v2411
        %v3905 = vunpack.c.l.b16 %v2412
        %v3906 = vunpack.c.h.b16 %v2412
        %v3907 = vunpack.c.l.b16 %v2413
        %v3908 = vunpack.c.h.b16 %v2413
        %v3909 = vunpack.c.l.b16 %v2414
        %v3910 = vunpack.c.h.b16 %v2414
        %v3911 = vunpack.c.l.b16 %v2415
        %v3912 = vunpack.c.h.b16 %v2415
        %v3913 = vunpack.c.l.b16 %v2416
        %v3914 = vunpack.c.h.b16 %v2416
        %v3915 = vunpack.c.l.b16 %v2417
        %v3916 = vunpack.c.h.b16 %v2417
        %v3917 = vunpack.c.l.b16 %v2418
        %v3918 = vunpack.c.h.b16 %v2418
        %v3919 = vunpack.c.l.b16 %v2419
        %v3920 = vunpack.c.h.b16 %v2419
        %v3921 = vunpack.c.l.b16 %v2420
        %v3922 = vunpack.c.h.b16 %v2420
        %v3923 = vunpack.c.l.b16 %v2421
        %v3924 = vunpack.c.h.b16 %v2421
        %v3925 = vunpack.c.l.b16 %v2422
        %v3926 = vunpack.c.h.b16 %v2422
        %v3927 = vunpack.c.l.b16 %v2423
        %v3928 = vunpack.c.h.b16 %v2423
        %v3929 = vunpack.c.l.b16 %v2424
        %v3930 = vunpack.c.h.b16 %v2424
        %v3931 = vunpack.c.l.b16 %v2425
        %v3932 = vunpack.c.h.b16 %v2425
        %v3933 = vunpack.c.l.b16 %v2426
        %v3934 = vunpack.c.h.b16 %v2426
        %v3935 = vunpack.c.l.b16 %v2427
        %v3936 = vunpack.c.h.b16 %v2427
        %v3937 = vunpack.c.l.b16 %v2428
        %v3938 = vunpack.c.h.b16 %v2428
        %v3939 = vunpack.c.l.b16 %v2429
        %v3940 = vunpack.c.h.b16 %v2429
        %v3941 = vunpack.c.l.b16 %v2430
        %v3942 = vunpack.c.h.b16 %v2430
        %v3943 = vunpack.c.l.b16 %v2431
        %v3944 = vunpack.c.h.b16 %v2431
        %v3945 = vunpack.c.l.b16 %v2432
        %v3946 = vunpack.c.h.b16 %v2432
        %v3947 = vunpack.c.l.b16 %v2433
        %v3948 = vunpack.c.h.b16 %v2433
        %v3949 = vunpack.c.l.b16 %v2434
        %v3950 = vunpack.c.h.b16 %v2434
        %v3951 = vunpack.c.l.b16 %v2435
        %v3952 = vunpack.c.h.b16 %v2435
        %v3953 = vunpack.c.l.b16 %v2436
        %v3954 = vunpack.c.h.b16 %v2436
        %v3955 = vunpack.c.l.b16 %v2437
        %v3956 = vunpack.c.h.b16 %v2437
        %v3957 = vunpack.c.l.b16 %v2438
        %v3958 = vunpack.c.h.b16 %v2438
        %v3959 = vunpack.c.l.b16 %v2439
        %v3960 = vunpack.c.h.b16 %v2439
        %v3961 = vunpack.c.l.b16 %v2440
        %v3962 = vunpack.c.h.b16 %v2440
        %v3963 = vunpack.c.l.b16 %v2441
        %v3964 = vunpack.c.h.b16 %v2441
        %v3965 = vunpack.c.l.b16 %v2442
        %v3966 = vunpack.c.h.b16 %v2442
        %v3967 = vunpack.c.l.b16 %v2443
        %v3968 = vunpack.c.h.b16 %v2443
        %v3969 = vunpack.c.l.b16 %v2444
        %v3970 = vunpack.c.h.b16 %v2444
        %v3971 = vunpack.c.l.b16 %v2445
        %v3972 = vunpack.c.h.b16 %v2445
        %v3973 = vunpack.c.l.b16 %v2446
        %v3974 = vunpack.c.h.b16 %v2446
        %v3975 = vunpack.c.l.b16 %v2447
        %v3976 = vunpack.c.h.b16 %v2447
        %v3977 = vunpack.c.l.b16 %v2448
        %v3978 = vunpack.c.h.b16 %v2448
        %v3979 = vunpack.c.l.b16 %v2449
        %v3980 = vunpack.c.h.b16 %v2449
        %v3981 = vunpack.c.l.b16 %v2450
        %v3982 = vunpack.c.h.b16 %v2450
        %v3983 = vunpack.c.l.b16 %v2451
        %v3984 = vunpack.c.h.b16 %v2451
        %v3985 = vunpack.c.l.b16 %v2452
        %v3986 = vunpack.c.h.b16 %v2452
        %v3987 = vunpack.c.l.b16 %v2453
        %v3988 = vunpack.c.h.b16 %v2453
        %v3989 = vunpack.c.l.b16 %v2454
        %v3990 = vunpack.c.h.b16 %v2454
        %v3991 = vunpack.c.l.b16 %v2455
        %v3992 = vunpack.c.h.b16 %v2455
        %v3993 = vunpack.c.l.b16 %v2456
        %v3994 = vunpack.c.h.b16 %v2456
        %v3995 = vunpack.c.l.b16 %v2457
        %v3996 = vunpack.c.h.b16 %v2457
        %v3997 = vunpack.c.l.b16 %v2458
        %v3998 = vunpack.c.h.b16 %v2458
        %v3999 = vunpack.c.l.b16 %v2459
        %v4000 = vunpack.c.h.b16 %v2459
        %v4001 = vunpack.c.l.b16 %v2460
        %v4002 = vunpack.c.h.b16 %v2460
        %v4003 = vunpack.c.l.b16 %v2461
        %v4004 = vunpack.c.h.b16 %v2461
        %v4005 = vunpack.c.l.b16 %v2462
        %v4006 = vunpack.c.h.b16 %v2462
        %v4007 = vunpack.c.l.b16 %v2463
        %v4008 = vunpack.c.h.b16 %v2463
        %v4009 = vunpack.c.l.b16 %v2464
        %v4010 = vunpack.c.h.b16 %v2464
        %v4011 = vunpack.c.l.b16 %v2465
        %v4012 = vunpack.c.h.b16 %v2465
        %v4013 = vunpack.c.l.b16 %v2466
        %v4014 = vunpack.c.h.b16 %v2466
        %v4015 = vunpack.c.l.b16 %v2467
        %v4016 = vunpack.c.h.b16 %v2467
        %v4017 = vunpack.c.l.b16 %v2468
        %v4018 = vunpack.c.h.b16 %v2468
        %v4019 = vunpack.c.l.b16 %v2469
        %v4020 = vunpack.c.h.b16 %v2469
        %v4021 = vunpack.c.l.b16 %v2470
        %v4022 = vunpack.c.h.b16 %v2470
        %v4023 = vunpack.c.l.b16 %v2471
        %v4024 = vunpack.c.h.b16 %v2471
        %v4025 = vunpack.c.l.b16 %v2472
        %v4026 = vunpack.c.h.b16 %v2472
        %v4027 = vunpack.c.l.b16 %v2473
        %v4028 = vunpack.c.h.b16 %v2473
        %v4029 = vunpack.c.l.b16 %v2474
        %v4030 = vunpack.c.h.b16 %v2474
        %v4031 = vunpack.c.l.b16 %v2475
        %v4032 = vunpack.c.h.b16 %v2475
        %v4033 = vunpack.c.l.b16 %v2476
        %v4034 = vunpack.c.h.b16 %v2476
        %v4035 = vunpack.c.l.b16 %v2477
        %v4036 = vunpack.c.h.b16 %v2477
        %v4037 = vunpack.c.l.b16 %v2478
        %v4038 = vunpack.c.h.b16 %v2478
        %v4039 = vunpack.c.l.b16 %v2479
        %v4040 = vunpack.c.h.b16 %v2479
        %v4041 = vunpack.c.l.b16 %v2480
        %v4042 = vunpack.c.h.b16 %v2480
        %v4043 = vunpack.c.l.b16 %v2481
        %v4044 = vunpack.c.h.b16 %v2481
        %v4045 = vunpack.c.l.b16 %v2482
        %v4046 = vunpack.c.h.b16 %v2482
        %v4047 = vunpack.c.l.b16 %v2483
        %v4048 = vunpack.c.h.b16 %v2483
        %v4049 = vunpack.c.l.b16 %v2484
        %v4050 = vunpack.c.h.b16 %v2484
        %v4051 = vunpack.c.l.b16 %v2485
        %v4052 = vunpack.c.h.b16 %v2485
        %v4053 = vunpack.c.l.b16 %v2486
        %v4054 = vunpack.c.h.b16 %v2486
        %v4055 = vunpack.c.l.b16 %v2487
        %v4056 = vunpack.c.h.b16 %v2487
        %v4057 = vunpack.c.l.b16 %v2488
        %v4058 = vunpack.c.h.b16 %v2488
        %v4059 = vunpack.c.l.b16 %v2489
        %v4060 = vunpack.c.h.b16 %v2489
        %v4061 = vunpack.c.l.b16 %v2490
        %v4062 = vunpack.c.h.b16 %v2490
        %v4063 = vpack.c.b16 %v3055, %v3039
        %v4064 = vpack.c.b16 %v3056, %v3040
        %v4065 = vpack.c.b16 %v3057, %v3041
        %v4066 = vpack.c.b16 %v3058, %v3042
        %v4067 = vpack.c.b16 %v3059, %v3043
        %v4068 = vpack.c.b16 %v3060, %v3044
        %v4069 = vpack.c.b16 %v3061, %v3045
        %v4070 = vpack.c.b16 %v3062, %v3046
        %v4071 = vpack.c.b16 %v3063, %v3047
        %v4072 = vpack.c.b16 %v3064, %v3048
        %v4073 = vpack.c.b16 %v3065, %v3049
        %v4074 = vpack.c.b16 %v3066, %v3050
        %v4075 = vpack.c.b16 %v3067, %v3051
        %v4076 = vpack.c.b16 %v3068, %v3052
        %v4077 = vpack.c.b16 %v3069, %v3053
        %v4078 = vpack.c.b16 %v3070, %v3054
        %v4079 = vpack.c.b16 %v3087, %v3071
        %v4080 = vpack.c.b16 %v3088, %v3072
        %v4081 = vpack.c.b16 %v3089, %v3073
        %v4082 = vpack.c.b16 %v3090, %v3074
        %v4083 = vpack.c.b16 %v3091, %v3075
        %v4084 = vpack.c.b16 %v3092, %v3076
        %v4085 = vpack.c.b16 %v3093, %v3077
        %v4086 = vpack.c.b16 %v3094, %v3078
        %v4087 = vpack.c.b16 %v3095, %v3079
        %v4088 = vpack.c.b16 %v3096, %v3080
        %v4089 = vpack.c.b16 %v3097, %v3081
        %v4090 = vpack.c.b16 %v3098, %v3082
        %v4091 = vpack.c.b16 %v3099, %v3083
        %v4092 = vpack.c.b16 %v3100, %v3084
        %v4093 = vpack.c.b16 %v3101, %v3085
        %v4094 = vpack.c.b16 %v3102, %v3086
        %v4095 = vpack.c.b16 %v3119, %v3103
        %v4096 = vpack.c.b16 %v3120, %v3104
        %v4097 = vpack.c.b16 %v3121, %v3105
        %v4098 = vpack.c.b16 %v3122, %v3106
        %v4099 = vpack.c.b16 %v3123, %v3107
        %v4100 = vpack.c.b16 %v3124, %v3108
        %v4101 = vpack.c.b16 %v3125, %v3109
        %v4102 = vpack.c.b16 %v3126, %v3110
        %v4103 = vpack.c.b16 %v3127, %v3111
        %v4104 = vpack.c.b16 %v3128, %v3112
        %v4105 = vpack.c.b16 %v3129, %v3113
        %v4106 = vpack.c.b16 %v3130, %v3114
        %v4107 = vpack.c.b16 %v3131, %v3115
        %v4108 = vpack.c.b16 %v3132, %v3116
        %v4109 = vpack.c.b16 %v3133, %v3117
        %v4110 = vpack.c.b16 %v3134, %v3118
        %v4111 = vpack.c.b16 %v3151, %v3135
        %v4112 = vpack.c.b16 %v3152, %v3136
        %v4113 = vpack.c.b16 %v3153, %v3137
        %v4114 = vpack.c.b16 %v3154, %v3138
        %v4115 = vpack.c.b16 %v3155, %v3139
        %v4116 = vpack.c.b16 %v3156, %v3140
        %v4117 = vpack.c.b16 %v3157, %v3141
        %v4118 = vpack.c.b16 %v3158, %v3142
        %v4119 = vpack.c.b16 %v3159, %v3143
        %v4120 = vpack.c.b16 %v3160, %v3144
        %v4121 = vpack.c.b16 %v3161, %v3145
        %v4122 = vpack.c.b16 %v3162, %v3146
        %v4123 = vpack.c.b16 %v3163, %v3147
        %v4124 = vpack.c.b16 %v3164, %v3148
        %v4125 = vpack.c.b16 %v3165, %v3149
        %v4126 = vpack.c.b16 %v3166, %v3150
        %v4127 = vpack.c.b16 %v3183, %v3167
        %v4128 = vpack.c.b16 %v3184, %v3168
        %v4129 = vpack.c.b16 %v3185, %v3169
        %v4130 = vpack.c.b16 %v3186, %v3170
        %v4131 = vpack.c.b16 %v3187, %v3171
        %v4132 = vpack.c.b16 %v3188, %v3172
        %v4133 = vpack.c.b16 %v3189, %v3173
        %v4134 = vpack.c.b16 %v3190, %v3174
        %v4135 = vpack.c.b16 %v3191, %v3175
        %v4136 = vpack.c.b16 %v3192, %v3176
        %v4137 = vpack.c.b16 %v3193, %v3177
        %v4138 = vpack.c.b16 %v3194, %v3178
        %v4139 = vpack.c.b16 %v3195, %v3179
        %v4140 = vpack.c.b16 %v3196, %v3180
        %v4141 = vpack.c.b16 %v3197, %v3181
        %v4142 = vpack.c.b16 %v3198, %v3182
        %v4143 = vpack.c.b16 %v3215, %v3199
        %v4144 = vpack.c.b16 %v3216, %v3200
        %v4145 = vpack.c.b16 %v3217, %v3201
        %v4146 = vpack.c.b16 %v3218, %v3202
        %v4147 = vpack.c.b16 %v3219, %v3203
        %v4148 = vpack.c.b16 %v3220, %v3204
        %v4149 = vpack.c.b16 %v3221, %v3205
        %v4150 = vpack.c.b16 %v3222, %v3206
        %v4151 = vpack.c.b16 %v3223, %v3207
        %v4152 = vpack.c.b16 %v3224, %v3208
        %v4153 = vpack.c.b16 %v3225, %v3209
        %v4154 = vpack.c.b16 %v3226, %v3210
        %v4155 = vpack.c.b16 %v3227, %v3211
        %v4156 = vpack.c.b16 %v3228, %v3212
        %v4157 = vpack.c.b16 %v3229, %v3213
        %v4158 = vpack.c.b16 %v3230, %v3214
        %v4159 = vpack.c.b16 %v3247, %v3231
        %v4160 = vpack.c.b16 %v3248, %v3232
        %v4161 = vpack.c.b16 %v3249, %v3233
        %v4162 = vpack.c.b16 %v3250, %v3234
        %v4163 = vpack.c.b16 %v3251, %v3235
        %v4164 = vpack.c.b16 %v3252, %v3236
        %v4165 = vpack.c.b16 %v3253, %v3237
        %v4166 = vpack.c.b16 %v3254, %v3238
        %v4167 = vpack.c.b16 %v3255, %v3239
        %v4168 = vpack.c.b16 %v3256, %v3240
        %v4169 = vpack.c.b16 %v3257, %v3241
        %v4170 = vpack.c.b16 %v3258, %v3242
        %v4171 = vpack.c.b16 %v3259, %v3243
        %v4172 = vpack.c.b16 %v3260, %v3244
        %v4173 = vpack.c.b16 %v3261, %v3245
        %v4174 = vpack.c.b16 %v3262, %v3246
        %v4175 = vpack.c.b16 %v3279, %v3263
        %v4176 = vpack.c.b16 %v3280, %v3264
        %v4177 = vpack.c.b16 %v3281, %v3265
        %v4178 = vpack.c.b16 %v3282, %v3266
        %v4179 = vpack.c.b16 %v3283, %v3267
        %v4180 = vpack.c.b16 %v3284, %v3268
        %v4181 = vpack.c.b16 %v3285, %v3269
        %v4182 = vpack.c.b16 %v3286, %v3270
        %v4183 = vpack.c.b16 %v3287, %v3271
        %v4184 = vpack.c.b16 %v3288, %v3272
        %v4185 = vpack.c.b16 %v3289, %v3273
        %v4186 = vpack.c.b16 %v3290, %v3274
        %v4187 = vpack.c.b16 %v3291, %v3275
        %v4188 = vpack.c.b16 %v3292, %v3276
        %v4189 = vpack.c.b16 %v3293, %v3277
        %v4190 = vpack.c.b16 %v3294, %v3278
        %v4191 = vpack.c.b16 %v3311, %v3295
        %v4192 = vpack.c.b16 %v3312, %v3296
        %v4193 = vpack.c.b16 %v3313, %v3297
        %v4194 = vpack.c.b16 %v3314, %v3298
        %v4195 = vpack.c.b16 %v3315, %v3299
        %v4196 = vpack.c.b16 %v3316, %v3300
        %v4197 = vpack.c.b16 %v3317, %v3301
        %v4198 = vpack.c.b16 %v3318, %v3302
        %v4199 = vpack.c.b16 %v3319, %v3303
        %v4200 = vpack.c.b16 %v3320, %v3304
        %v4201 = vpack.c.b16 %v3321, %v3305
        %v4202 = vpack.c.b16 %v3322, %v3306
        %v4203 = vpack.c.b16 %v3323, %v3307
        %v4204 = vpack.c.b16 %v3324, %v3308
        %v4205 = vpack.c.b16 %v3325, %v3309
        %v4206 = vpack.c.b16 %v3326, %v3310
        %v4207 = vpack.c.b16 %v3343, %v3327
        %v4208 = vpack.c.b16 %v3344, %v3328
        %v4209 = vpack.c.b16 %v3345, %v3329
        %v4210 = vpack.c.b16 %v3346, %v3330
        %v4211 = vpack.c.b16 %v3347, %v3331
        %v4212 = vpack.c.b16 %v3348, %v3332
        %v4213 = vpack.c.b16 %v3349, %v3333
        %v4214 = vpack.c.b16 %v3350, %v3334
        %v4215 = vpack.c.b16 %v3351, %v3335
        %v4216 = vpack.c.b16 %v3352, %v3336
        %v4217 = vpack.c.b16 %v3353, %v3337
        %v4218 = vpack.c.b16 %v3354, %v3338
        %v4219 = vpack.c.b16 %v3355, %v3339
        %v4220 = vpack.c.b16 %v3356, %v3340
        %v4221 = vpack.c.b16 %v3357, %v3341
        %v4222 = vpack.c.b16 %v3358, %v3342
        %v4223 = vpack.c.b16 %v3375, %v3359
        %v4224 = vpack.c.b16 %v3376, %v3360
        %v4225 = vpack.c.b16 %v3377, %v3361
        %v4226 = vpack.c.b16 %v3378, %v3362
        %v4227 = vpack.c.b16 %v3379, %v3363
        %v4228 = vpack.c.b16 %v3380, %v3364
        %v4229 = vpack.c.b16 %v3381, %v3365
        %v4230 = vpack.c.b16 %v3382, %v3366
        %v4231 = vpack.c.b16 %v3383, %v3367
        %v4232 = vpack.c.b16 %v3384, %v3368
        %v4233 = vpack.c.b16 %v3385, %v3369
        %v4234 = vpack.c.b16 %v3386, %v3370
        %v4235 = vpack.c.b16 %v3387, %v3371
        %v4236 = vpack.c.b16 %v3388, %v3372
        %v4237 = vpack.c.b16 %v3389, %v3373
        %v4238 = vpack.c.b16 %v3390, %v3374
        %v4239 = vpack.c.b16 %v3407, %v3391
        %v4240 = vpack.c.b16 %v3408, %v3392
        %v4241 = vpack.c.b16 %v3409, %v3393
        %v4242 = vpack.c.b16 %v3410, %v3394
        %v4243 = vpack.c.b16 %v3411, %v3395
        %v4244 = vpack.c.b16 %v3412, %v3396
        %v4245 = vpack.c.b16 %v3413, %v3397
        %v4246 = vpack.c.b16 %v3414, %v3398
        %v4247 = vpack.c.b16 %v3415, %v3399
        %v4248 = vpack.c.b16 %v3416, %v3400
        %v4249 = vpack.c.b16 %v3417, %v3401
        %v4250 = vpack.c.b16 %v3418, %v3402
        %v4251 = vpack.c.b16 %v3419, %v3403
        %v4252 = vpack.c.b16 %v3420, %v3404
        %v4253 = vpack.c.b16 %v3421, %v3405
        %v4254 = vpack.c.b16 %v3422, %v3406
        %v4255 = vpack.c.b16 %v3439, %v3423
        %v4256 = vpack.c.b16 %v3440, %v3424
        %v4257 = vpack.c.b16 %v3441, %v3425
        %v4258 = vpack.c.b16 %v3442, %v3426
        %v4259 = vpack.c.b16 %v3443, %v3427
        %v4260 = vpack.c.b16 %v3444, %v3428
        %v4261 = vpack.c.b16 %v3445, %v3429
        %v4262 = vpack.c.b16 %v3446, %v3430
        %v4263 = vpack.c.b16 %v3447, %v3431
        %v4264 = vpack.c.b16 %v3448, %v3432
        %v4265 = vpack.c.b16 %v3449, %v3433
        %v4266 = vpack.c.b16 %v3450, %v3434
        %v4267 = vpack.c.b16 %v3451, %v3435
        %v4268 = vpack.c.b16 %v3452, %v3436
        %v4269 = vpack.c.b16 %v3453, %v3437
        %v4270 = vpack.c.b16 %v3454, %v3438
        %v4271 = vpack.c.b16 %v3471, %v3455
        %v4272 = vpack.c.b16 %v3472, %v3456
        %v4273 = vpack.c.b16 %v3473, %v3457
        %v4274 = vpack.c.b16 %v3474, %v3458
        %v4275 = vpack.c.b16 %v3475, %v3459
        %v4276 = vpack.c.b16 %v3476, %v3460
        %v4277 = vpack.c.b16 %v3477, %v3461
        %v4278 = vpack.c.b16 %v3478, %v3462
        %v4279 = vpack.c.b16 %v3479, %v3463
        %v4280 = vpack.c.b16 %v3480, %v3464
        %v4281 = vpack.c.b16 %v3481, %v3465
        %v4282 = vpack.c.b16 %v3482, %v3466
        %v4283 = vpack.c.b16 %v3483, %v3467
        %v4284 = vpack.c.b16 %v3484, %v3468
        %v4285 = vpack.c.b16 %v3485, %v3469
        %v4286 = vpack.c.b16 %v3486, %v3470
        %v4287 = vpack.c.b16 %v3503, %v3487
        %v4288 = vpack.c.b16 %v3504, %v3488
        %v4289 = vpack.c.b16 %v3505, %v3489
        %v4290 = vpack.c.b16 %v3506, %v3490
        %v4291 = vpack.c.b16 %v3507, %v3491
        %v4292 = vpack.c.b16 %v3508, %v3492
        %v4293 = vpack.c.b16 %v3509, %v3493
        %v4294 = vpack.c.b16 %v3510, %v3494
        %v4295 = vpack.c.b16 %v3511, %v3495
        %v4296 = vpack.c.b16 %v3512, %v3496
        %v4297 = vpack.c.b16 %v3513, %v3497
        %v4298 = vpack.c.b16 %v3514, %v3498
        %v4299 = vpack.c.b16 %v3515, %v3499
        %v4300 = vpack.c.b16 %v3516, %v3500
        %v4301 = vpack.c.b16 %v3517, %v3501
        %v4302 = vpack.c.b16 %v3518, %v3502
        %v4303 = vpack.c.b16 %v3535, %v3519
        %v4304 = vpack.c.b16 %v3536, %v3520
        %v4305 = vpack.c.b16 %v3537, %v3521
        %v4306 = vpack.c.b16 %v3538, %v3522
        %v4307 = vpack.c.b16 %v3539, %v3523
        %v4308 = vpack.c.b16 %v3540, %v3524
        %v4309 = vpack.c.b16 %v3541, %v3525
        %v4310 = vpack.c.b16 %v3542, %v3526
        %v4311 = vpack.c.b16 %v3543, %v3527
        %v4312 = vpack.c.b16 %v3544, %v3528
        %v4313 = vpack.c.b16 %v3545, %v3529
        %v4314 = vpack.c.b16 %v3546, %v3530
        %v4315 = vpack.c.b16 %v3547, %v3531
        %v4316 = vpack.c.b16 %v3548, %v3532
        %v4317 = vpack.c.b16 %v3549, %v3533
        %v4318 = vpack.c.b16 %v3550, %v3534
        %v4319 = vpack.c.b16 %v3567, %v3551
        %v4320 = vpack.c.b16 %v3568, %v3552
        %v4321 = vpack.c.b16 %v3569, %v3553
        %v4322 = vpack.c.b16 %v3570, %v3554
        %v4323 = vpack.c.b16 %v3571, %v3555
        %v4324 = vpack.c.b16 %v3572, %v3556
        %v4325 = vpack.c.b16 %v3573, %v3557
        %v4326 = vpack.c.b16 %v3574, %v3558
        %v4327 = vpack.c.b16 %v3575, %v3559
        %v4328 = vpack.c.b16 %v3576, %v3560
        %v4329 = vpack.c.b16 %v3577, %v3561
        %v4330 = vpack.c.b16 %v3578, %v3562
        %v4331 = vpack.c.b16 %v3579, %v3563
        %v4332 = vpack.c.b16 %v3580, %v3564
        %v4333 = vpack.c.b16 %v3581, %v3565
        %v4334 = vpack.c.b16 %v3582, %v3566
        %v4335 = vpack.c.b16 %v3599, %v3583
        %v4336 = vpack.c.b16 %v3600, %v3584
        %v4337 = vpack.c.b16 %v3601, %v3585
        %v4338 = vpack.c.b16 %v3602, %v3586
        %v4339 = vpack.c.b16 %v3603, %v3587
        %v4340 = vpack.c.b16 %v3604, %v3588
        %v4341 = vpack.c.b16 %v3605, %v3589
        %v4342 = vpack.c.b16 %v3606, %v3590
        %v4343 = vpack.c.b16 %v3607, %v3591
        %v4344 = vpack.c.b16 %v3608, %v3592
        %v4345 = vpack.c.b16 %v3609, %v3593
        %v4346 = vpack.c.b16 %v3610, %v3594
        %v4347 = vpack.c.b16 %v3611, %v3595
        %v4348 = vpack.c.b16 %v3612, %v3596
        %v4349 = vpack.c.b16 %v3613, %v3597
        %v4350 = vpack.c.b16 %v3614, %v3598
        %v4351 = vpack.c.b16 %v3631, %v3615
        %v4352 = vpack.c.b16 %v3632, %v3616
        %v4353 = vpack.c.b16 %v3633, %v3617
        %v4354 = vpack.c.b16 %v3634, %v3618
        %v4355 = vpack.c.b16 %v3635, %v3619
        %v4356 = vpack.c.b16 %v3636, %v3620
        %v4357 = vpack.c.b16 %v3637, %v3621
        %v4358 = vpack.c.b16 %v3638, %v3622
        %v4359 = vpack.c.b16 %v3639, %v3623
        %v4360 = vpack.c.b16 %v3640, %v3624
        %v4361 = vpack.c.b16 %v3641, %v3625
        %v4362 = vpack.c.b16 %v3642, %v3626
        %v4363 = vpack.c.b16 %v3643, %v3627
        %v4364 = vpack.c.b16 %v3644, %v3628
        %v4365 = vpack.c.b16 %v3645, %v3629
        %v4366 = vpack.c.b16 %v3646, %v3630
        %v4367 = vpack.c.b16 %v3663, %v3647
        %v4368 = vpack.c.b16 %v3664, %v3648
        %v4369 = vpack.c.b16 %v3665, %v3649
        %v4370 = vpack.c.b16 %v3666, %v3650
        %v4371 = vpack.c.b16 %v3667, %v3651
        %v4372 = vpack.c.b16 %v3668, %v3652
        %v4373 = vpack.c.b16 %v3669, %v3653
        %v4374 = vpack.c.b16 %v3670, %v3654
        %v4375 = vpack.c.b16 %v3671, %v3655
        %v4376 = vpack.c.b16 %v3672, %v3656
        %v4377 = vpack.c.b16 %v3673, %v3657
        %v4378 = vpack.c.b16 %v3674, %v3658
        %v4379 = vpack.c.b16 %v3675, %v3659
        %v4380 = vpack.c.b16 %v3676, %v3660
        %v4381 = vpack.c.b16 %v3677, %v3661
        %v4382 = vpack.c.b16 %v3678, %v3662
        %v4383 = vpack.c.b16 %v3695, %v3679
        %v4384 = vpack.c.b16 %v3696, %v3680
        %v4385 = vpack.c.b16 %v3697, %v3681
        %v4386 = vpack.c.b16 %v3698, %v3682
        %v4387 = vpack.c.b16 %v3699, %v3683
        %v4388 = vpack.c.b16 %v3700, %v3684
        %v4389 = vpack.c.b16 %v3701, %v3685
        %v4390 = vpack.c.b16 %v3702, %v3686
        %v4391 = vpack.c.b16 %v3703, %v3687
        %v4392 = vpack.c.b16 %v3704, %v3688
        %v4393 = vpack.c.b16 %v3705, %v3689
        %v4394 = vpack.c.b16 %v3706, %v3690
        %v4395 = vpack.c.b16 %v3707, %v3691
        %v4396 = vpack.c.b16 %v3708, %v3692
        %v4397 = vpack.c.b16 %v3709, %v3693
        %v4398 = vpack.c.b16 %v3710, %v3694
        %v4399 = vpack.c.b16 %v3727, %v3711
        %v4400 = vpack.c.b16 %v3728, %v3712
        %v4401 = vpack.c.b16 %v3729, %v3713
        %v4402 = vpack.c.b16 %v3730, %v3714
        %v4403 = vpack.c.b16 %v3731, %v3715
        %v4404 = vpack.c.b16 %v3732, %v3716
        %v4405 = vpack.c.b16 %v3733, %v3717
        %v4406 = vpack.c.b16 %v3734, %v3718
        %v4407 = vpack.c.b16 %v3735, %v3719
        %v4408 = vpack.c.b16 %v3736, %v3720
        %v4409 = vpack.c.b16 %v3737, %v3721
        %v4410 = vpack.c.b16 %v3738, %v3722
        %v4411 = vpack.c.b16 %v3739, %v3723
        %v4412 = vpack.c.b16 %v3740, %v3724
        %v4413 = vpack.c.b16 %v3741, %v3725
        %v4414 = vpack.c.b16 %v3742, %v3726
        %v4415 = vpack.c.b16 %v3759, %v3743
        %v4416 = vpack.c.b16 %v3760, %v3744
        %v4417 = vpack.c.b16 %v3761, %v3745
        %v4418 = vpack.c.b16 %v3762, %v3746
        %v4419 = vpack.c.b16 %v3763, %v3747
        %v4420 = vpack.c.b16 %v3764, %v3748
        %v4421 = vpack.c.b16 %v3765, %v3749
        %v4422 = vpack.c.b16 %v3766, %v3750
        %v4423 = vpack.c.b16 %v3767, %v3751
        %v4424 = vpack.c.b16 %v3768, %v3752
        %v4425 = vpack.c.b16 %v3769, %v3753
        %v4426 = vpack.c.b16 %v3770, %v3754
        %v4427 = vpack.c.b16 %v3771, %v3755
        %v4428 = vpack.c.b16 %v3772, %v3756
        %v4429 = vpack.c.b16 %v3773, %v3757
        %v4430 = vpack.c.b16 %v3774, %v3758
        %v4431 = vpack.c.b16 %v3791, %v3775
        %v4432 = vpack.c.b16 %v3792, %v3776
        %v4433 = vpack.c.b16 %v3793, %v3777
        %v4434 = vpack.c.b16 %v3794, %v3778
        %v4435 = vpack.c.b16 %v3795, %v3779
        %v4436 = vpack.c.b16 %v3796, %v3780
        %v4437 = vpack.c.b16 %v3797, %v3781
        %v4438 = vpack.c.b16 %v3798, %v3782
        %v4439 = vpack.c.b16 %v3799, %v3783
        %v4440 = vpack.c.b16 %v3800, %v3784
        %v4441 = vpack.c.b16 %v3801, %v3785
        %v4442 = vpack.c.b16 %v3802, %v3786
        %v4443 = vpack.c.b16 %v3803, %v3787
        %v4444 = vpack.c.b16 %v3804, %v3788
        %v4445 = vpack.c.b16 %v3805, %v3789
        %v4446 = vpack.c.b16 %v3806, %v3790
        %v4447 = vpack.c.b16 %v3823, %v3807
        %v4448 = vpack.c.b16 %v3824, %v3808
        %v4449 = vpack.c.b16 %v3825, %v3809
        %v4450 = vpack.c.b16 %v3826, %v3810
        %v4451 = vpack.c.b16 %v3827, %v3811
        %v4452 = vpack.c.b16 %v3828, %v3812
        %v4453 = vpack.c.b16 %v3829, %v3813
        %v4454 = vpack.c.b16 %v3830, %v3814
        %v4455 = vpack.c.b16 %v3831, %v3815
        %v4456 = vpack.c.b16 %v3832, %v3816
        %v4457 = vpack.c.b16 %v3833, %v3817
        %v4458 = vpack.c.b16 %v3834, %v3818
        %v4459 = vpack.c.b16 %v3835, %v3819
        %v4460 = vpack.c.b16 %v3836, %v3820
        %v4461 = vpack.c.b16 %v3837, %v3821
        %v4462 = vpack.c.b16 %v3838, %v3822
        %v4463 = vpack.c.b16 %v3855, %v3839
        %v4464 = vpack.c.b16 %v3856, %v3840
        %v4465 = vpack.c.b16 %v3857, %v3841
        %v4466 = vpack.c.b16 %v3858, %v3842
        %v4467 = vpack.c.b16 %v3859, %v3843
        %v4468 = vpack.c.b16 %v3860, %v3844
        %v4469 = vpack.c.b16 %v3861, %v3845
        %v4470 = vpack.c.b16 %v3862, %v3846
        %v4471 = vpack.c.b16 %v3863, %v3847
        %v4472 = vpack.c.b16 %v3864, %v3848
        %v4473 = vpack.c.b16 %v3865, %v3849
        %v4474 = vpack.c.b16 %v3866, %v3850
        %v4475 = vpack.c.b16 %v3867, %v3851
        %v4476 = vpack.c.b16 %v3868, %v3852
        %v4477 = vpack.c.b16 %v3869, %v3853
        %v4478 = vpack.c.b16 %v3870, %v3854
        %v4479 = vpack.c.b16 %v3887, %v3871
        %v4480 = vpack.c.b16 %v3888, %v3872
        %v4481 = vpack.c.b16 %v3889, %v3873
        %v4482 = vpack.c.b16 %v3890, %v3874
        %v4483 = vpack.c.b16 %v3891, %v3875
        %v4484 = vpack.c.b16 %v3892, %v3876
        %v4485 = vpack.c.b16 %v3893, %v3877
        %v4486 = vpack.c.b16 %v3894, %v3878
        %v4487 = vpack.c.b16 %v3895, %v3879
        %v4488 = vpack.c.b16 %v3896, %v3880
        %v4489 = vpack.c.b16 %v3897, %v3881
        %v4490 = vpack.c.b16 %v3898, %v3882
        %v4491 = vpack.c.b16 %v3899, %v3883
        %v4492 = vpack.c.b16 %v3900, %v3884
        %v4493 = vpack.c.b16 %v3901, %v3885
        %v4494 = vpack.c.b16 %v3902, %v3886
        %v4495 = vpack.c.b16 %v3919, %v3903
        %v4496 = vpack.c.b16 %v3920, %v3904
        %v4497 = vpack.c.b16 %v3921, %v3905
        %v4498 = vpack.c.b16 %v3922, %v3906
        %v4499 = vpack.c.b16 %v3923, %v3907
        %v4500 = vpack.c.b16 %v3924, %v3908
        %v4501 = vpack.c.b16 %v3925, %v3909
        %v4502 = vpack.c.b16 %v3926, %v3910
        %v4503 = vpack.c.b16 %v3927, %v3911
        %v4504 = vpack.c.b16 %v3928, %v3912
        %v4505 = vpack.c.b16 %v3929, %v3913
        %v4506 = vpack.c.b16 %v3930, %v3914
        %v4507 = vpack.c.b16 %v3931, %v3915
        %v4508 = vpack.c.b16 %v3932, %v3916
        %v4509 = vpack.c.b16 %v3933, %v3917
        %v4510 = vpack.c.b16 %v3934, %v3918
        %v4511 = vpack.c.b16 %v3951, %v3935
        %v4512 = vpack.c.b16 %v3952, %v3936
        %v4513 = vpack.c.b16 %v3953, %v3937
        %v4514 = vpack.c.b16 %v3954, %v3938
        %v4515 = vpack.c.b16 %v3955, %v3939
        %v4516 = vpack.c.b16 %v3956, %v3940
        %v4517 = vpack.c.b16 %v3957, %v3941
        %v4518 = vpack.c.b16 %v3958, %v3942
        %v4519 = vpack.c.b16 %v3959, %v3943
        %v4520 = vpack.c.b16 %v3960, %v3944
        %v4521 = vpack.c.b16 %v3961, %v3945
        %v4522 = vpack.c.b16 %v3962, %v3946
        %v4523 = vpack.c.b16 %v3963, %v3947
        %v4524 = vpack.c.b16 %v3964, %v3948
        %v4525 = vpack.c.b16 %v3965, %v3949
        %v4526 = vpack.c.b16 %v3966, %v3950
        %v4527 = vpack.c.b16 %v3983, %v3967
        %v4528 = vpack.c.b16 %v3984, %v3968
        %v4529 = vpack.c.b16 %v3985, %v3969
        %v4530 = vpack.c.b16 %v3986, %v3970
        %v4531 = vpack.c.b16 %v3987, %v3971
        %v4532 = vpack.c.b16 %v3988, %v3972
        %v4533 = vpack.c.b16 %v3989, %v3973
        %v4534 = vpack.c.b16 %v3990, %v3974
        %v4535 = vpack.c.b16 %v3991, %v3975
        %v4536 = vpack.c.b16 %v3992, %v3976
        %v4537 = vpack.c.b16 %v3993, %v3977
        %v4538 = vpack.c.b16 %v3994, %v3978
        %v4539 = vpack.c.b16 %v3995, %v3979
        %v4540 = vpack.c.b16 %v3996, %v3980
        %v4541 = vpack.c.b16 %v3997, %v3981
        %v4542 = vpack.c.b16 %v3998, %v3982
        %v4543 = vpack.c.b16 %v4015, %v3999
        %v4544 = vpack.c.b16 %v4016, %v4000
        %v4545 = vpack.c.b16 %v4017, %v4001
        %v4546 = vpack.c.b16 %v4018, %v4002
        %v4547 = vpack.c.b16 %v4019, %v4003
        %v4548 = vpack.c.b16 %v4020, %v4004
        %v4549 = vpack.c.b16 %v4021, %v4005
        %v4550 = vpack.c.b16 %v4022, %v4006
        %v4551 = vpack.c.b16 %v4023, %v4007
        %v4552 = vpack.c.b16 %v4024, %v4008
        %v4553 = vpack.c.b16 %v4025, %v4009
        %v4554 = vpack.c.b16 %v4026, %v4010
        %v4555 = vpack.c.b16 %v4027, %v4011
        %v4556 = vpack.c.b16 %v4028, %v4012
        %v4557 = vpack.c.b16 %v4029, %v4013
        %v4558 = vpack.c.b16 %v4030, %v4014
        %v4559 = vpack.c.b16 %v4047, %v4031
        %v4560 = vpack.c.b16 %v4048, %v4032
        %v4561 = vpack.c.b16 %v4049, %v4033
        %v4562 = vpack.c.b16 %v4050, %v4034
        %v4563 = vpack.c.b16 %v4051, %v4035
        %v4564 = vpack.c.b16 %v4052, %v4036
        %v4565 = vpack.c.b16 %v4053, %v4037
        %v4566 = vpack.c.b16 %v4054, %v4038
        %v4567 = vpack.c.b16 %v4055, %v4039
        %v4568 = vpack.c.b16 %v4056, %v4040
        %v4569 = vpack.c.b16 %v4057, %v4041
        %v4570 = vpack.c.b16 %v4058, %v4042
        %v4571 = vpack.c.b16 %v4059, %v4043
        %v4572 = vpack.c.b16 %v4060, %v4044
        %v4573 = vpack.c.b16 %v4061, %v4045
        %v4574 = vpack.c.b16 %v4062, %v4046
        %5087 = vmatpush.bf16.msra.mxu0 %v4175
        %5088 = vmatpush.bf16.msra.mxu0 %v4159
        %5089 = vmatpush.bf16.msra.mxu0 %v4143
        %5090 = vmatpush.bf16.msra.mxu0 %v4127
        %5091 = vmatpush.bf16.msra.mxu0 %v4111
        %5092 = vmatpush.bf16.msra.mxu0 %v4095
        %5093 = vmatpush.bf16.msra.mxu0 %v4079
        %5094 = vmatpush.bf16.msra.mxu0 %v4063
        %5095 = vmatmul.bf16.gmra.mxu0 %v1975
        %v5096 = vpop.f32.mrf.mxu0
        %v5097 = vadd.f32 %v2495, %v5096
        %v5098 = vpop.f32.mrf.mxu0
        %v5099 = vadd.f32 %v2495, %v5098
        %5100 = vdwg.mxu0
        %5101 = vmatpush.bf16.msra.mxu0 %v4303
        %5102 = vmatpush.bf16.msra.mxu0 %v4287
        %5103 = vmatpush.bf16.msra.mxu0 %v4271
        %5104 = vmatpush.bf16.msra.mxu0 %v4255
        %5105 = vmatpush.bf16.msra.mxu0 %v4239
        %5106 = vmatpush.bf16.msra.mxu0 %v4223
        %5107 = vmatpush.bf16.msra.mxu0 %v4207
        %5108 = vmatpush.bf16.msra.mxu0 %v4191
        %5109 = vmatmul.bf16.gmra.mxu0 %v1976
        %v5110 = vpop.f32.mrf.mxu0
        %v5111 = vadd.f32 %v5097, %v5110
        %v5112 = vpop.f32.mrf.mxu0
        %v5113 = vadd.f32 %v5099, %v5112
        %5114 = vdwg.mxu0
        %5115 = vmatpush.bf16.msra.mxu0 %v4431
        %5116 = vmatpush.bf16.msra.mxu0 %v4415
        %5117 = vmatpush.bf16.msra.mxu0 %v4399
        %5118 = vmatpush.bf16.msra.mxu0 %v4383
        %5119 = vmatpush.bf16.msra.mxu0 %v4367
        %5120 = vmatpush.bf16.msra.mxu0 %v4351
        %5121 = vmatpush.bf16.msra.mxu0 %v4335
        %5122 = vmatpush.bf16.msra.mxu0 %v4319
        %5123 = vmatmul.bf16.gmra.mxu0 %v1977
        %v5124 = vpop.f32.mrf.mxu0
        %v5125 = vadd.f32 %v5111, %v5124
        %v5126 = vpop.f32.mrf.mxu0
        %v5127 = vadd.f32 %v5113, %v5126
        %5128 = vdwg.mxu0
        %5129 = vmatpush.bf16.msra.mxu0 %v4559
        %5130 = vmatpush.bf16.msra.mxu0 %v4543
        %5131 = vmatpush.bf16.msra.mxu0 %v4527
        %5132 = vmatpush.bf16.msra.mxu0 %v4511
        %5133 = vmatpush.bf16.msra.mxu0 %v4495
        %5134 = vmatpush.bf16.msra.mxu0 %v4479
        %5135 = vmatpush.bf16.msra.mxu0 %v4463
        %5136 = vmatpush.bf16.msra.mxu0 %v4447
        %5137 = vmatmul.bf16.gmra.mxu0 %v1978
        %v5138 = vpop.f32.mrf.mxu0
        %v5139 = vadd.f32 %v5125, %v5138
        %v5140 = vpop.f32.mrf.mxu0
        %v5141 = vadd.f32 %v5127, %v5140
        %5142 = vdwg.mxu0
        %5143 = vmatpush.bf16.msra.mxu0 %v4176
        %5144 = vmatpush.bf16.msra.mxu0 %v4160
        %5145 = vmatpush.bf16.msra.mxu0 %v4144
        %5146 = vmatpush.bf16.msra.mxu0 %v4128
        %5147 = vmatpush.bf16.msra.mxu0 %v4112
        %5148 = vmatpush.bf16.msra.mxu0 %v4096
        %5149 = vmatpush.bf16.msra.mxu0 %v4080
        %5150 = vmatpush.bf16.msra.mxu0 %v4064
        %5151 = vmatmul.bf16.gmra.mxu0 %v1975
        %v5152 = vpop.f32.mrf.mxu0
        %v5153 = vadd.f32 %v2496, %v5152
        %v5154 = vpop.f32.mrf.mxu0
        %v5155 = vadd.f32 %v2496, %v5154
        %5156 = vdwg.mxu0
        %5157 = vmatpush.bf16.msra.mxu0 %v4304
        %5158 = vmatpush.bf16.msra.mxu0 %v4288
        %5159 = vmatpush.bf16.msra.mxu0 %v4272
        %5160 = vmatpush.bf16.msra.mxu0 %v4256
        %5161 = vmatpush.bf16.msra.mxu0 %v4240
        %5162 = vmatpush.bf16.msra.mxu0 %v4224
        %5163 = vmatpush.bf16.msra.mxu0 %v4208
        %5164 = vmatpush.bf16.msra.mxu0 %v4192
        %5165 = vmatmul.bf16.gmra.mxu0 %v1976
        %v5166 = vpop.f32.mrf.mxu0
        %v5167 = vadd.f32 %v5153, %v5166
        %v5168 = vpop.f32.mrf.mxu0
        %v5169 = vadd.f32 %v5155, %v5168
        %5170 = vdwg.mxu0
        %5171 = vmatpush.bf16.msra.mxu0 %v4432
        %5172 = vmatpush.bf16.msra.mxu0 %v4416
        %5173 = vmatpush.bf16.msra.mxu0 %v4400
        %5174 = vmatpush.bf16.msra.mxu0 %v4384
        %5175 = vmatpush.bf16.msra.mxu0 %v4368
        %5176 = vmatpush.bf16.msra.mxu0 %v4352
        %5177 = vmatpush.bf16.msra.mxu0 %v4336
        %5178 = vmatpush.bf16.msra.mxu0 %v4320
        %5179 = vmatmul.bf16.gmra.mxu0 %v1977
        %v5180 = vpop.f32.mrf.mxu0
        %v5181 = vadd.f32 %v5167, %v5180
        %v5182 = vpop.f32.mrf.mxu0
        %v5183 = vadd.f32 %v5169, %v5182
        %5184 = vdwg.mxu0
        %5185 = vmatpush.bf16.msra.mxu0 %v4560
        %5186 = vmatpush.bf16.msra.mxu0 %v4544
        %5187 = vmatpush.bf16.msra.mxu0 %v4528
        %5188 = vmatpush.bf16.msra.mxu0 %v4512
        %5189 = vmatpush.bf16.msra.mxu0 %v4496
        %5190 = vmatpush.bf16.msra.mxu0 %v4480
        %5191 = vmatpush.bf16.msra.mxu0 %v4464
        %5192 = vmatpush.bf16.msra.mxu0 %v4448
        %5193 = vmatmul.bf16.gmra.mxu0 %v1978
        %v5194 = vpop.f32.mrf.mxu0
        %v5195 = vadd.f32 %v5181, %v5194
        %v5196 = vpop.f32.mrf.mxu0
        %v5197 = vadd.f32 %v5183, %v5196
        %5198 = vdwg.mxu0
        %5199 = vmatpush.bf16.msra.mxu0 %v4177
        %5200 = vmatpush.bf16.msra.mxu0 %v4161
        %5201 = vmatpush.bf16.msra.mxu0 %v4145
        %5202 = vmatpush.bf16.msra.mxu0 %v4129
        %5203 = vmatpush.bf16.msra.mxu0 %v4113
        %5204 = vmatpush.bf16.msra.mxu0 %v4097
        %5205 = vmatpush.bf16.msra.mxu0 %v4081
        %5206 = vmatpush.bf16.msra.mxu0 %v4065
        %5207 = vmatmul.bf16.gmra.mxu0 %v1975
        %v5208 = vpop.f32.mrf.mxu0
        %v5209 = vadd.f32 %v2497, %v5208
        %v5210 = vpop.f32.mrf.mxu0
        %v5211 = vadd.f32 %v2497, %v5210
        %5212 = vdwg.mxu0
        %5213 = vmatpush.bf16.msra.mxu0 %v4305
        %5214 = vmatpush.bf16.msra.mxu0 %v4289
        %5215 = vmatpush.bf16.msra.mxu0 %v4273
        %5216 = vmatpush.bf16.msra.mxu0 %v4257
        %5217 = vmatpush.bf16.msra.mxu0 %v4241
        %5218 = vmatpush.bf16.msra.mxu0 %v4225
        %5219 = vmatpush.bf16.msra.mxu0 %v4209
        %5220 = vmatpush.bf16.msra.mxu0 %v4193
        %5221 = vmatmul.bf16.gmra.mxu0 %v1976
        %v5222 = vpop.f32.mrf.mxu0
        %v5223 = vadd.f32 %v5209, %v5222
        %v5224 = vpop.f32.mrf.mxu0
        %v5225 = vadd.f32 %v5211, %v5224
        %5226 = vdwg.mxu0
        %5227 = vmatpush.bf16.msra.mxu0 %v4433
        %5228 = vmatpush.bf16.msra.mxu0 %v4417
        %5229 = vmatpush.bf16.msra.mxu0 %v4401
        %5230 = vmatpush.bf16.msra.mxu0 %v4385
        %5231 = vmatpush.bf16.msra.mxu0 %v4369
        %5232 = vmatpush.bf16.msra.mxu0 %v4353
        %5233 = vmatpush.bf16.msra.mxu0 %v4337
        %5234 = vmatpush.bf16.msra.mxu0 %v4321
        %5235 = vmatmul.bf16.gmra.mxu0 %v1977
        %v5236 = vpop.f32.mrf.mxu0
        %v5237 = vadd.f32 %v5223, %v5236
        %v5238 = vpop.f32.mrf.mxu0
        %v5239 = vadd.f32 %v5225, %v5238
        %5240 = vdwg.mxu0
        %5241 = vmatpush.bf16.msra.mxu0 %v4561
        %5242 = vmatpush.bf16.msra.mxu0 %v4545
        %5243 = vmatpush.bf16.msra.mxu0 %v4529
        %5244 = vmatpush.bf16.msra.mxu0 %v4513
        %5245 = vmatpush.bf16.msra.mxu0 %v4497
        %5246 = vmatpush.bf16.msra.mxu0 %v4481
        %5247 = vmatpush.bf16.msra.mxu0 %v4465
        %5248 = vmatpush.bf16.msra.mxu0 %v4449
        %5249 = vmatmul.bf16.gmra.mxu0 %v1978
        %v5250 = vpop.f32.mrf.mxu0
        %v5251 = vadd.f32 %v5237, %v5250
        %v5252 = vpop.f32.mrf.mxu0
        %v5253 = vadd.f32 %v5239, %v5252
        %5254 = vdwg.mxu0
        %5255 = vmatpush.bf16.msra.mxu0 %v4178
        %5256 = vmatpush.bf16.msra.mxu0 %v4162
        %5257 = vmatpush.bf16.msra.mxu0 %v4146
        %5258 = vmatpush.bf16.msra.mxu0 %v4130
        %5259 = vmatpush.bf16.msra.mxu0 %v4114
        %5260 = vmatpush.bf16.msra.mxu0 %v4098
        %5261 = vmatpush.bf16.msra.mxu0 %v4082
        %5262 = vmatpush.bf16.msra.mxu0 %v4066
        %5263 = vmatmul.bf16.gmra.mxu0 %v1975
        %v5264 = vpop.f32.mrf.mxu0
        %v5265 = vadd.f32 %v2498, %v5264
        %v5266 = vpop.f32.mrf.mxu0
        %v5267 = vadd.f32 %v2498, %v5266
        %5268 = vdwg.mxu0
        %5269 = vmatpush.bf16.msra.mxu0 %v4306
        %5270 = vmatpush.bf16.msra.mxu0 %v4290
        %5271 = vmatpush.bf16.msra.mxu0 %v4274
        %5272 = vmatpush.bf16.msra.mxu0 %v4258
        %5273 = vmatpush.bf16.msra.mxu0 %v4242
        %5274 = vmatpush.bf16.msra.mxu0 %v4226
        %5275 = vmatpush.bf16.msra.mxu0 %v4210
        %5276 = vmatpush.bf16.msra.mxu0 %v4194
        %5277 = vmatmul.bf16.gmra.mxu0 %v1976
        %v5278 = vpop.f32.mrf.mxu0
        %v5279 = vadd.f32 %v5265, %v5278
        %v5280 = vpop.f32.mrf.mxu0
        %v5281 = vadd.f32 %v5267, %v5280
        %5282 = vdwg.mxu0
        %5283 = vmatpush.bf16.msra.mxu0 %v4434
        %5284 = vmatpush.bf16.msra.mxu0 %v4418
        %5285 = vmatpush.bf16.msra.mxu0 %v4402
        %5286 = vmatpush.bf16.msra.mxu0 %v4386
        %5287 = vmatpush.bf16.msra.mxu0 %v4370
        %5288 = vmatpush.bf16.msra.mxu0 %v4354
        %5289 = vmatpush.bf16.msra.mxu0 %v4338
        %5290 = vmatpush.bf16.msra.mxu0 %v4322
        %5291 = vmatmul.bf16.gmra.mxu0 %v1977
        %v5292 = vpop.f32.mrf.mxu0
        %v5293 = vadd.f32 %v5279, %v5292
        %v5294 = vpop.f32.mrf.mxu0
        %v5295 = vadd.f32 %v5281, %v5294
        %5296 = vdwg.mxu0
        %5297 = vmatpush.bf16.msra.mxu0 %v4562
        %5298 = vmatpush.bf16.msra.mxu0 %v4546
        %5299 = vmatpush.bf16.msra.mxu0 %v4530
        %5300 = vmatpush.bf16.msra.mxu0 %v4514
        %5301 = vmatpush.bf16.msra.mxu0 %v4498
        %5302 = vmatpush.bf16.msra.mxu0 %v4482
        %5303 = vmatpush.bf16.msra.mxu0 %v4466
        %5304 = vmatpush.bf16.msra.mxu0 %v4450
        %5305 = vmatmul.bf16.gmra.mxu0 %v1978
        %v5306 = vpop.f32.mrf.mxu0
        %v5307 = vadd.f32 %v5293, %v5306
        %v5308 = vpop.f32.mrf.mxu0
        %v5309 = vadd.f32 %v5295, %v5308
        %5310 = vdwg.mxu0
        %5311 = vmatpush.bf16.msra.mxu0 %v4179
        %5312 = vmatpush.bf16.msra.mxu0 %v4163
        %5313 = vmatpush.bf16.msra.mxu0 %v4147
        %5314 = vmatpush.bf16.msra.mxu0 %v4131
        %5315 = vmatpush.bf16.msra.mxu0 %v4115
        %5316 = vmatpush.bf16.msra.mxu0 %v4099
        %5317 = vmatpush.bf16.msra.mxu0 %v4083
        %5318 = vmatpush.bf16.msra.mxu0 %v4067
        %5319 = vmatmul.bf16.gmra.mxu0 %v1975
        %v5320 = vpop.f32.mrf.mxu0
        %v5321 = vadd.f32 %v2499, %v5320
        %v5322 = vpop.f32.mrf.mxu0
        %v5323 = vadd.f32 %v2499, %v5322
        %5324 = vdwg.mxu0
        %5325 = vmatpush.bf16.msra.mxu0 %v4307
        %5326 = vmatpush.bf16.msra.mxu0 %v4291
        %5327 = vmatpush.bf16.msra.mxu0 %v4275
        %5328 = vmatpush.bf16.msra.mxu0 %v4259
        %5329 = vmatpush.bf16.msra.mxu0 %v4243
        %5330 = vmatpush.bf16.msra.mxu0 %v4227
        %5331 = vmatpush.bf16.msra.mxu0 %v4211
        %5332 = vmatpush.bf16.msra.mxu0 %v4195
        %5333 = vmatmul.bf16.gmra.mxu0 %v1976
        %v5334 = vpop.f32.mrf.mxu0
        %v5335 = vadd.f32 %v5321, %v5334
        %v5336 = vpop.f32.mrf.mxu0
        %v5337 = vadd.f32 %v5323, %v5336
        %5338 = vdwg.mxu0
        %5339 = vmatpush.bf16.msra.mxu0 %v4435
        %5340 = vmatpush.bf16.msra.mxu0 %v4419
        %5341 = vmatpush.bf16.msra.mxu0 %v4403
        %5342 = vmatpush.bf16.msra.mxu0 %v4387
        %5343 = vmatpush.bf16.msra.mxu0 %v4371
        %5344 = vmatpush.bf16.msra.mxu0 %v4355
        %5345 = vmatpush.bf16.msra.mxu0 %v4339
        %5346 = vmatpush.bf16.msra.mxu0 %v4323
        %5347 = vmatmul.bf16.gmra.mxu0 %v1977
        %v5348 = vpop.f32.mrf.mxu0
        %v5349 = vadd.f32 %v5335, %v5348
        %v5350 = vpop.f32.mrf.mxu0
        %v5351 = vadd.f32 %v5337, %v5350
        %5352 = vdwg.mxu0
        %5353 = vmatpush.bf16.msra.mxu0 %v4563
        %5354 = vmatpush.bf16.msra.mxu0 %v4547
        %5355 = vmatpush.bf16.msra.mxu0 %v4531
        %5356 = vmatpush.bf16.msra.mxu0 %v4515
        %5357 = vmatpush.bf16.msra.mxu0 %v4499
        %5358 = vmatpush.bf16.msra.mxu0 %v4483
        %5359 = vmatpush.bf16.msra.mxu0 %v4467
        %5360 = vmatpush.bf16.msra.mxu0 %v4451
        %5361 = vmatmul.bf16.gmra.mxu0 %v1978
        %v5362 = vpop.f32.mrf.mxu0
        %v5363 = vadd.f32 %v5349, %v5362
        %v5364 = vpop.f32.mrf.mxu0
        %v5365 = vadd.f32 %v5351, %v5364
        %5366 = vdwg.mxu0
        %5367 = vmatpush.bf16.msra.mxu0 %v4180
        %5368 = vmatpush.bf16.msra.mxu0 %v4164
        %5369 = vmatpush.bf16.msra.mxu0 %v4148
        %5370 = vmatpush.bf16.msra.mxu0 %v4132
        %5371 = vmatpush.bf16.msra.mxu0 %v4116
        %5372 = vmatpush.bf16.msra.mxu0 %v4100
        %5373 = vmatpush.bf16.msra.mxu0 %v4084
        %5374 = vmatpush.bf16.msra.mxu0 %v4068
        %5375 = vmatmul.bf16.gmra.mxu0 %v1975
        %v5376 = vpop.f32.mrf.mxu0
        %v5377 = vadd.f32 %v2500, %v5376
        %v5378 = vpop.f32.mrf.mxu0
        %v5379 = vadd.f32 %v2500, %v5378
        %5380 = vdwg.mxu0
        %5381 = vmatpush.bf16.msra.mxu0 %v4308
        %5382 = vmatpush.bf16.msra.mxu0 %v4292
        %5383 = vmatpush.bf16.msra.mxu0 %v4276
        %5384 = vmatpush.bf16.msra.mxu0 %v4260
        %5385 = vmatpush.bf16.msra.mxu0 %v4244
        %5386 = vmatpush.bf16.msra.mxu0 %v4228
        %5387 = vmatpush.bf16.msra.mxu0 %v4212
        %5388 = vmatpush.bf16.msra.mxu0 %v4196
        %5389 = vmatmul.bf16.gmra.mxu0 %v1976
        %v5390 = vpop.f32.mrf.mxu0
        %v5391 = vadd.f32 %v5377, %v5390
        %v5392 = vpop.f32.mrf.mxu0
        %v5393 = vadd.f32 %v5379, %v5392
        %5394 = vdwg.mxu0
        %5395 = vmatpush.bf16.msra.mxu0 %v4436
        %5396 = vmatpush.bf16.msra.mxu0 %v4420
        %5397 = vmatpush.bf16.msra.mxu0 %v4404
        %5398 = vmatpush.bf16.msra.mxu0 %v4388
        %5399 = vmatpush.bf16.msra.mxu0 %v4372
        %5400 = vmatpush.bf16.msra.mxu0 %v4356
        %5401 = vmatpush.bf16.msra.mxu0 %v4340
        %5402 = vmatpush.bf16.msra.mxu0 %v4324
        %5403 = vmatmul.bf16.gmra.mxu0 %v1977
        %v5404 = vpop.f32.mrf.mxu0
        %v5405 = vadd.f32 %v5391, %v5404
        %v5406 = vpop.f32.mrf.mxu0
        %v5407 = vadd.f32 %v5393, %v5406
        %5408 = vdwg.mxu0
        %5409 = vmatpush.bf16.msra.mxu0 %v4564
        %5410 = vmatpush.bf16.msra.mxu0 %v4548
        %5411 = vmatpush.bf16.msra.mxu0 %v4532
        %5412 = vmatpush.bf16.msra.mxu0 %v4516
        %5413 = vmatpush.bf16.msra.mxu0 %v4500
        %5414 = vmatpush.bf16.msra.mxu0 %v4484
        %5415 = vmatpush.bf16.msra.mxu0 %v4468
        %5416 = vmatpush.bf16.msra.mxu0 %v4452
        %5417 = vmatmul.bf16.gmra.mxu0 %v1978
        %v5418 = vpop.f32.mrf.mxu0
        %v5419 = vadd.f32 %v5405, %v5418
        %v5420 = vpop.f32.mrf.mxu0
        %v5421 = vadd.f32 %v5407, %v5420
        %5422 = vdwg.mxu0
        %5423 = vmatpush.bf16.msra.mxu0 %v4181
        %5424 = vmatpush.bf16.msra.mxu0 %v4165
        %5425 = vmatpush.bf16.msra.mxu0 %v4149
        %5426 = vmatpush.bf16.msra.mxu0 %v4133
        %5427 = vmatpush.bf16.msra.mxu0 %v4117
        %5428 = vmatpush.bf16.msra.mxu0 %v4101
        %5429 = vmatpush.bf16.msra.mxu0 %v4085
        %5430 = vmatpush.bf16.msra.mxu0 %v4069
        %5431 = vmatmul.bf16.gmra.mxu0 %v1975
        %v5432 = vpop.f32.mrf.mxu0
        %v5433 = vadd.f32 %v2501, %v5432
        %v5434 = vpop.f32.mrf.mxu0
        %v5435 = vadd.f32 %v2501, %v5434
        %5436 = vdwg.mxu0
        %5437 = vmatpush.bf16.msra.mxu0 %v4309
        %5438 = vmatpush.bf16.msra.mxu0 %v4293
        %5439 = vmatpush.bf16.msra.mxu0 %v4277
        %5440 = vmatpush.bf16.msra.mxu0 %v4261
        %5441 = vmatpush.bf16.msra.mxu0 %v4245
        %5442 = vmatpush.bf16.msra.mxu0 %v4229
        %5443 = vmatpush.bf16.msra.mxu0 %v4213
        %5444 = vmatpush.bf16.msra.mxu0 %v4197
        %5445 = vmatmul.bf16.gmra.mxu0 %v1976
        %v5446 = vpop.f32.mrf.mxu0
        %v5447 = vadd.f32 %v5433, %v5446
        %v5448 = vpop.f32.mrf.mxu0
        %v5449 = vadd.f32 %v5435, %v5448
        %5450 = vdwg.mxu0
        %5451 = vmatpush.bf16.msra.mxu0 %v4437
        %5452 = vmatpush.bf16.msra.mxu0 %v4421
        %5453 = vmatpush.bf16.msra.mxu0 %v4405
        %5454 = vmatpush.bf16.msra.mxu0 %v4389
        %5455 = vmatpush.bf16.msra.mxu0 %v4373
        %5456 = vmatpush.bf16.msra.mxu0 %v4357
        %5457 = vmatpush.bf16.msra.mxu0 %v4341
        %5458 = vmatpush.bf16.msra.mxu0 %v4325
        %5459 = vmatmul.bf16.gmra.mxu0 %v1977
        %v5460 = vpop.f32.mrf.mxu0
        %v5461 = vadd.f32 %v5447, %v5460
        %v5462 = vpop.f32.mrf.mxu0
        %v5463 = vadd.f32 %v5449, %v5462
        %5464 = vdwg.mxu0
        %5465 = vmatpush.bf16.msra.mxu0 %v4565
        %5466 = vmatpush.bf16.msra.mxu0 %v4549
        %5467 = vmatpush.bf16.msra.mxu0 %v4533
        %5468 = vmatpush.bf16.msra.mxu0 %v4517
        %5469 = vmatpush.bf16.msra.mxu0 %v4501
        %5470 = vmatpush.bf16.msra.mxu0 %v4485
        %5471 = vmatpush.bf16.msra.mxu0 %v4469
        %5472 = vmatpush.bf16.msra.mxu0 %v4453
        %5473 = vmatmul.bf16.gmra.mxu0 %v1978
        %v5474 = vpop.f32.mrf.mxu0
        %v5475 = vadd.f32 %v5461, %v5474
        %v5476 = vpop.f32.mrf.mxu0
        %v5477 = vadd.f32 %v5463, %v5476
        %5478 = vdwg.mxu0
        %5479 = vmatpush.bf16.msra.mxu0 %v4182
        %5480 = vmatpush.bf16.msra.mxu0 %v4166
        %5481 = vmatpush.bf16.msra.mxu0 %v4150
        %5482 = vmatpush.bf16.msra.mxu0 %v4134
        %5483 = vmatpush.bf16.msra.mxu0 %v4118
        %5484 = vmatpush.bf16.msra.mxu0 %v4102
        %5485 = vmatpush.bf16.msra.mxu0 %v4086
        %5486 = vmatpush.bf16.msra.mxu0 %v4070
        %5487 = vmatmul.bf16.gmra.mxu0 %v1975
        %v5488 = vpop.f32.mrf.mxu0
        %v5489 = vadd.f32 %v2502, %v5488
        %v5490 = vpop.f32.mrf.mxu0
        %v5491 = vadd.f32 %v2502, %v5490
        %5492 = vdwg.mxu0
        %5493 = vmatpush.bf16.msra.mxu0 %v4310
        %5494 = vmatpush.bf16.msra.mxu0 %v4294
        %5495 = vmatpush.bf16.msra.mxu0 %v4278
        %5496 = vmatpush.bf16.msra.mxu0 %v4262
        %5497 = vmatpush.bf16.msra.mxu0 %v4246
        %5498 = vmatpush.bf16.msra.mxu0 %v4230
        %5499 = vmatpush.bf16.msra.mxu0 %v4214
        %5500 = vmatpush.bf16.msra.mxu0 %v4198
        %5501 = vmatmul.bf16.gmra.mxu0 %v1976
        %v5502 = vpop.f32.mrf.mxu0
        %v5503 = vadd.f32 %v5489, %v5502
        %v5504 = vpop.f32.mrf.mxu0
        %v5505 = vadd.f32 %v5491, %v5504
        %5506 = vdwg.mxu0
        %5507 = vmatpush.bf16.msra.mxu0 %v4438
        %5508 = vmatpush.bf16.msra.mxu0 %v4422
        %5509 = vmatpush.bf16.msra.mxu0 %v4406
        %5510 = vmatpush.bf16.msra.mxu0 %v4390
        %5511 = vmatpush.bf16.msra.mxu0 %v4374
        %5512 = vmatpush.bf16.msra.mxu0 %v4358
        %5513 = vmatpush.bf16.msra.mxu0 %v4342
        %5514 = vmatpush.bf16.msra.mxu0 %v4326
        %5515 = vmatmul.bf16.gmra.mxu0 %v1977
        %v5516 = vpop.f32.mrf.mxu0
        %v5517 = vadd.f32 %v5503, %v5516
        %v5518 = vpop.f32.mrf.mxu0
        %v5519 = vadd.f32 %v5505, %v5518
        %5520 = vdwg.mxu0
        %5521 = vmatpush.bf16.msra.mxu0 %v4566
        %5522 = vmatpush.bf16.msra.mxu0 %v4550
        %5523 = vmatpush.bf16.msra.mxu0 %v4534
        %5524 = vmatpush.bf16.msra.mxu0 %v4518
        %5525 = vmatpush.bf16.msra.mxu0 %v4502
        %5526 = vmatpush.bf16.msra.mxu0 %v4486
        %5527 = vmatpush.bf16.msra.mxu0 %v4470
        %5528 = vmatpush.bf16.msra.mxu0 %v4454
        %5529 = vmatmul.bf16.gmra.mxu0 %v1978
        %v5530 = vpop.f32.mrf.mxu0
        %v5531 = vadd.f32 %v5517, %v5530
        %v5532 = vpop.f32.mrf.mxu0
        %v5533 = vadd.f32 %v5519, %v5532
        %5534 = vdwg.mxu0
        %5535 = vmatpush.bf16.msra.mxu0 %v4183
        %5536 = vmatpush.bf16.msra.mxu0 %v4167
        %5537 = vmatpush.bf16.msra.mxu0 %v4151
        %5538 = vmatpush.bf16.msra.mxu0 %v4135
        %5539 = vmatpush.bf16.msra.mxu0 %v4119
        %5540 = vmatpush.bf16.msra.mxu0 %v4103
        %5541 = vmatpush.bf16.msra.mxu0 %v4087
        %5542 = vmatpush.bf16.msra.mxu0 %v4071
        %5543 = vmatmul.bf16.gmra.mxu0 %v1975
        %v5544 = vpop.f32.mrf.mxu0
        %v5545 = vadd.f32 %v2503, %v5544
        %v5546 = vpop.f32.mrf.mxu0
        %v5547 = vadd.f32 %v2503, %v5546
        %5548 = vdwg.mxu0
        %5549 = vmatpush.bf16.msra.mxu0 %v4311
        %5550 = vmatpush.bf16.msra.mxu0 %v4295
        %5551 = vmatpush.bf16.msra.mxu0 %v4279
        %5552 = vmatpush.bf16.msra.mxu0 %v4263
        %5553 = vmatpush.bf16.msra.mxu0 %v4247
        %5554 = vmatpush.bf16.msra.mxu0 %v4231
        %5555 = vmatpush.bf16.msra.mxu0 %v4215
        %5556 = vmatpush.bf16.msra.mxu0 %v4199
        %5557 = vmatmul.bf16.gmra.mxu0 %v1976
        %v5558 = vpop.f32.mrf.mxu0
        %v5559 = vadd.f32 %v5545, %v5558
        %v5560 = vpop.f32.mrf.mxu0
        %v5561 = vadd.f32 %v5547, %v5560
        %5562 = vdwg.mxu0
        %5563 = vmatpush.bf16.msra.mxu0 %v4439
        %5564 = vmatpush.bf16.msra.mxu0 %v4423
        %5565 = vmatpush.bf16.msra.mxu0 %v4407
        %5566 = vmatpush.bf16.msra.mxu0 %v4391
        %5567 = vmatpush.bf16.msra.mxu0 %v4375
        %5568 = vmatpush.bf16.msra.mxu0 %v4359
        %5569 = vmatpush.bf16.msra.mxu0 %v4343
        %5570 = vmatpush.bf16.msra.mxu0 %v4327
        %5571 = vmatmul.bf16.gmra.mxu0 %v1977
        %v5572 = vpop.f32.mrf.mxu0
        %v5573 = vadd.f32 %v5559, %v5572
        %v5574 = vpop.f32.mrf.mxu0
        %v5575 = vadd.f32 %v5561, %v5574
        %5576 = vdwg.mxu0
        %5577 = vmatpush.bf16.msra.mxu0 %v4567
        %5578 = vmatpush.bf16.msra.mxu0 %v4551
        %5579 = vmatpush.bf16.msra.mxu0 %v4535
        %5580 = vmatpush.bf16.msra.mxu0 %v4519
        %5581 = vmatpush.bf16.msra.mxu0 %v4503
        %5582 = vmatpush.bf16.msra.mxu0 %v4487
        %5583 = vmatpush.bf16.msra.mxu0 %v4471
        %5584 = vmatpush.bf16.msra.mxu0 %v4455
        %5585 = vmatmul.bf16.gmra.mxu0 %v1978
        %v5586 = vpop.f32.mrf.mxu0
        %v5587 = vadd.f32 %v5573, %v5586
        %v5588 = vpop.f32.mrf.mxu0
        %v5589 = vadd.f32 %v5575, %v5588
        %5590 = vdwg.mxu0
        %5591 = vmatpush.bf16.msra.mxu0 %v4184
        %5592 = vmatpush.bf16.msra.mxu0 %v4168
        %5593 = vmatpush.bf16.msra.mxu0 %v4152
        %5594 = vmatpush.bf16.msra.mxu0 %v4136
        %5595 = vmatpush.bf16.msra.mxu0 %v4120
        %5596 = vmatpush.bf16.msra.mxu0 %v4104
        %5597 = vmatpush.bf16.msra.mxu0 %v4088
        %5598 = vmatpush.bf16.msra.mxu0 %v4072
        %5599 = vmatmul.bf16.gmra.mxu0 %v1975
        %v5600 = vpop.f32.mrf.mxu0
        %v5601 = vadd.f32 %v2504, %v5600
        %v5602 = vpop.f32.mrf.mxu0
        %v5603 = vadd.f32 %v2504, %v5602
        %5604 = vdwg.mxu0
        %5605 = vmatpush.bf16.msra.mxu0 %v4312
        %5606 = vmatpush.bf16.msra.mxu0 %v4296
        %5607 = vmatpush.bf16.msra.mxu0 %v4280
        %5608 = vmatpush.bf16.msra.mxu0 %v4264
        %5609 = vmatpush.bf16.msra.mxu0 %v4248
        %5610 = vmatpush.bf16.msra.mxu0 %v4232
        %5611 = vmatpush.bf16.msra.mxu0 %v4216
        %5612 = vmatpush.bf16.msra.mxu0 %v4200
        %5613 = vmatmul.bf16.gmra.mxu0 %v1976
        %v5614 = vpop.f32.mrf.mxu0
        %v5615 = vadd.f32 %v5601, %v5614
        %v5616 = vpop.f32.mrf.mxu0
        %v5617 = vadd.f32 %v5603, %v5616
        %5618 = vdwg.mxu0
        %5619 = vmatpush.bf16.msra.mxu0 %v4440
        %5620 = vmatpush.bf16.msra.mxu0 %v4424
        %5621 = vmatpush.bf16.msra.mxu0 %v4408
        %5622 = vmatpush.bf16.msra.mxu0 %v4392
        %5623 = vmatpush.bf16.msra.mxu0 %v4376
        %5624 = vmatpush.bf16.msra.mxu0 %v4360
        %5625 = vmatpush.bf16.msra.mxu0 %v4344
        %5626 = vmatpush.bf16.msra.mxu0 %v4328
        %5627 = vmatmul.bf16.gmra.mxu0 %v1977
        %v5628 = vpop.f32.mrf.mxu0
        %v5629 = vadd.f32 %v5615, %v5628
        %v5630 = vpop.f32.mrf.mxu0
        %v5631 = vadd.f32 %v5617, %v5630
        %5632 = vdwg.mxu0
        %5633 = vmatpush.bf16.msra.mxu0 %v4568
        %5634 = vmatpush.bf16.msra.mxu0 %v4552
        %5635 = vmatpush.bf16.msra.mxu0 %v4536
        %5636 = vmatpush.bf16.msra.mxu0 %v4520
        %5637 = vmatpush.bf16.msra.mxu0 %v4504
        %5638 = vmatpush.bf16.msra.mxu0 %v4488
        %5639 = vmatpush.bf16.msra.mxu0 %v4472
        %5640 = vmatpush.bf16.msra.mxu0 %v4456
        %5641 = vmatmul.bf16.gmra.mxu0 %v1978
        %v5642 = vpop.f32.mrf.mxu0
        %v5643 = vadd.f32 %v5629, %v5642
        %v5644 = vpop.f32.mrf.mxu0
        %v5645 = vadd.f32 %v5631, %v5644
        %5646 = vdwg.mxu0
        %5647 = vmatpush.bf16.msra.mxu0 %v4185
        %5648 = vmatpush.bf16.msra.mxu0 %v4169
        %5649 = vmatpush.bf16.msra.mxu0 %v4153
        %5650 = vmatpush.bf16.msra.mxu0 %v4137
        %5651 = vmatpush.bf16.msra.mxu0 %v4121
        %5652 = vmatpush.bf16.msra.mxu0 %v4105
        %5653 = vmatpush.bf16.msra.mxu0 %v4089
        %5654 = vmatpush.bf16.msra.mxu0 %v4073
        %5655 = vmatmul.bf16.gmra.mxu0 %v1975
        %v5656 = vpop.f32.mrf.mxu0
        %v5657 = vadd.f32 %v2505, %v5656
        %v5658 = vpop.f32.mrf.mxu0
        %v5659 = vadd.f32 %v2505, %v5658
        %5660 = vdwg.mxu0
        %5661 = vmatpush.bf16.msra.mxu0 %v4313
        %5662 = vmatpush.bf16.msra.mxu0 %v4297
        %5663 = vmatpush.bf16.msra.mxu0 %v4281
        %5664 = vmatpush.bf16.msra.mxu0 %v4265
        %5665 = vmatpush.bf16.msra.mxu0 %v4249
        %5666 = vmatpush.bf16.msra.mxu0 %v4233
        %5667 = vmatpush.bf16.msra.mxu0 %v4217
        %5668 = vmatpush.bf16.msra.mxu0 %v4201
        %5669 = vmatmul.bf16.gmra.mxu0 %v1976
        %v5670 = vpop.f32.mrf.mxu0
        %v5671 = vadd.f32 %v5657, %v5670
        %v5672 = vpop.f32.mrf.mxu0
        %v5673 = vadd.f32 %v5659, %v5672
        %5674 = vdwg.mxu0
        %5675 = vmatpush.bf16.msra.mxu0 %v4441
        %5676 = vmatpush.bf16.msra.mxu0 %v4425
        %5677 = vmatpush.bf16.msra.mxu0 %v4409
        %5678 = vmatpush.bf16.msra.mxu0 %v4393
        %5679 = vmatpush.bf16.msra.mxu0 %v4377
        %5680 = vmatpush.bf16.msra.mxu0 %v4361
        %5681 = vmatpush.bf16.msra.mxu0 %v4345
        %5682 = vmatpush.bf16.msra.mxu0 %v4329
        %5683 = vmatmul.bf16.gmra.mxu0 %v1977
        %v5684 = vpop.f32.mrf.mxu0
        %v5685 = vadd.f32 %v5671, %v5684
        %v5686 = vpop.f32.mrf.mxu0
        %v5687 = vadd.f32 %v5673, %v5686
        %5688 = vdwg.mxu0
        %5689 = vmatpush.bf16.msra.mxu0 %v4569
        %5690 = vmatpush.bf16.msra.mxu0 %v4553
        %5691 = vmatpush.bf16.msra.mxu0 %v4537
        %5692 = vmatpush.bf16.msra.mxu0 %v4521
        %5693 = vmatpush.bf16.msra.mxu0 %v4505
        %5694 = vmatpush.bf16.msra.mxu0 %v4489
        %5695 = vmatpush.bf16.msra.mxu0 %v4473
        %5696 = vmatpush.bf16.msra.mxu0 %v4457
        %5697 = vmatmul.bf16.gmra.mxu0 %v1978
        %v5698 = vpop.f32.mrf.mxu0
        %v5699 = vadd.f32 %v5685, %v5698
        %v5700 = vpop.f32.mrf.mxu0
        %v5701 = vadd.f32 %v5687, %v5700
        %5702 = vdwg.mxu0
        %5703 = vmatpush.bf16.msra.mxu0 %v4186
        %5704 = vmatpush.bf16.msra.mxu0 %v4170
        %5705 = vmatpush.bf16.msra.mxu0 %v4154
        %5706 = vmatpush.bf16.msra.mxu0 %v4138
        %5707 = vmatpush.bf16.msra.mxu0 %v4122
        %5708 = vmatpush.bf16.msra.mxu0 %v4106
        %5709 = vmatpush.bf16.msra.mxu0 %v4090
        %5710 = vmatpush.bf16.msra.mxu0 %v4074
        %5711 = vmatmul.bf16.gmra.mxu0 %v1975
        %v5712 = vpop.f32.mrf.mxu0
        %v5713 = vadd.f32 %v2506, %v5712
        %v5714 = vpop.f32.mrf.mxu0
        %v5715 = vadd.f32 %v2506, %v5714
        %5716 = vdwg.mxu0
        %5717 = vmatpush.bf16.msra.mxu0 %v4314
        %5718 = vmatpush.bf16.msra.mxu0 %v4298
        %5719 = vmatpush.bf16.msra.mxu0 %v4282
        %5720 = vmatpush.bf16.msra.mxu0 %v4266
        %5721 = vmatpush.bf16.msra.mxu0 %v4250
        %5722 = vmatpush.bf16.msra.mxu0 %v4234
        %5723 = vmatpush.bf16.msra.mxu0 %v4218
        %5724 = vmatpush.bf16.msra.mxu0 %v4202
        %5725 = vmatmul.bf16.gmra.mxu0 %v1976
        %v5726 = vpop.f32.mrf.mxu0
        %v5727 = vadd.f32 %v5713, %v5726
        %v5728 = vpop.f32.mrf.mxu0
        %v5729 = vadd.f32 %v5715, %v5728
        %5730 = vdwg.mxu0
        %5731 = vmatpush.bf16.msra.mxu0 %v4442
        %5732 = vmatpush.bf16.msra.mxu0 %v4426
        %5733 = vmatpush.bf16.msra.mxu0 %v4410
        %5734 = vmatpush.bf16.msra.mxu0 %v4394
        %5735 = vmatpush.bf16.msra.mxu0 %v4378
        %5736 = vmatpush.bf16.msra.mxu0 %v4362
        %5737 = vmatpush.bf16.msra.mxu0 %v4346
        %5738 = vmatpush.bf16.msra.mxu0 %v4330
        %5739 = vmatmul.bf16.gmra.mxu0 %v1977
        %v5740 = vpop.f32.mrf.mxu0
        %v5741 = vadd.f32 %v5727, %v5740
        %v5742 = vpop.f32.mrf.mxu0
        %v5743 = vadd.f32 %v5729, %v5742
        %5744 = vdwg.mxu0
        %5745 = vmatpush.bf16.msra.mxu0 %v4570
        %5746 = vmatpush.bf16.msra.mxu0 %v4554
        %5747 = vmatpush.bf16.msra.mxu0 %v4538
        %5748 = vmatpush.bf16.msra.mxu0 %v4522
        %5749 = vmatpush.bf16.msra.mxu0 %v4506
        %5750 = vmatpush.bf16.msra.mxu0 %v4490
        %5751 = vmatpush.bf16.msra.mxu0 %v4474
        %5752 = vmatpush.bf16.msra.mxu0 %v4458
        %5753 = vmatmul.bf16.gmra.mxu0 %v1978
        %v5754 = vpop.f32.mrf.mxu0
        %v5755 = vadd.f32 %v5741, %v5754
        %v5756 = vpop.f32.mrf.mxu0
        %v5757 = vadd.f32 %v5743, %v5756
        %5758 = vdwg.mxu0
        %5759 = vmatpush.bf16.msra.mxu0 %v4187
        %5760 = vmatpush.bf16.msra.mxu0 %v4171
        %5761 = vmatpush.bf16.msra.mxu0 %v4155
        %5762 = vmatpush.bf16.msra.mxu0 %v4139
        %5763 = vmatpush.bf16.msra.mxu0 %v4123
        %5764 = vmatpush.bf16.msra.mxu0 %v4107
        %5765 = vmatpush.bf16.msra.mxu0 %v4091
        %5766 = vmatpush.bf16.msra.mxu0 %v4075
        %5767 = vmatmul.bf16.gmra.mxu0 %v1975
        %v5768 = vpop.f32.mrf.mxu0
        %v5769 = vadd.f32 %v2507, %v5768
        %v5770 = vpop.f32.mrf.mxu0
        %v5771 = vadd.f32 %v2507, %v5770
        %5772 = vdwg.mxu0
        %5773 = vmatpush.bf16.msra.mxu0 %v4315
        %5774 = vmatpush.bf16.msra.mxu0 %v4299
        %5775 = vmatpush.bf16.msra.mxu0 %v4283
        %5776 = vmatpush.bf16.msra.mxu0 %v4267
        %5777 = vmatpush.bf16.msra.mxu0 %v4251
        %5778 = vmatpush.bf16.msra.mxu0 %v4235
        %5779 = vmatpush.bf16.msra.mxu0 %v4219
        %5780 = vmatpush.bf16.msra.mxu0 %v4203
        %5781 = vmatmul.bf16.gmra.mxu0 %v1976
        %v5782 = vpop.f32.mrf.mxu0
        %v5783 = vadd.f32 %v5769, %v5782
        %v5784 = vpop.f32.mrf.mxu0
        %v5785 = vadd.f32 %v5771, %v5784
        %5786 = vdwg.mxu0
        %5787 = vmatpush.bf16.msra.mxu0 %v4443
        %5788 = vmatpush.bf16.msra.mxu0 %v4427
        %5789 = vmatpush.bf16.msra.mxu0 %v4411
        %5790 = vmatpush.bf16.msra.mxu0 %v4395
        %5791 = vmatpush.bf16.msra.mxu0 %v4379
        %5792 = vmatpush.bf16.msra.mxu0 %v4363
        %5793 = vmatpush.bf16.msra.mxu0 %v4347
        %5794 = vmatpush.bf16.msra.mxu0 %v4331
        %5795 = vmatmul.bf16.gmra.mxu0 %v1977
        %v5796 = vpop.f32.mrf.mxu0
        %v5797 = vadd.f32 %v5783, %v5796
        %v5798 = vpop.f32.mrf.mxu0
        %v5799 = vadd.f32 %v5785, %v5798
        %5800 = vdwg.mxu0
        %5801 = vmatpush.bf16.msra.mxu0 %v4571
        %5802 = vmatpush.bf16.msra.mxu0 %v4555
        %5803 = vmatpush.bf16.msra.mxu0 %v4539
        %5804 = vmatpush.bf16.msra.mxu0 %v4523
        %5805 = vmatpush.bf16.msra.mxu0 %v4507
        %5806 = vmatpush.bf16.msra.mxu0 %v4491
        %5807 = vmatpush.bf16.msra.mxu0 %v4475
        %5808 = vmatpush.bf16.msra.mxu0 %v4459
        %5809 = vmatmul.bf16.gmra.mxu0 %v1978
        %v5810 = vpop.f32.mrf.mxu0
        %v5811 = vadd.f32 %v5797, %v5810
        %v5812 = vpop.f32.mrf.mxu0
        %v5813 = vadd.f32 %v5799, %v5812
        %5814 = vdwg.mxu0
        %5815 = vmatpush.bf16.msra.mxu0 %v4188
        %5816 = vmatpush.bf16.msra.mxu0 %v4172
        %5817 = vmatpush.bf16.msra.mxu0 %v4156
        %5818 = vmatpush.bf16.msra.mxu0 %v4140
        %5819 = vmatpush.bf16.msra.mxu0 %v4124
        %5820 = vmatpush.bf16.msra.mxu0 %v4108
        %5821 = vmatpush.bf16.msra.mxu0 %v4092
        %5822 = vmatpush.bf16.msra.mxu0 %v4076
        %5823 = vmatmul.bf16.gmra.mxu0 %v1975
        %v5824 = vpop.f32.mrf.mxu0
        %v5825 = vadd.f32 %v2508, %v5824
        %v5826 = vpop.f32.mrf.mxu0
        %v5827 = vadd.f32 %v2508, %v5826
        %5828 = vdwg.mxu0
        %5829 = vmatpush.bf16.msra.mxu0 %v4316
        %5830 = vmatpush.bf16.msra.mxu0 %v4300
        %5831 = vmatpush.bf16.msra.mxu0 %v4284
        %5832 = vmatpush.bf16.msra.mxu0 %v4268
        %5833 = vmatpush.bf16.msra.mxu0 %v4252
        %5834 = vmatpush.bf16.msra.mxu0 %v4236
        %5835 = vmatpush.bf16.msra.mxu0 %v4220
        %5836 = vmatpush.bf16.msra.mxu0 %v4204
        %5837 = vmatmul.bf16.gmra.mxu0 %v1976
        %v5838 = vpop.f32.mrf.mxu0
        %v5839 = vadd.f32 %v5825, %v5838
        %v5840 = vpop.f32.mrf.mxu0
        %v5841 = vadd.f32 %v5827, %v5840
        %5842 = vdwg.mxu0
        %5843 = vmatpush.bf16.msra.mxu0 %v4444
        %5844 = vmatpush.bf16.msra.mxu0 %v4428
        %5845 = vmatpush.bf16.msra.mxu0 %v4412
        %5846 = vmatpush.bf16.msra.mxu0 %v4396
        %5847 = vmatpush.bf16.msra.mxu0 %v4380
        %5848 = vmatpush.bf16.msra.mxu0 %v4364
        %5849 = vmatpush.bf16.msra.mxu0 %v4348
        %5850 = vmatpush.bf16.msra.mxu0 %v4332
        %5851 = vmatmul.bf16.gmra.mxu0 %v1977
        %v5852 = vpop.f32.mrf.mxu0
        %v5853 = vadd.f32 %v5839, %v5852
        %v5854 = vpop.f32.mrf.mxu0
        %v5855 = vadd.f32 %v5841, %v5854
        %5856 = vdwg.mxu0
        %5857 = vmatpush.bf16.msra.mxu0 %v4572
        %5858 = vmatpush.bf16.msra.mxu0 %v4556
        %5859 = vmatpush.bf16.msra.mxu0 %v4540
        %5860 = vmatpush.bf16.msra.mxu0 %v4524
        %5861 = vmatpush.bf16.msra.mxu0 %v4508
        %5862 = vmatpush.bf16.msra.mxu0 %v4492
        %5863 = vmatpush.bf16.msra.mxu0 %v4476
        %5864 = vmatpush.bf16.msra.mxu0 %v4460
        %5865 = vmatmul.bf16.gmra.mxu0 %v1978
        %v5866 = vpop.f32.mrf.mxu0
        %v5867 = vadd.f32 %v5853, %v5866
        %v5868 = vpop.f32.mrf.mxu0
        %v5869 = vadd.f32 %v5855, %v5868
        %5870 = vdwg.mxu0
        %5871 = vmatpush.bf16.msra.mxu0 %v4189
        %5872 = vmatpush.bf16.msra.mxu0 %v4173
        %5873 = vmatpush.bf16.msra.mxu0 %v4157
        %5874 = vmatpush.bf16.msra.mxu0 %v4141
        %5875 = vmatpush.bf16.msra.mxu0 %v4125
        %5876 = vmatpush.bf16.msra.mxu0 %v4109
        %5877 = vmatpush.bf16.msra.mxu0 %v4093
        %5878 = vmatpush.bf16.msra.mxu0 %v4077
        %5879 = vmatmul.bf16.gmra.mxu0 %v1975
        %v5880 = vpop.f32.mrf.mxu0
        %v5881 = vadd.f32 %v2509, %v5880
        %v5882 = vpop.f32.mrf.mxu0
        %v5883 = vadd.f32 %v2509, %v5882
        %5884 = vdwg.mxu0
        %5885 = vmatpush.bf16.msra.mxu0 %v4317
        %5886 = vmatpush.bf16.msra.mxu0 %v4301
        %5887 = vmatpush.bf16.msra.mxu0 %v4285
        %5888 = vmatpush.bf16.msra.mxu0 %v4269
        %5889 = vmatpush.bf16.msra.mxu0 %v4253
        %5890 = vmatpush.bf16.msra.mxu0 %v4237
        %5891 = vmatpush.bf16.msra.mxu0 %v4221
        %5892 = vmatpush.bf16.msra.mxu0 %v4205
        %5893 = vmatmul.bf16.gmra.mxu0 %v1976
        %v5894 = vpop.f32.mrf.mxu0
        %v5895 = vadd.f32 %v5881, %v5894
        %v5896 = vpop.f32.mrf.mxu0
        %v5897 = vadd.f32 %v5883, %v5896
        %5898 = vdwg.mxu0
        %5899 = vmatpush.bf16.msra.mxu0 %v4445
        %5900 = vmatpush.bf16.msra.mxu0 %v4429
        %5901 = vmatpush.bf16.msra.mxu0 %v4413
        %5902 = vmatpush.bf16.msra.mxu0 %v4397
        %5903 = vmatpush.bf16.msra.mxu0 %v4381
        %5904 = vmatpush.bf16.msra.mxu0 %v4365
        %5905 = vmatpush.bf16.msra.mxu0 %v4349
        %5906 = vmatpush.bf16.msra.mxu0 %v4333
        %5907 = vmatmul.bf16.gmra.mxu0 %v1977
        %v5908 = vpop.f32.mrf.mxu0
        %v5909 = vadd.f32 %v5895, %v5908
        %v5910 = vpop.f32.mrf.mxu0
        %v5911 = vadd.f32 %v5897, %v5910
        %5912 = vdwg.mxu0
        %5913 = vmatpush.bf16.msra.mxu0 %v4573
        %5914 = vmatpush.bf16.msra.mxu0 %v4557
        %5915 = vmatpush.bf16.msra.mxu0 %v4541
        %5916 = vmatpush.bf16.msra.mxu0 %v4525
        %5917 = vmatpush.bf16.msra.mxu0 %v4509
        %5918 = vmatpush.bf16.msra.mxu0 %v4493
        %5919 = vmatpush.bf16.msra.mxu0 %v4477
        %5920 = vmatpush.bf16.msra.mxu0 %v4461
        %5921 = vmatmul.bf16.gmra.mxu0 %v1978
        %v5922 = vpop.f32.mrf.mxu0
        %v5923 = vadd.f32 %v5909, %v5922
        %v5924 = vpop.f32.mrf.mxu0
        %v5925 = vadd.f32 %v5911, %v5924
        %5926 = vdwg.mxu0
        %5927 = vmatpush.bf16.msra.mxu0 %v4190
        %5928 = vmatpush.bf16.msra.mxu0 %v4174
        %5929 = vmatpush.bf16.msra.mxu0 %v4158
        %5930 = vmatpush.bf16.msra.mxu0 %v4142
        %5931 = vmatpush.bf16.msra.mxu0 %v4126
        %5932 = vmatpush.bf16.msra.mxu0 %v4110
        %5933 = vmatpush.bf16.msra.mxu0 %v4094
        %5934 = vmatpush.bf16.msra.mxu0 %v4078
        %5935 = vmatmul.bf16.gmra.mxu0 %v1975
        %v5936 = vpop.f32.mrf.mxu0
        %v5937 = vadd.f32 %v2510, %v5936
        %v5938 = vpop.f32.mrf.mxu0
        %v5939 = vadd.f32 %v2510, %v5938
        %5940 = vdwg.mxu0
        %5941 = vmatpush.bf16.msra.mxu0 %v4318
        %5942 = vmatpush.bf16.msra.mxu0 %v4302
        %5943 = vmatpush.bf16.msra.mxu0 %v4286
        %5944 = vmatpush.bf16.msra.mxu0 %v4270
        %5945 = vmatpush.bf16.msra.mxu0 %v4254
        %5946 = vmatpush.bf16.msra.mxu0 %v4238
        %5947 = vmatpush.bf16.msra.mxu0 %v4222
        %5948 = vmatpush.bf16.msra.mxu0 %v4206
        %5949 = vmatmul.bf16.gmra.mxu0 %v1976
        %v5950 = vpop.f32.mrf.mxu0
        %v5951 = vadd.f32 %v5937, %v5950
        %v5952 = vpop.f32.mrf.mxu0
        %v5953 = vadd.f32 %v5939, %v5952
        %5954 = vdwg.mxu0
        %5955 = vmatpush.bf16.msra.mxu0 %v4446
        %5956 = vmatpush.bf16.msra.mxu0 %v4430
        %5957 = vmatpush.bf16.msra.mxu0 %v4414
        %5958 = vmatpush.bf16.msra.mxu0 %v4398
        %5959 = vmatpush.bf16.msra.mxu0 %v4382
        %5960 = vmatpush.bf16.msra.mxu0 %v4366
        %5961 = vmatpush.bf16.msra.mxu0 %v4350
        %5962 = vmatpush.bf16.msra.mxu0 %v4334
        %5963 = vmatmul.bf16.gmra.mxu0 %v1977
        %v5964 = vpop.f32.mrf.mxu0
        %v5965 = vadd.f32 %v5951, %v5964
        %v5966 = vpop.f32.mrf.mxu0
        %v5967 = vadd.f32 %v5953, %v5966
        %5968 = vdwg.mxu0
        %5969 = vmatpush.bf16.msra.mxu0 %v4574
        %5970 = vmatpush.bf16.msra.mxu0 %v4558
        %5971 = vmatpush.bf16.msra.mxu0 %v4542
        %5972 = vmatpush.bf16.msra.mxu0 %v4526
        %5973 = vmatpush.bf16.msra.mxu0 %v4510
        %5974 = vmatpush.bf16.msra.mxu0 %v4494
        %5975 = vmatpush.bf16.msra.mxu0 %v4478
        %5976 = vmatpush.bf16.msra.mxu0 %v4462
        %5977 = vmatmul.bf16.gmra.mxu0 %v1978
        %v5978 = vpop.f32.mrf.mxu0
        %v5979 = vadd.f32 %v5965, %v5978
        %v5980 = vpop.f32.mrf.mxu0
        %v5981 = vadd.f32 %v5967, %v5980
        %5982 = vdwg.mxu0
        %v5983 = vld [vmem:[%s386] sm:$0xff]
        %v5984 = vld [vmem:[%s386 + $0x8] sm:$0xff]
        %v5985 = vld [vmem:[%s386 + $0x10] sm:$0xff]
        %v5986 = vld [vmem:[%s386 + $0x18] sm:$0xff]
        %v5987 = vld [vmem:[%s386 + $0x20] sm:$0xff]
        %v5988 = vld [vmem:[%s386 + $0x28] sm:$0xff]
        %v5989 = vld [vmem:[%s386 + $0x30] sm:$0xff]
        %v5990 = vld [vmem:[%s386 + $0x38] sm:$0xff]
        %v5991 = vld [vmem:[%s386 + $0x40] sm:$0xff]
        %v5992 = vld [vmem:[%s386 + $0x48] sm:$0xff]
        %v5993 = vld [vmem:[%s386 + $0x50] sm:$0xff]
        %v5994 = vld [vmem:[%s386 + $0x58] sm:$0xff]
        %v5995 = vld [vmem:[%s386 + $0x60] sm:$0xff]
        %v5996 = vld [vmem:[%s386 + $0x68] sm:$0xff]
        %v5997 = vld [vmem:[%s386 + $0x70] sm:$0xff]
        %v5998 = vld [vmem:[%s386 + $0x78] sm:$0xff]
        %v5999 = vunpack.c.l.bf16 %v5983
        %v6000 = vunpack.c.h.bf16 %v5983
        %v6001 = vunpack.c.l.bf16 %v5984
        %v6002 = vunpack.c.h.bf16 %v5984
        %v6003 = vunpack.c.l.bf16 %v5985
        %v6004 = vunpack.c.h.bf16 %v5985
        %v6005 = vunpack.c.l.bf16 %v5986
        %v6006 = vunpack.c.h.bf16 %v5986
        %v6007 = vunpack.c.l.bf16 %v5987
        %v6008 = vunpack.c.h.bf16 %v5987
        %v6009 = vunpack.c.l.bf16 %v5988
        %v6010 = vunpack.c.h.bf16 %v5988
        %v6011 = vunpack.c.l.bf16 %v5989
        %v6012 = vunpack.c.h.bf16 %v5989
        %v6013 = vunpack.c.l.bf16 %v5990
        %v6014 = vunpack.c.h.bf16 %v5990
        %v6015 = vunpack.c.l.bf16 %v5991
        %v6016 = vunpack.c.h.bf16 %v5991
        %v6017 = vunpack.c.l.bf16 %v5992
        %v6018 = vunpack.c.h.bf16 %v5992
        %v6019 = vunpack.c.l.bf16 %v5993
        %v6020 = vunpack.c.h.bf16 %v5993
        %v6021 = vunpack.c.l.bf16 %v5994
        %v6022 = vunpack.c.h.bf16 %v5994
        %v6023 = vunpack.c.l.bf16 %v5995
        %v6024 = vunpack.c.h.bf16 %v5995
        %v6025 = vunpack.c.l.bf16 %v5996
        %v6026 = vunpack.c.h.bf16 %v5996
        %v6027 = vunpack.c.l.bf16 %v5997
        %v6028 = vunpack.c.h.bf16 %v5997
        %v6029 = vunpack.c.l.bf16 %v5998
        %v6030 = vunpack.c.h.bf16 %v5998
        %v6031 = vmul.f32 %v5139, %v5999
        %v6032 = vmul.f32 %v5195, %v6000
        %v6033 = vmul.f32 %v5251, %v6001
        %v6034 = vmul.f32 %v5307, %v6002
        %v6035 = vmul.f32 %v5363, %v6003
        %v6036 = vmul.f32 %v5419, %v6004
        %v6037 = vmul.f32 %v5475, %v6005
        %v6038 = vmul.f32 %v5531, %v6006
        %v6039 = vmul.f32 %v5587, %v6007
        %v6040 = vmul.f32 %v5643, %v6008
        %v6041 = vmul.f32 %v5699, %v6009
        %v6042 = vmul.f32 %v5755, %v6010
        %v6043 = vmul.f32 %v5811, %v6011
        %v6044 = vmul.f32 %v5867, %v6012
        %v6045 = vmul.f32 %v5923, %v6013
        %v6046 = vmul.f32 %v5979, %v6014
        %v6047 = vmul.f32 %v5141, %v6015
        %v6048 = vmul.f32 %v5197, %v6016
        %v6049 = vmul.f32 %v5253, %v6017
        %v6050 = vmul.f32 %v5309, %v6018
        %v6051 = vmul.f32 %v5365, %v6019
        %v6052 = vmul.f32 %v5421, %v6020
        %v6053 = vmul.f32 %v5477, %v6021
        %v6054 = vmul.f32 %v5533, %v6022
        %v6055 = vmul.f32 %v5589, %v6023
        %v6056 = vmul.f32 %v5645, %v6024
        %v6057 = vmul.f32 %v5701, %v6025
        %v6058 = vmul.f32 %v5757, %v6026
        %v6059 = vmul.f32 %v5813, %v6027
        %v6060 = vmul.f32 %v5869, %v6028
        %v6061 = vmul.f32 %v5925, %v6029
        %v6062 = vmul.f32 %v5981, %v6030
        %6063 = vst [vmem:[%s425] sm:$0xff] %v6031
        %6064 = vst [vmem:[%s425 + $0x8] sm:$0xff] %v6032
        %6065 = vst [vmem:[%s425 + $0x10] sm:$0xff] %v6033
        %6066 = vst [vmem:[%s425 + $0x18] sm:$0xff] %v6034
        %6067 = vst [vmem:[%s425 + $0x20] sm:$0xff] %v6035
        %6068 = vst [vmem:[%s425 + $0x28] sm:$0xff] %v6036
        %6069 = vst [vmem:[%s425 + $0x30] sm:$0xff] %v6037
        %6070 = vst [vmem:[%s425 + $0x38] sm:$0xff] %v6038
        %6071 = vst [vmem:[%s425 + $0x40] sm:$0xff] %v6039
        %6072 = vst [vmem:[%s425 + $0x48] sm:$0xff] %v6040
        %6073 = vst [vmem:[%s425 + $0x50] sm:$0xff] %v6041
        %6074 = vst [vmem:[%s425 + $0x58] sm:$0xff] %v6042
        %6075 = vst [vmem:[%s425 + $0x60] sm:$0xff] %v6043
        %6076 = vst [vmem:[%s425 + $0x68] sm:$0xff] %v6044
        %6077 = vst [vmem:[%s425 + $0x70] sm:$0xff] %v6045
        %6078 = vst [vmem:[%s425 + $0x78] sm:$0xff] %v6046
        %6079 = vst [vmem:[%s425 + $0x80] sm:$0xff] %v6047
        %6080 = vst [vmem:[%s425 + $0x88] sm:$0xff] %v6048
        %6081 = vst [vmem:[%s425 + $0x90] sm:$0xff] %v6049
        %6082 = vst [vmem:[%s425 + $0x98] sm:$0xff] %v6050
        %6083 = vst [vmem:[%s425 + $0xa0] sm:$0xff] %v6051
        %6084 = vst [vmem:[%s425 + $0xa8] sm:$0xff] %v6052
        %6085 = vst [vmem:[%s425 + $0xb0] sm:$0xff] %v6053
        %6086 = vst [vmem:[%s425 + $0xb8] sm:$0xff] %v6054
        %6087 = vst [vmem:[%s425 + $0xc0] sm:$0xff] %v6055
        %6088 = vst [vmem:[%s425 + $0xc8] sm:$0xff] %v6056
        %6089 = vst [vmem:[%s425 + $0xd0] sm:$0xff] %v6057
        %6090 = vst [vmem:[%s425 + $0xd8] sm:$0xff] %v6058
        %6091 = vst [vmem:[%s425 + $0xe0] sm:$0xff] %v6059
        %6092 = vst [vmem:[%s425 + $0xe8] sm:$0xff] %v6060
        %6093 = vst [vmem:[%s425 + $0xf0] sm:$0xff] %v6061
        %6094 = vst [vmem:[%s425 + $0xf8] sm:$0xff] %v6062
        %s6095 = sand.u32 %s198, 1
        %s6096 = scalar_lea.sflag [#allocation4], %s6095
        %s6097 = sand.u32 %s198, 1
        %s6098 = smul.addr %s6097, 256
        %s6099 = scalar_lea.vmem [#allocation13], %s6098
        // Predicated region
        $region69: #{tpu_custom_call.1} parent=43 // pred_check
          %p6100 = pneg %p208
        $region70: #{tpu_custom_call.1} parent=43 // pred_check_branch
          %6102 = sbr.rel (%p6100) target = $region72
        $region71: #{tpu_custom_call.1} parent=43 // pred_region
          %s6103 = smul.u32 2, %s33
          %s6104 = smul.u32 16, %s32
          %6106 = vsyncadd %s6096, 0
          %s6107 = smul.addr %s6103, 32
          %s6108 = sadd.s32 %s6104, %s6107
          %s6109 = smul.addr %s6108, 8
          %s6110 = scalar_lea.hbm %s6, %s6109
          %s6111 = sshll.u32 %s6099, 4
          %s6112 = int_to_ptr.vmem [resolvable:$true] %s6111
          %s6113 = sshll.u32 %s6110, 4
          %s6114 = int_to_ptr.hbm [resolvable:$true] %s6113
          %6119 = dma.vmem_to_hbm [thread:$0]  %s6112, 4096, %s6114, %s6096, 2048, 4096, 128
        $region72: #{tpu_custom_call.1} parent=43 // pred_fallthru
          _
      $region44: #{tpu_custom_call.1} parent=5 // pred_fallthru
        _
      %p6120 = scmp.le.s32.totalorder 2, %s23
      // Predicated region
      $region73: #{tpu_custom_call.1} parent=5 // pred_check
        %p6121 = pneg %p6120
      $region74: #{tpu_custom_call.1} parent=5 // pred_check_branch
        %6123 = sbr.rel (%p6121) target = $region76
      $region75: #{tpu_custom_call.1} parent=5 // pred_region
        %s6124 = ssub.s32 %s23, 2
        // Predicated region
        $region77: #{tpu_custom_call.1} parent=75 // pred_check
          %p6125 = pneg %p214
        $region78: #{tpu_custom_call.1} parent=75 // pred_check_branch
          %6127 = sbr.rel (%p6125) target = $region80
        $region79: #{tpu_custom_call.1} parent=75 // pred_region
          %s6128 = sand.u32 %s199, 1
          %s6129 = scalar_lea.sflag [#allocation4], %s6128
          %s6130 = sand.u32 %s199, 1
          %s6131 = smul.addr %s6130, 256
          %s6132 = scalar_lea.vmem [#allocation13], %s6131
          %6134 = dma.done %s6129, 4096
        $region80: #{tpu_custom_call.1} parent=75 // pred_fallthru
          _
      $region76: #{tpu_custom_call.1} parent=5 // pred_fallthru
        _
    $region6: #{tpu_custom_call.1} parent=1 // loop_footer
      %s27 = sadd.s32 1, %s23
    $region7: #{tpu_custom_call.1} parent=1 // loop_footer_branch
      %22 = sbr.rel target = $region3
    $region8: #{tpu_custom_call.1} parent=1 // loop_exit
      _
    %6135 = vsyncpa [#allocation3], 1
    %s6136 = scalar_lea.sflag [#allocation3], 1
    %6137 = vsyncpa %s6136, 1
    %6138 = vsyncpa [#allocation6], 1
    %6139 = vsyncpa [#allocation9], 1
    %s6140 = scalar_lea.sflag [#allocation9], 1
    %6141 = vsyncpa %s6140, 1
    %6142 = vsyncpa [#allocation12], 1
    %s6143 = scalar_lea.sflag [#allocation12], 1
    %6144 = vsyncpa %s6143, 1
    %6145 = vsyncpa [#allocation4], 1
    %s6146 = scalar_lea.sflag [#allocation4], 1
    %6147 = vsyncpa %s6146, 1

</llo_original>
